<compile_context>
chip_gen: v7x
topology: tpu7x:2x2x1
jax: 0.10.0
libtpu: 0.0.40
codegen_flags: <defaults>
</compile_context>

<pallas_src>
import functools

import jax
import jax.numpy as jnp
import numpy as np
from jax import lax
from jax.experimental import pallas as pl
from jax.experimental.pallas import tpu as pltpu


def _sppf_kernel(x_ref, w1_ref, b1_ref, w2_ref, b2_ref, wmask_ref,
                 o_ref, padh_ref, acc_ref):
    # x_ref:     (1, H, W, Cin_p)   one batch element per grid step (NHWC)
    # w1_ref:    (Cin_p, c_p)       folded conv1x1+BN of CBL #1 (matmul dtype)
    # b1_ref:    (1, c_p)           f32
    # w2_ref:    (4*c_p, Cout_p)    folded conv1x1+BN of CBL #2 (matmul dtype)
    # b2_ref:    (1, Cout_p)        f32
    # wmask_ref: (4, W, c_p)        pool dtype; additive 0/-inf masks for the
    #                               W-direction roll shifts (+1,+2,-1,-2),
    #                               precomputed in the wrapper and aware of
    #                               the true (unpadded) width.
    # o_ref:     (1, H, W, Cout_p)  f32
    # padh_ref:  VMEM (H+4, W, c_p) pool dtype; H-pool scratch, 2-row -inf
    #                               top/bottom border.
    # acc_ref:   VMEM (H*W, Cout_p) f32 accumulator for CBL #2.
    _, H, W, Cin_p = x_ref.shape
    c_p = w1_ref.shape[1]
    Cout_p = w2_ref.shape[1]
    mxu_dt = w2_ref.dtype
    pool_dt = padh_ref.dtype
    NEG_INF = jnp.float32(-jnp.inf)

    def silu(v):
        # One EUP transcendental per element: sigmoid(v) = 0.5*(1+tanh(v/2)).
        return v * (0.5 * jnp.tanh(0.5 * v) + 0.5)

    # --- CBL #1: 1x1 conv as matmul + folded BN + SiLU ----------------------
    x2d = x_ref[0].reshape(H * W, Cin_p)          # W padded -> layout no-op
    y2d = silu(
        jnp.dot(x2d, w1_ref[...], preferred_element_type=jnp.float32)
        + b1_ref[...]
    )
    # Cast once for both the pool cascade and the MXU; round-to-bf16 is
    # monotone so max() commutes with the cast (bit-identical MXU inputs vs
    # a cast-after-pool formulation).
    y_pool = y2d.astype(pool_dt)

    # --- CBL #2, streamed into an explicit f32 VMEM accumulator -------------
    acc_ref[...] = (
        jnp.dot(y_pool.astype(mxu_dt), w2_ref[0:c_p, :],
                preferred_element_type=jnp.float32)
        + b2_ref[...]
    )

    # -inf border of the H-pool scratch.  Written every step (8 vregs); NOT
    # gated on program_id(0)==0 because under a megacore-split "parallel"
    # batch axis the second core never runs step 0 (own VMEM scratch).
    padh_ref[0:2, :, :] = jnp.full((2, W, c_p), NEG_INF, pool_dt)
    padh_ref[H + 2:H + 4, :, :] = jnp.full((2, W, c_p), NEG_INF, pool_dt)

    def maxpool5(t):
        # Separable 5x5 / stride-1 / pad-2 max pool (pad value never wins).
        # H direction: aligned leading-dim slices of the -inf bordered scratch.
        padh_ref[2:2 + H, :, :] = t
        m = padh_ref[0:H, :, :]
        for di in range(1, 5):
            m = jnp.maximum(m, padh_ref[di:di + H, :, :])
        # W direction: sublane shifts on the XLU via pltpu.roll; wrapped lanes
        # and out-of-true-range (padded W) lanes are pushed to -inf with the
        # precomputed additive masks (all pooled values are finite -> no NaN).
        out = m
        out = jnp.maximum(out, pltpu.roll(m, W - 1, axis=1) + wmask_ref[0])
        out = jnp.maximum(out, pltpu.roll(m, W - 2, axis=1) + wmask_ref[1])
        out = jnp.maximum(out, pltpu.roll(m, 1, axis=1) + wmask_ref[2])
        out = jnp.maximum(out, pltpu.roll(m, 2, axis=1) + wmask_ref[3])
        return out

    p = y_pool.reshape(H, W, c_p)
    for k in range(1, 4):
        p = maxpool5(p)
        acc_ref[...] += jnp.dot(
            p.reshape(H * W, c_p).astype(mxu_dt),
            w2_ref[k * c_p:(k + 1) * c_p, :],
            preferred_element_type=jnp.float32,
        )

    o_ref[0] = silu(acc_ref[...]).reshape(H, W, Cout_p)


def _round_up(n, m):
    return (n + m - 1) // m * m


@functools.partial(jax.jit, static_argnames=("matmul_dtype", "pool_dtype"))
def sppf_pallas_nhwc(x_nhwc, w1, b1, w2, b2, *,
                     matmul_dtype=jnp.float32, pool_dtype=jnp.float32):
    """SPPF forward on NHWC activations (preferred, transpose-free path).

    x_nhwc: (N, H, W, Cin) f32 -> (N, H, W, Cout) f32.
    w1: (Cin, c_), b1: (c_,)       BN-folded CBL #1
    w2: (4*c_, Cout), b2: (Cout,)  BN-folded CBL #2

    dtype guidance:
      * v6e / v7x: matmul_dtype=bf16 and pool_dtype=bf16.
      * v5e:       matmul_dtype=bf16 (MXU bf16 is full rate), pool_dtype=f32
                   (no bf16 VPU).
      * exact f32: defaults (used by the self-test).
    """
    N, H, W, Cin = x_nhwc.shape
    c_ = w1.shape[1]
    Cout = w2.shape[1]

    LANES = 128
    sub = 8 if (matmul_dtype == jnp.float32 and pool_dtype == jnp.float32) else 16
    Cin_p = _round_up(Cin, LANES)
    c_p = _round_up(c_, LANES)
    Cout_p = _round_up(Cout, LANES)
    W_p = _round_up(W, sub)   # keeps (H,W,C)<->(H*W,C) reshapes layout no-ops

    x_p = jnp.pad(x_nhwc, ((0, 0), (0, 0), (0, W_p - W), (0, Cin_p - Cin)))

    w1_p = jnp.pad(w1, ((0, Cin_p - Cin), (0, c_p - c_)))
    b1_p = jnp.pad(b1, (0, c_p - c_)).reshape(1, c_p).astype(jnp.float32)
    # w2 rows come in 4 blocks of c_ (one per concat branch); pad each block
    # independently so the kernel can slice at k*c_p.
    w2_p = jnp.pad(w2.reshape(4, c_, Cout),
                   ((0, 0), (0, c_p - c_), (0, Cout_p - Cout)))
    w2_p = w2_p.reshape(4 * c_p, Cout_p)
    b2_p = jnp.pad(b2, (0, Cout_p - Cout)).reshape(1, Cout_p).astype(jnp.float32)

    if matmul_dtype != jnp.float32:
        x_p = x_p.astype(matmul_dtype)
        w1_p = w1_p.astype(matmul_dtype)
        w2_p = w2_p.astype(matmul_dtype)

    # Additive 0/-inf masks for the W-direction roll shifts (+1,+2,-1,-2),
    # built once here (compile-time constant, hoisted out of the per-step
    # trace) and aware of the TRUE width W so padded W columns never win.
    neg = np.float32(-np.inf)
    zero = np.float32(0.0)
    w_idx = np.arange(W_p)[:, None]
    wmask_np = np.stack([
        np.where(w_idx < W - 1, zero, neg),
        np.where(w_idx < W - 2, zero, neg),
        np.where(w_idx >= 1, zero, neg),
        np.where(w_idx >= 2, zero, neg),
    ]).astype(np.float32)                                    # (4, W_p, 1)
    wmask = jnp.asarray(np.broadcast_to(wmask_np, (4, W_p, c_p)),
                        dtype=pool_dtype)

    # VMEM budget computed from actual block sizes (double-buffered inputs +
    # scratch + margin).  Clamped to [32 MiB, 64 MiB] so it stays safe on
    # v7x's 64 MiB physical VMEM while allowing bigger tiles on v5e/v6e.
    mm_b = np.dtype(matmul_dtype).itemsize
    pool_b = np.dtype(pool_dtype).itemsize
    blk_bytes = (H * W_p * Cin_p * mm_b
                 + H * W_p * Cout_p * 4
                 + (Cin_p * c_p + 4 * c_p * Cout_p) * mm_b
                 + (c_p + Cout_p) * 4
                 + 4 * W_p * c_p * pool_b)
    scratch_bytes = (H + 4) * W_p * c_p * pool_b + H * W_p * Cout_p * 4
    vmem_limit = int(min(max(2 * blk_bytes + scratch_bytes + (4 << 20),
                             32 << 20), 64 << 20))

    out_nhwc = pl.pallas_call(
        _sppf_kernel,
        out_shape=jax.ShapeDtypeStruct((N, H, W_p, Cout_p), jnp.float32),
        grid_spec=pltpu.PrefetchScalarGridSpec(
            num_scalar_prefetch=0,
            grid=(N,),
            in_specs=[
                pl.BlockSpec((1, H, W_p, Cin_p), lambda n: (n, 0, 0, 0)),
                pl.BlockSpec((Cin_p, c_p), lambda n: (0, 0)),
                pl.BlockSpec((1, c_p), lambda n: (0, 0)),
                pl.BlockSpec((4 * c_p, Cout_p), lambda n: (0, 0)),
                pl.BlockSpec((1, Cout_p), lambda n: (0, 0)),
                pl.BlockSpec((4, W_p, c_p), lambda n: (0, 0, 0)),
            ],
            out_specs=pl.BlockSpec((1, H, W_p, Cout_p),
                                   lambda n: (n, 0, 0, 0)),
            scratch_shapes=[
                pltpu.VMEM((H + 4, W_p, c_p), pool_dtype),
                pltpu.VMEM((H * W_p, Cout_p), jnp.float32),
            ],
        ),
        compiler_params=pltpu.CompilerParams(
            dimension_semantics=("parallel",),
            vmem_limit_bytes=vmem_limit,
        ),
    )(x_p, w1_p, b1_p, w2_p, b2_p, wmask)

    # Drop W / channel padding.
    return out_nhwc[:, :, :W, :Cout]


@functools.partial(jax.jit, static_argnames=("matmul_dtype", "pool_dtype"))
def sppf_pallas(x_nchw, w1, b1, w2, b2, *,
                matmul_dtype=jnp.float32, pool_dtype=jnp.float32):
    """NCHW convenience wrapper matching the PyTorch module layout.

    TODO(synk): production callers should use sppf_pallas_nhwc end-to-end —
    at real SPPF shapes the two transposes roughly double the HBM traffic of
    an otherwise HBM-bound op.
    """
    x_nhwc = jnp.transpose(x_nchw, (0, 2, 3, 1))
    out = sppf_pallas_nhwc(x_nhwc, w1, b1, w2, b2,
                           matmul_dtype=matmul_dtype, pool_dtype=pool_dtype)
    return jnp.transpose(out, (0, 3, 1, 2))


# ----------------------- parameter construction ---------------------------
def _fold_bn(conv_w_oi, gamma, beta, mean, var, eps=1e-3):
    """conv_w_oi: (Cout, Cin) from a 1x1 conv. Returns (Cin, Cout) folded
    weight and (Cout,) bias implementing BN(conv(x)) in eval mode."""
    scale = gamma / jnp.sqrt(var + eps)           # (Cout,)
    w_folded = (conv_w_oi * scale[:, None]).T     # (Cin, Cout)
    b_folded = beta - mean * scale                # (Cout,)
    return w_folded.astype(jnp.float32), b_folded.astype(jnp.float32)


def make_sppf_params(key, in_channels, out_channels):
    c_ = in_channels // 2
    k = jax.random.split(key, 10)
    # CBL #1: conv (c_, in_channels, 1, 1) + BN(c_)
    conv1_w = 0.2 * jax.random.normal(k[0], (c_, in_channels), jnp.float32)
    g1 = 1.0 + 0.1 * jax.random.normal(k[1], (c_,), jnp.float32)
    be1 = 0.1 * jax.random.normal(k[2], (c_,), jnp.float32)
    m1 = 0.1 * jax.random.normal(k[3], (c_,), jnp.float32)
    v1 = jax.random.uniform(k[4], (c_,), jnp.float32, 0.5, 1.5)
    # CBL #2: conv (out_channels, 4*c_, 1, 1) + BN(out_channels)
    conv2_w = 0.2 * jax.random.normal(k[5], (out_channels, 4 * c_), jnp.float32)
    g2 = 1.0 + 0.1 * jax.random.normal(k[6], (out_channels,), jnp.float32)
    be2 = 0.1 * jax.random.normal(k[7], (out_channels,), jnp.float32)
    m2 = 0.1 * jax.random.normal(k[8], (out_channels,), jnp.float32)
    v2 = jax.random.uniform(k[9], (out_channels,), jnp.float32, 0.5, 1.5)

    w1, b1 = _fold_bn(conv1_w, g1, be1, m1, v1)
    w2, b2 = _fold_bn(conv2_w, g2, be2, m2, v2)
    return w1, b1, w2, b2


# --------------------------- pure-JAX reference ----------------------------
def sppf_reference(x_nchw, w1, b1, w2, b2):
    x = jnp.transpose(x_nchw, (0, 2, 3, 1))  # NHWC
    y = jnp.einsum("nhwc,cd->nhwd", x, w1) + b1
    y = y * jax.nn.sigmoid(y)

    def pool(t):
        return lax.reduce_window(
            t, -jnp.inf, lax.max,
            window_dimensions=(1, 5, 5, 1),
            window_strides=(1, 1, 1, 1),
            padding=[(0, 0), (2, 2), (2, 2), (0, 0)],
        )

    p1 = pool(y)
    p2 = pool(p1)
    p3 = pool(p2)
    cat = jnp.concatenate([y, p1, p2, p3], axis=-1)
    z = jnp.einsum("nhwc,cd->nhwd", cat, w2) + b2
    z = z * jax.nn.sigmoid(z)
    return jnp.transpose(z, (0, 3, 1, 2))  # back to NCHW


if __name__ == "__main__":
    key = jax.random.PRNGKey(0)

    # --- main check: the module-spec shapes ---------------------------------
    N, C_IN, H, W = 2, 4, 16, 16
    C_OUT = 8
    kx, kp, kx2, kp2 = jax.random.split(key, 4)
    x = jax.random.normal(kx, (N, C_IN, H, W), jnp.float32)
    w1, b1, w2, b2 = make_sppf_params(kp, C_IN, C_OUT)

    out = sppf_pallas(x, w1, b1, w2, b2)      # exact f32 path
    out = jax.block_until_ready(out)
    ref = sppf_reference(x, w1, b1, w2, b2)
    np.testing.assert_allclose(np.asarray(out), np.asarray(ref),
                               rtol=1e-4, atol=1e-4)
    assert out.shape == (N, C_OUT, H, W)

    # --- secondary check: W not a multiple of 8 (exercises W padding/masks) -
    N2, C_IN2, H2, W2, C_OUT2 = 1, 6, 12, 20, 10
    x2 = jax.random.normal(kx2, (N2, C_IN2, H2, W2), jnp.float32)
    p1, p2_, p3, p4 = make_sppf_params(kp2, C_IN2, C_OUT2)
    out2 = jax.block_until_ready(sppf_pallas(x2, p1, p2_, p3, p4))
    ref2 = sppf_reference(x2, p1, p2_, p3, p4)
    np.testing.assert_allclose(np.asarray(out2), np.asarray(ref2),
                               rtol=1e-4, atol=1e-4)
    assert out2.shape == (N2, C_OUT2, H2, W2)

    print("KERNEL_OK")
</pallas_src>

<mosaic_0001>
module attributes {stable_mosaic.version = 11 : i64} {
  func.func @_sppf_kernel(%arg0: i32, %arg1: memref<1x16x16x128xf32, #tpu.memory_space<vmem>>, %arg2: memref<128x128xf32, #tpu.memory_space<vmem>>, %arg3: memref<1x128xf32, #tpu.memory_space<vmem>>, %arg4: memref<512x128xf32, #tpu.memory_space<vmem>>, %arg5: memref<1x128xf32, #tpu.memory_space<vmem>>, %arg6: memref<4x16x128xf32, #tpu.memory_space<vmem>>, %arg7: memref<1x16x16x128xf32, #tpu.memory_space<vmem>>, %arg8: memref<20x16x128xf32, #tpu.memory_space<vmem>>, %arg9: memref<256x128xf32, #tpu.memory_space<vmem>>) attributes {dimension_semantics = [#tpu.dimension_semantics<parallel>], iteration_bounds = array<i64: 2>, scalar_prefetch = 0 : i64, scratch_operands = 2 : i64, tpu.core_type = #tpu.core_type<tc>, window_params = [{transform_indices = @transform_0, window_bounds = array<i64: 1, 16, 16, 128>}, {pipeline_mode = #tpu.pipeline_mode<synchronous>, transform_indices = @transform_1, window_bounds = array<i64: 128, 128>}, {pipeline_mode = #tpu.pipeline_mode<synchronous>, transform_indices = @transform_2, window_bounds = array<i64: 1, 128>}, {pipeline_mode = #tpu.pipeline_mode<synchronous>, transform_indices = @transform_3, window_bounds = array<i64: 512, 128>}, {pipeline_mode = #tpu.pipeline_mode<synchronous>, transform_indices = @transform_4, window_bounds = array<i64: 1, 128>}, {pipeline_mode = #tpu.pipeline_mode<synchronous>, transform_indices = @transform_5, window_bounds = array<i64: 4, 16, 128>}, {transform_indices = @transform_6, window_bounds = array<i64: 1, 16, 16, 128>}]} {
    %c0 = arith.constant 0 : index
    %c0_0 = arith.constant 0 : index
    %c0_1 = arith.constant 0 : index
    %c0_2 = arith.constant 0 : index
    %0 = vector.load %arg1[%c0, %c0_0, %c0_1, %c0_2] : memref<1x16x16x128xf32, #tpu.memory_space<vmem>>, vector<1x16x16x128xf32>
    %1 = vector.shape_cast %0 : vector<1x16x16x128xf32> to vector<16x16x128xf32>
    %2 = vector.shape_cast %1 : vector<16x16x128xf32> to vector<256x128xf32>
    %c0_3 = arith.constant 0 : index
    %c0_4 = arith.constant 0 : index
    %3 = vector.load %arg2[%c0_3, %c0_4] : memref<128x128xf32, #tpu.memory_space<vmem>>, vector<128x128xf32>
    %cst = arith.constant dense<0.000000e+00> : vector<256x128xf32>
    %4 = tpu.matmul %2, %3, %cst {dimension_numbers = #tpu.dot_dimension_numbers<[1], [0], [0], [1], [0, 0, 1, 1], [], []>} : vector<256x128xf32>, vector<128x128xf32>, vector<256x128xf32> -> vector<256x128xf32>
    %c0_5 = arith.constant 0 : index
    %c0_6 = arith.constant 0 : index
    %5 = vector.load %arg3[%c0_5, %c0_6] : memref<1x128xf32, #tpu.memory_space<vmem>>, vector<1x128xf32>
    %6 = vector.broadcast %5 : vector<1x128xf32> to vector<256x128xf32>
    %7 = arith.addf %4, %6 : vector<256x128xf32>
    %cst_7 = arith.constant 5.000000e-01 : f32
    %8 = vector.broadcast %cst_7 : f32 to vector<256x128xf32>
    %9 = arith.mulf %8, %7 : vector<256x128xf32>
    %10 = math.tanh %9 : vector<256x128xf32>
    %cst_8 = arith.constant 5.000000e-01 : f32
    %11 = vector.broadcast %cst_8 : f32 to vector<256x128xf32>
    %12 = arith.mulf %11, %10 : vector<256x128xf32>
    %cst_9 = arith.constant 5.000000e-01 : f32
    %13 = vector.broadcast %cst_9 : f32 to vector<256x128xf32>
    %14 = arith.addf %12, %13 : vector<256x128xf32>
    %15 = arith.mulf %7, %14 : vector<256x128xf32>
    %c0_10 = arith.constant 0 : index
    %c0_11 = arith.constant 0 : index
    %16 = vector.load %arg4[%c0_10, %c0_11] : memref<512x128xf32, #tpu.memory_space<vmem>>, vector<128x128xf32>
    %cst_12 = arith.constant dense<0.000000e+00> : vector<256x128xf32>
    %17 = tpu.matmul %15, %16, %cst_12 {dimension_numbers = #tpu.dot_dimension_numbers<[1], [0], [0], [1], [0, 0, 1, 1], [], []>} : vector<256x128xf32>, vector<128x128xf32>, vector<256x128xf32> -> vector<256x128xf32>
    %c0_13 = arith.constant 0 : index
    %c0_14 = arith.constant 0 : index
    %18 = vector.load %arg5[%c0_13, %c0_14] : memref<1x128xf32, #tpu.memory_space<vmem>>, vector<1x128xf32>
    %19 = vector.broadcast %18 : vector<1x128xf32> to vector<256x128xf32>
    %20 = arith.addf %17, %19 : vector<256x128xf32>
    %c0_15 = arith.constant 0 : index
    %c0_16 = arith.constant 0 : index
    %21 = vector.load %arg9[%c0_15, %c0_16] : memref<256x128xf32, #tpu.memory_space<vmem>>, vector<256x128xf32>
    tpu.vector_store %arg9[%c0_15, %c0_16], %20 {strides = array<i32>} : memref<256x128xf32, #tpu.memory_space<vmem>>, vector<256x128xf32>,
    %cst_17 = arith.constant 0xFF800000 : f32
    %22 = vector.broadcast %cst_17 : f32 to vector<2x16x128xf32>
    %c0_18 = arith.constant 0 : index
    %c0_19 = arith.constant 0 : index
    %c0_20 = arith.constant 0 : index
    %23 = vector.load %arg8[%c0_18, %c0_19, %c0_20] : memref<20x16x128xf32, #tpu.memory_space<vmem>>, vector<2x16x128xf32>
    tpu.vector_store %arg8[%c0_18, %c0_19, %c0_20], %22 {strides = array<i32>} : memref<20x16x128xf32, #tpu.memory_space<vmem>>, vector<2x16x128xf32>,
    %cst_21 = arith.constant 0xFF800000 : f32
    %24 = vector.broadcast %cst_21 : f32 to vector<2x16x128xf32>
    %c18 = arith.constant 18 : index
    %c0_22 = arith.constant 0 : index
    %c0_23 = arith.constant 0 : index
    %25 = vector.load %arg8[%c18, %c0_22, %c0_23] : memref<20x16x128xf32, #tpu.memory_space<vmem>>, vector<2x16x128xf32>
    tpu.vector_store %arg8[%c18, %c0_22, %c0_23], %24 {strides = array<i32>} : memref<20x16x128xf32, #tpu.memory_space<vmem>>, vector<2x16x128xf32>,
    %26 = vector.shape_cast %15 : vector<256x128xf32> to vector<16x16x128xf32>
    %c2 = arith.constant 2 : index
    %c0_24 = arith.constant 0 : index
    %c0_25 = arith.constant 0 : index
    %27 = vector.load %arg8[%c2, %c0_24, %c0_25] : memref<20x16x128xf32, #tpu.memory_space<vmem>>, vector<16x16x128xf32>
    tpu.vector_store %arg8[%c2, %c0_24, %c0_25], %26 {strides = array<i32>} : memref<20x16x128xf32, #tpu.memory_space<vmem>>, vector<16x16x128xf32>,
    %c0_26 = arith.constant 0 : index
    %c0_27 = arith.constant 0 : index
    %c0_28 = arith.constant 0 : index
    %28 = vector.load %arg8[%c0_26, %c0_27, %c0_28] : memref<20x16x128xf32, #tpu.memory_space<vmem>>, vector<16x16x128xf32>
    %c1 = arith.constant 1 : index
    %c0_29 = arith.constant 0 : index
    %c0_30 = arith.constant 0 : index
    %29 = vector.load %arg8[%c1, %c0_29, %c0_30] : memref<20x16x128xf32, #tpu.memory_space<vmem>>, vector<16x16x128xf32>
    %30 = arith.maximumf %28, %29 : vector<16x16x128xf32>
    %c2_31 = arith.constant 2 : index
    %c0_32 = arith.constant 0 : index
    %c0_33 = arith.constant 0 : index
    %31 = vector.load %arg8[%c2_31, %c0_32, %c0_33] : memref<20x16x128xf32, #tpu.memory_space<vmem>>, vector<16x16x128xf32>
    %32 = arith.maximumf %30, %31 : vector<16x16x128xf32>
    %c3 = arith.constant 3 : index
    %c0_34 = arith.constant 0 : index
    %c0_35 = arith.constant 0 : index
    %33 = vector.load %arg8[%c3, %c0_34, %c0_35] : memref<20x16x128xf32, #tpu.memory_space<vmem>>, vector<16x16x128xf32>
    %34 = arith.maximumf %32, %33 : vector<16x16x128xf32>
    %c4 = arith.constant 4 : index
    %c0_36 = arith.constant 0 : index
    %c0_37 = arith.constant 0 : index
    %35 = vector.load %arg8[%c4, %c0_36, %c0_37] : memref<20x16x128xf32, #tpu.memory_space<vmem>>, vector<16x16x128xf32>
    %36 = arith.maximumf %34, %35 : vector<16x16x128xf32>
    %c15_i32 = arith.constant 15 : i32
    %37 = tpu.dynamic_rotate %36 by %c15_i32 dim 1 : vector<16x16x128xf32>, i32 -> vector<16x16x128xf32>
    %c0_38 = arith.constant 0 : index
    %c0_39 = arith.constant 0 : index
    %c0_40 = arith.constant 0 : index
    %38 = vector.load %arg6[%c0_38, %c0_39, %c0_40] : memref<4x16x128xf32, #tpu.memory_space<vmem>>, vector<1x16x128xf32>
    %39 = vector.shape_cast %38 : vector<1x16x128xf32> to vector<16x128xf32>
    %40 = vector.shape_cast %39 : vector<16x128xf32> to vector<1x16x128xf32>
    %41 = vector.broadcast %40 : vector<1x16x128xf32> to vector<16x16x128xf32>
    %42 = arith.addf %37, %41 : vector<16x16x128xf32>
    %43 = arith.maximumf %36, %42 : vector<16x16x128xf32>
    %c14_i32 = arith.constant 14 : i32
    %44 = tpu.dynamic_rotate %36 by %c14_i32 dim 1 : vector<16x16x128xf32>, i32 -> vector<16x16x128xf32>
    %c1_41 = arith.constant 1 : index
    %c0_42 = arith.constant 0 : index
    %c0_43 = arith.constant 0 : index
    %45 = vector.load %arg6[%c1_41, %c0_42, %c0_43] : memref<4x16x128xf32, #tpu.memory_space<vmem>>, vector<1x16x128xf32>
    %46 = vector.shape_cast %45 : vector<1x16x128xf32> to vector<16x128xf32>
    %47 = vector.shape_cast %46 : vector<16x128xf32> to vector<1x16x128xf32>
    %48 = vector.broadcast %47 : vector<1x16x128xf32> to vector<16x16x128xf32>
    %49 = arith.addf %44, %48 : vector<16x16x128xf32>
    %50 = arith.maximumf %43, %49 : vector<16x16x128xf32>
    %c1_i32 = arith.constant 1 : i32
    %51 = tpu.dynamic_rotate %36 by %c1_i32 dim 1 : vector<16x16x128xf32>, i32 -> vector<16x16x128xf32>
    %c2_44 = arith.constant 2 : index
    %c0_45 = arith.constant 0 : index
    %c0_46 = arith.constant 0 : index
    %52 = vector.load %arg6[%c2_44, %c0_45, %c0_46] : memref<4x16x128xf32, #tpu.memory_space<vmem>>, vector<1x16x128xf32>
    %53 = vector.shape_cast %52 : vector<1x16x128xf32> to vector<16x128xf32>
    %54 = vector.shape_cast %53 : vector<16x128xf32> to vector<1x16x128xf32>
    %55 = vector.broadcast %54 : vector<1x16x128xf32> to vector<16x16x128xf32>
    %56 = arith.addf %51, %55 : vector<16x16x128xf32>
    %57 = arith.maximumf %50, %56 : vector<16x16x128xf32>
    %c2_i32 = arith.constant 2 : i32
    %58 = tpu.dynamic_rotate %36 by %c2_i32 dim 1 : vector<16x16x128xf32>, i32 -> vector<16x16x128xf32>
    %c3_47 = arith.constant 3 : index
    %c0_48 = arith.constant 0 : index
    %c0_49 = arith.constant 0 : index
    %59 = vector.load %arg6[%c3_47, %c0_48, %c0_49] : memref<4x16x128xf32, #tpu.memory_space<vmem>>, vector<1x16x128xf32>
    %60 = vector.shape_cast %59 : vector<1x16x128xf32> to vector<16x128xf32>
    %61 = vector.shape_cast %60 : vector<16x128xf32> to vector<1x16x128xf32>
    %62 = vector.broadcast %61 : vector<1x16x128xf32> to vector<16x16x128xf32>
    %63 = arith.addf %58, %62 : vector<16x16x128xf32>
    %64 = arith.maximumf %57, %63 : vector<16x16x128xf32>
    %c0_50 = arith.constant 0 : index
    %c0_51 = arith.constant 0 : index
    %65 = vector.load %arg9[%c0_50, %c0_51] : memref<256x128xf32, #tpu.memory_space<vmem>>, vector<256x128xf32>
    %66 = vector.shape_cast %64 : vector<16x16x128xf32> to vector<256x128xf32>
    %c128 = arith.constant 128 : index
    %c0_52 = arith.constant 0 : index
    %67 = vector.load %arg4[%c128, %c0_52] : memref<512x128xf32, #tpu.memory_space<vmem>>, vector<128x128xf32>
    %cst_53 = arith.constant dense<0.000000e+00> : vector<256x128xf32>
    %68 = tpu.matmul %66, %67, %cst_53 {dimension_numbers = #tpu.dot_dimension_numbers<[1], [0], [0], [1], [0, 0, 1, 1], [], []>} : vector<256x128xf32>, vector<128x128xf32>, vector<256x128xf32> -> vector<256x128xf32>
    %69 = arith.addf %65, %68 : vector<256x128xf32>
    %c0_54 = arith.constant 0 : index
    %c0_55 = arith.constant 0 : index
    %70 = vector.load %arg9[%c0_54, %c0_55] : memref<256x128xf32, #tpu.memory_space<vmem>>, vector<256x128xf32>
    tpu.vector_store %arg9[%c0_54, %c0_55], %69 {strides = array<i32>} : memref<256x128xf32, #tpu.memory_space<vmem>>, vector<256x128xf32>,
    %c2_56 = arith.constant 2 : index
    %c0_57 = arith.constant 0 : index
    %c0_58 = arith.constant 0 : index
    %71 = vector.load %arg8[%c2_56, %c0_57, %c0_58] : memref<20x16x128xf32, #tpu.memory_space<vmem>>, vector<16x16x128xf32>
    tpu.vector_store %arg8[%c2_56, %c0_57, %c0_58], %64 {strides = array<i32>} : memref<20x16x128xf32, #tpu.memory_space<vmem>>, vector<16x16x128xf32>,
    %c0_59 = arith.constant 0 : index
    %c0_60 = arith.constant 0 : index
    %c0_61 = arith.constant 0 : index
    %72 = vector.load %arg8[%c0_59, %c0_60, %c0_61] : memref<20x16x128xf32, #tpu.memory_space<vmem>>, vector<16x16x128xf32>
    %c1_62 = arith.constant 1 : index
    %c0_63 = arith.constant 0 : index
    %c0_64 = arith.constant 0 : index
    %73 = vector.load %arg8[%c1_62, %c0_63, %c0_64] : memref<20x16x128xf32, #tpu.memory_space<vmem>>, vector<16x16x128xf32>
    %74 = arith.maximumf %72, %73 : vector<16x16x128xf32>
    %c2_65 = arith.constant 2 : index
    %c0_66 = arith.constant 0 : index
    %c0_67 = arith.constant 0 : index
    %75 = vector.load %arg8[%c2_65, %c0_66, %c0_67] : memref<20x16x128xf32, #tpu.memory_space<vmem>>, vector<16x16x128xf32>
    %76 = arith.maximumf %74, %75 : vector<16x16x128xf32>
    %c3_68 = arith.constant 3 : index
    %c0_69 = arith.constant 0 : index
    %c0_70 = arith.constant 0 : index
    %77 = vector.load %arg8[%c3_68, %c0_69, %c0_70] : memref<20x16x128xf32, #tpu.memory_space<vmem>>, vector<16x16x128xf32>
    %78 = arith.maximumf %76, %77 : vector<16x16x128xf32>
    %c4_71 = arith.constant 4 : index
    %c0_72 = arith.constant 0 : index
    %c0_73 = arith.constant 0 : index
    %79 = vector.load %arg8[%c4_71, %c0_72, %c0_73] : memref<20x16x128xf32, #tpu.memory_space<vmem>>, vector<16x16x128xf32>
    %80 = arith.maximumf %78, %79 : vector<16x16x128xf32>
    %c15_i32_74 = arith.constant 15 : i32
    %81 = tpu.dynamic_rotate %80 by %c15_i32_74 dim 1 : vector<16x16x128xf32>, i32 -> vector<16x16x128xf32>
    %c0_75 = arith.constant 0 : index
    %c0_76 = arith.constant 0 : index
    %c0_77 = arith.constant 0 : index
    %82 = vector.load %arg6[%c0_75, %c0_76, %c0_77] : memref<4x16x128xf32, #tpu.memory_space<vmem>>, vector<1x16x128xf32>
    %83 = vector.shape_cast %82 : vector<1x16x128xf32> to vector<16x128xf32>
    %84 = vector.shape_cast %83 : vector<16x128xf32> to vector<1x16x128xf32>
    %85 = vector.broadcast %84 : vector<1x16x128xf32> to vector<16x16x128xf32>
    %86 = arith.addf %81, %85 : vector<16x16x128xf32>
    %87 = arith.maximumf %80, %86 : vector<16x16x128xf32>
    %c14_i32_78 = arith.constant 14 : i32
    %88 = tpu.dynamic_rotate %80 by %c14_i32_78 dim 1 : vector<16x16x128xf32>, i32 -> vector<16x16x128xf32>
    %c1_79 = arith.constant 1 : index
    %c0_80 = arith.constant 0 : index
    %c0_81 = arith.constant 0 : index
    %89 = vector.load %arg6[%c1_79, %c0_80, %c0_81] : memref<4x16x128xf32, #tpu.memory_space<vmem>>, vector<1x16x128xf32>
    %90 = vector.shape_cast %89 : vector<1x16x128xf32> to vector<16x128xf32>
    %91 = vector.shape_cast %90 : vector<16x128xf32> to vector<1x16x128xf32>
    %92 = vector.broadcast %91 : vector<1x16x128xf32> to vector<16x16x128xf32>
    %93 = arith.addf %88, %92 : vector<16x16x128xf32>
    %94 = arith.maximumf %87, %93 : vector<16x16x128xf32>
    %c1_i32_82 = arith.constant 1 : i32
    %95 = tpu.dynamic_rotate %80 by %c1_i32_82 dim 1 : vector<16x16x128xf32>, i32 -> vector<16x16x128xf32>
    %c2_83 = arith.constant 2 : index
    %c0_84 = arith.constant 0 : index
    %c0_85 = arith.constant 0 : index
    %96 = vector.load %arg6[%c2_83, %c0_84, %c0_85] : memref<4x16x128xf32, #tpu.memory_space<vmem>>, vector<1x16x128xf32>
    %97 = vector.shape_cast %96 : vector<1x16x128xf32> to vector<16x128xf32>
    %98 = vector.shape_cast %97 : vector<16x128xf32> to vector<1x16x128xf32>
    %99 = vector.broadcast %98 : vector<1x16x128xf32> to vector<16x16x128xf32>
    %100 = arith.addf %95, %99 : vector<16x16x128xf32>
    %101 = arith.maximumf %94, %100 : vector<16x16x128xf32>
    %c2_i32_86 = arith.constant 2 : i32
    %102 = tpu.dynamic_rotate %80 by %c2_i32_86 dim 1 : vector<16x16x128xf32>, i32 -> vector<16x16x128xf32>
    %c3_87 = arith.constant 3 : index
    %c0_88 = arith.constant 0 : index
    %c0_89 = arith.constant 0 : index
    %103 = vector.load %arg6[%c3_87, %c0_88, %c0_89] : memref<4x16x128xf32, #tpu.memory_space<vmem>>, vector<1x16x128xf32>
    %104 = vector.shape_cast %103 : vector<1x16x128xf32> to vector<16x128xf32>
    %105 = vector.shape_cast %104 : vector<16x128xf32> to vector<1x16x128xf32>
    %106 = vector.broadcast %105 : vector<1x16x128xf32> to vector<16x16x128xf32>
    %107 = arith.addf %102, %106 : vector<16x16x128xf32>
    %108 = arith.maximumf %101, %107 : vector<16x16x128xf32>
    %c0_90 = arith.constant 0 : index
    %c0_91 = arith.constant 0 : index
    %109 = vector.load %arg9[%c0_90, %c0_91] : memref<256x128xf32, #tpu.memory_space<vmem>>, vector<256x128xf32>
    %110 = vector.shape_cast %108 : vector<16x16x128xf32> to vector<256x128xf32>
    %c256 = arith.constant 256 : index
    %c0_92 = arith.constant 0 : index
    %111 = vector.load %arg4[%c256, %c0_92] : memref<512x128xf32, #tpu.memory_space<vmem>>, vector<128x128xf32>
    %cst_93 = arith.constant dense<0.000000e+00> : vector<256x128xf32>
    %112 = tpu.matmul %110, %111, %cst_93 {dimension_numbers = #tpu.dot_dimension_numbers<[1], [0], [0], [1], [0, 0, 1, 1], [], []>} : vector<256x128xf32>, vector<128x128xf32>, vector<256x128xf32> -> vector<256x128xf32>
    %113 = arith.addf %109, %112 : vector<256x128xf32>
    %c0_94 = arith.constant 0 : index
    %c0_95 = arith.constant 0 : index
    %114 = vector.load %arg9[%c0_94, %c0_95] : memref<256x128xf32, #tpu.memory_space<vmem>>, vector<256x128xf32>
    tpu.vector_store %arg9[%c0_94, %c0_95], %113 {strides = array<i32>} : memref<256x128xf32, #tpu.memory_space<vmem>>, vector<256x128xf32>,
    %c2_96 = arith.constant 2 : index
    %c0_97 = arith.constant 0 : index
    %c0_98 = arith.constant 0 : index
    %115 = vector.load %arg8[%c2_96, %c0_97, %c0_98] : memref<20x16x128xf32, #tpu.memory_space<vmem>>, vector<16x16x128xf32>
    tpu.vector_store %arg8[%c2_96, %c0_97, %c0_98], %108 {strides = array<i32>} : memref<20x16x128xf32, #tpu.memory_space<vmem>>, vector<16x16x128xf32>,
    %c0_99 = arith.constant 0 : index
    %c0_100 = arith.constant 0 : index
    %c0_101 = arith.constant 0 : index
    %116 = vector.load %arg8[%c0_99, %c0_100, %c0_101] : memref<20x16x128xf32, #tpu.memory_space<vmem>>, vector<16x16x128xf32>
    %c1_102 = arith.constant 1 : index
    %c0_103 = arith.constant 0 : index
    %c0_104 = arith.constant 0 : index
    %117 = vector.load %arg8[%c1_102, %c0_103, %c0_104] : memref<20x16x128xf32, #tpu.memory_space<vmem>>, vector<16x16x128xf32>
    %118 = arith.maximumf %116, %117 : vector<16x16x128xf32>
    %c2_105 = arith.constant 2 : index
    %c0_106 = arith.constant 0 : index
    %c0_107 = arith.constant 0 : index
    %119 = vector.load %arg8[%c2_105, %c0_106, %c0_107] : memref<20x16x128xf32, #tpu.memory_space<vmem>>, vector<16x16x128xf32>
    %120 = arith.maximumf %118, %119 : vector<16x16x128xf32>
    %c3_108 = arith.constant 3 : index
    %c0_109 = arith.constant 0 : index
    %c0_110 = arith.constant 0 : index
    %121 = vector.load %arg8[%c3_108, %c0_109, %c0_110] : memref<20x16x128xf32, #tpu.memory_space<vmem>>, vector<16x16x128xf32>
    %122 = arith.maximumf %120, %121 : vector<16x16x128xf32>
    %c4_111 = arith.constant 4 : index
    %c0_112 = arith.constant 0 : index
    %c0_113 = arith.constant 0 : index
    %123 = vector.load %arg8[%c4_111, %c0_112, %c0_113] : memref<20x16x128xf32, #tpu.memory_space<vmem>>, vector<16x16x128xf32>
    %124 = arith.maximumf %122, %123 : vector<16x16x128xf32>
    %c15_i32_114 = arith.constant 15 : i32
    %125 = tpu.dynamic_rotate %124 by %c15_i32_114 dim 1 : vector<16x16x128xf32>, i32 -> vector<16x16x128xf32>
    %c0_115 = arith.constant 0 : index
    %c0_116 = arith.constant 0 : index
    %c0_117 = arith.constant 0 : index
    %126 = vector.load %arg6[%c0_115, %c0_116, %c0_117] : memref<4x16x128xf32, #tpu.memory_space<vmem>>, vector<1x16x128xf32>
    %127 = vector.shape_cast %126 : vector<1x16x128xf32> to vector<16x128xf32>
    %128 = vector.shape_cast %127 : vector<16x128xf32> to vector<1x16x128xf32>
    %129 = vector.broadcast %128 : vector<1x16x128xf32> to vector<16x16x128xf32>
    %130 = arith.addf %125, %129 : vector<16x16x128xf32>
    %131 = arith.maximumf %124, %130 : vector<16x16x128xf32>
    %c14_i32_118 = arith.constant 14 : i32
    %132 = tpu.dynamic_rotate %124 by %c14_i32_118 dim 1 : vector<16x16x128xf32>, i32 -> vector<16x16x128xf32>
    %c1_119 = arith.constant 1 : index
    %c0_120 = arith.constant 0 : index
    %c0_121 = arith.constant 0 : index
    %133 = vector.load %arg6[%c1_119, %c0_120, %c0_121] : memref<4x16x128xf32, #tpu.memory_space<vmem>>, vector<1x16x128xf32>
    %134 = vector.shape_cast %133 : vector<1x16x128xf32> to vector<16x128xf32>
    %135 = vector.shape_cast %134 : vector<16x128xf32> to vector<1x16x128xf32>
    %136 = vector.broadcast %135 : vector<1x16x128xf32> to vector<16x16x128xf32>
    %137 = arith.addf %132, %136 : vector<16x16x128xf32>
    %138 = arith.maximumf %131, %137 : vector<16x16x128xf32>
    %c1_i32_122 = arith.constant 1 : i32
    %139 = tpu.dynamic_rotate %124 by %c1_i32_122 dim 1 : vector<16x16x128xf32>, i32 -> vector<16x16x128xf32>
    %c2_123 = arith.constant 2 : index
    %c0_124 = arith.constant 0 : index
    %c0_125 = arith.constant 0 : index
    %140 = vector.load %arg6[%c2_123, %c0_124, %c0_125] : memref<4x16x128xf32, #tpu.memory_space<vmem>>, vector<1x16x128xf32>
    %141 = vector.shape_cast %140 : vector<1x16x128xf32> to vector<16x128xf32>
    %142 = vector.shape_cast %141 : vector<16x128xf32> to vector<1x16x128xf32>
    %143 = vector.broadcast %142 : vector<1x16x128xf32> to vector<16x16x128xf32>
    %144 = arith.addf %139, %143 : vector<16x16x128xf32>
    %145 = arith.maximumf %138, %144 : vector<16x16x128xf32>
    %c2_i32_126 = arith.constant 2 : i32
    %146 = tpu.dynamic_rotate %124 by %c2_i32_126 dim 1 : vector<16x16x128xf32>, i32 -> vector<16x16x128xf32>
    %c3_127 = arith.constant 3 : index
    %c0_128 = arith.constant 0 : index
    %c0_129 = arith.constant 0 : index
    %147 = vector.load %arg6[%c3_127, %c0_128, %c0_129] : memref<4x16x128xf32, #tpu.memory_space<vmem>>, vector<1x16x128xf32>
    %148 = vector.shape_cast %147 : vector<1x16x128xf32> to vector<16x128xf32>
    %149 = vector.shape_cast %148 : vector<16x128xf32> to vector<1x16x128xf32>
    %150 = vector.broadcast %149 : vector<1x16x128xf32> to vector<16x16x128xf32>
    %151 = arith.addf %146, %150 : vector<16x16x128xf32>
    %152 = arith.maximumf %145, %151 : vector<16x16x128xf32>
    %c0_130 = arith.constant 0 : index
    %c0_131 = arith.constant 0 : index
    %153 = vector.load %arg9[%c0_130, %c0_131] : memref<256x128xf32, #tpu.memory_space<vmem>>, vector<256x128xf32>
    %154 = vector.shape_cast %152 : vector<16x16x128xf32> to vector<256x128xf32>
    %c384 = arith.constant 384 : index
    %c0_132 = arith.constant 0 : index
    %155 = vector.load %arg4[%c384, %c0_132] : memref<512x128xf32, #tpu.memory_space<vmem>>, vector<128x128xf32>
    %cst_133 = arith.constant dense<0.000000e+00> : vector<256x128xf32>
    %156 = tpu.matmul %154, %155, %cst_133 {dimension_numbers = #tpu.dot_dimension_numbers<[1], [0], [0], [1], [0, 0, 1, 1], [], []>} : vector<256x128xf32>, vector<128x128xf32>, vector<256x128xf32> -> vector<256x128xf32>
    %157 = arith.addf %153, %156 : vector<256x128xf32>
    %c0_134 = arith.constant 0 : index
    %c0_135 = arith.constant 0 : index
    %158 = vector.load %arg9[%c0_134, %c0_135] : memref<256x128xf32, #tpu.memory_space<vmem>>, vector<256x128xf32>
    tpu.vector_store %arg9[%c0_134, %c0_135], %157 {strides = array<i32>} : memref<256x128xf32, #tpu.memory_space<vmem>>, vector<256x128xf32>,
    %c0_136 = arith.constant 0 : index
    %c0_137 = arith.constant 0 : index
    %159 = vector.load %arg9[%c0_136, %c0_137] : memref<256x128xf32, #tpu.memory_space<vmem>>, vector<256x128xf32>
    %cst_138 = arith.constant 5.000000e-01 : f32
    %160 = vector.broadcast %cst_138 : f32 to vector<256x128xf32>
    %161 = arith.mulf %160, %159 : vector<256x128xf32>
    %162 = math.tanh %161 : vector<256x128xf32>
    %cst_139 = arith.constant 5.000000e-01 : f32
    %163 = vector.broadcast %cst_139 : f32 to vector<256x128xf32>
    %164 = arith.mulf %163, %162 : vector<256x128xf32>
    %cst_140 = arith.constant 5.000000e-01 : f32
    %165 = vector.broadcast %cst_140 : f32 to vector<256x128xf32>
    %166 = arith.addf %164, %165 : vector<256x128xf32>
    %167 = arith.mulf %159, %166 : vector<256x128xf32>
    %168 = vector.shape_cast %167 : vector<256x128xf32> to vector<16x16x128xf32>
    %c0_141 = arith.constant 0 : index
    %c0_142 = arith.constant 0 : index
    %c0_143 = arith.constant 0 : index
    %c0_144 = arith.constant 0 : index
    %169 = vector.load %arg7[%c0_141, %c0_142, %c0_143, %c0_144] : memref<1x16x16x128xf32, #tpu.memory_space<vmem>>, vector<1x16x16x128xf32>
    %170 = vector.shape_cast %169 : vector<1x16x16x128xf32> to vector<16x16x128xf32>
    %171 = vector.shape_cast %168 : vector<16x16x128xf32> to vector<1x16x16x128xf32>
    tpu.vector_store %arg7[%c0_141, %c0_142, %c0_143, %c0_144], %171 {strides = array<i32>} : memref<1x16x16x128xf32, #tpu.memory_space<vmem>>, vector<1x16x16x128xf32>,
    return
  }
  func.func @transform_0(%arg0: i32) -> (i32, i32, i32, i32) {
    %c0_i32 = arith.constant 0 : i32
    %c0_i32_0 = arith.constant 0 : i32
    %c0_i32_1 = arith.constant 0 : i32
    %c0_i32_2 = arith.constant 0 : i32
    return %arg0, %c0_i32, %c0_i32_0, %c0_i32_1 : i32, i32, i32, i32
  }
  func.func @transform_1(%arg0: i32) -> (i32, i32) {
    %c0_i32 = arith.constant 0 : i32
    %c0_i32_0 = arith.constant 0 : i32
    %c0_i32_1 = arith.constant 0 : i32
    return %c0_i32, %c0_i32_0 : i32, i32
  }
  func.func @transform_2(%arg0: i32) -> (i32, i32) {
    %c0_i32 = arith.constant 0 : i32
    %c0_i32_0 = arith.constant 0 : i32
    %c0_i32_1 = arith.constant 0 : i32
    return %c0_i32, %c0_i32_0 : i32, i32
  }
  func.func @transform_3(%arg0: i32) -> (i32, i32) {
    %c0_i32 = arith.constant 0 : i32
    %c0_i32_0 = arith.constant 0 : i32
    %c0_i32_1 = arith.constant 0 : i32
    return %c0_i32, %c0_i32_0 : i32, i32
  }
  func.func @transform_4(%arg0: i32) -> (i32, i32) {
    %c0_i32 = arith.constant 0 : i32
    %c0_i32_0 = arith.constant 0 : i32
    %c0_i32_1 = arith.constant 0 : i32
    return %c0_i32, %c0_i32_0 : i32, i32
  }
  func.func @transform_5(%arg0: i32) -> (i32, i32, i32) {
    %c0_i32 = arith.constant 0 : i32
    %c0_i32_0 = arith.constant 0 : i32
    %c0_i32_1 = arith.constant 0 : i32
    %c0_i32_2 = arith.constant 0 : i32
    return %c0_i32, %c0_i32_0, %c0_i32_1 : i32, i32, i32
  }
  func.func @transform_6(%arg0: i32) -> (i32, i32, i32, i32) {
    %c0_i32 = arith.constant 0 : i32
    %c0_i32_0 = arith.constant 0 : i32
    %c0_i32_1 = arith.constant 0 : i32
    %c0_i32_2 = arith.constant 0 : i32
    return %arg0, %c0_i32, %c0_i32_0, %c0_i32_1 : i32, i32, i32, i32
  }
}

</mosaic_0001>

<llo_original>
// kernel: sppf_pallas_nhwc.1
$region0: #{sppf_pallas_nhwc.1}
  #allocation0 [shape = 'u32[]', space=smem, size = 0x4, offset = 0x4, fixed_abs, tag = 'smem constant byte address 0x4 - core index']
  #allocation1 [shape = 'u32[144,128]{1,0:T(1,128)}', space=vmem, size = 0x12000, scoped, tag = 'internal scratch']
  #allocation2 [shape = 'f32[20,16,128]{2,1,0:T(8,128)}', space=vmem, size = 0x28000, scoped, tag = 'scratch operand']
  #allocation3 [shape = 'f32[256,128]{1,0:T(8,128)}', space=vmem, size = 0x20000, scoped, tag = 'scratch operand']
  %s0 = inlined_call_operand.vmem [shape: f32[2,16,16,128], index: 0, kind: input, shape index: {}]
  %s1 = inlined_call_operand.vmem [shape: f32[128,128], index: 1, kind: input, shape index: {}]
  %s2 = inlined_call_operand.vmem [shape: f32[1,128], index: 2, kind: input, shape index: {}]
  %s3 = inlined_call_operand.vmem [shape: f32[512,128], index: 3, kind: input, shape index: {}]
  %s4 = inlined_call_operand.vmem [shape: f32[1,128], index: 4, kind: input, shape index: {}]
  %s5 = inlined_call_operand.vmem [shape: f32[4,16,128], index: 5, kind: input, shape index: {}]
  %s6 = inlined_call_operand.vmem [shape: f32[2,16,16,128], index: 6, kind: output, shape index: {}]
  %s7 = sld [smem:[#allocation0]]
  $region57: #{sppf_pallas_nhwc.1} parent=0
    _
  %s9 = ssub.s32 1, %s7
  %s10 = scalar_select 0, %s9, %s7
  loop: start=0, step=1, limit=4
  $region2: #{sppf_pallas_nhwc.1} parent=0 // loop_pre_header
    _
  $region3: #{sppf_pallas_nhwc.1} parent=0 // loop_header
    %s12 = sphi 0, %s16
    %p13 = scmp.ge.s32.totalorder %s12, 4
    %s22 = sphi 0, %s24
    %s25 = sphi 0, %s22
    %s26 = sphi 0, %s25
    %s42 = sphi 0, %s26
    %s46 = sphi 0, %s46
    %s48 = sphi 0, %s46
    %s49 = sphi 0, %s48
    %s63 = sphi 0, %s49
    %s67 = sphi 0, %s67
    %s69 = sphi 0, %s67
    %s70 = sphi 0, %s69
    %s84 = sphi 0, %s70
    %s88 = sphi 0, %s88
    %s90 = sphi 0, %s88
    %s91 = sphi 0, %s90
    %s105 = sphi 0, %s91
    %s109 = sphi 0, %s109
    %s111 = sphi 0, %s109
    %s112 = sphi 0, %s111
    %s126 = sphi 0, %s112
    %s130 = sphi 0, %s130
    %s132 = sphi 0, %s130
    %s133 = sphi 0, %s132
    %s147 = sphi 0, %s133
    %s153 = sphi 0, %s155
    %s156 = sphi 0, %s153
    %s157 = sphi 0, %s156
    %s173 = sphi 0, %s157
  $region4: #{sppf_pallas_nhwc.1} parent=0 // loop_header_branch
    %15 = sbr.rel (%p13) target = $region8
  $region5: #{sppf_pallas_nhwc.1} parent=0 // loop_body
    %s17 = ssub.s32 %s12, 1
    %s18 = ssub.s32 %s12, 2
    %s19 = sadd.s32 %s12, 1
    %s20 = ssub.s32 %s12, %s19
    %p21 = scmp.eq.s32.totalorder %s20, 0
    %s23 = sadd.s32 %s22, 1
    %s24 = scalar_select %p21, %s22, %s23
    %p27 = pneg %p21
    %p28 = scmp.eq.s32.totalorder %s12, 1
    %p29 = por %p27, %p28
    %p30 = scmp.ne.s32.totalorder %s22, %s25
    %p31 = scmp.eq.s32.totalorder %s12, 0
    %p32 = por %p30, %p31
    %p33 = scmp.ne.s32.totalorder %s22, %s25
    %p34 = scmp.eq.s32.totalorder %s17, 1
    %p35 = por %p33, %p34
    %p36 = scmp.ne.s32.totalorder %s25, %s26
    %p37 = scmp.eq.s32.totalorder %s17, 0
    %p38 = por %p36, %p37
    %p39 = scmp.ne.s32.totalorder %s25, %s26
    %p40 = scmp.eq.s32.totalorder %s18, 1
    %p41 = por %p39, %p40
    %p43 = scmp.ne.s32.totalorder %s26, %s42
    %p44 = scmp.eq.s32.totalorder %s18, 0
    %p45 = por %p43, %p44
    %s47 = sadd.s32 %s46, 1
    %p50 = scmp.eq.s32.totalorder %s12, 1
    %p51 = scmp.ne.s32.totalorder %s46, %s48
    %p52 = scmp.eq.s32.totalorder %s12, 0
    %p53 = por %p51, %p52
    %p54 = scmp.ne.s32.totalorder %s46, %s48
    %p55 = scmp.eq.s32.totalorder %s17, 1
    %p56 = por %p54, %p55
    %p57 = scmp.ne.s32.totalorder %s48, %s49
    %p58 = scmp.eq.s32.totalorder %s17, 0
    %p59 = por %p57, %p58
    %p60 = scmp.ne.s32.totalorder %s48, %s49
    %p61 = scmp.eq.s32.totalorder %s18, 1
    %p62 = por %p60, %p61
    %p64 = scmp.ne.s32.totalorder %s49, %s63
    %p65 = scmp.eq.s32.totalorder %s18, 0
    %p66 = por %p64, %p65
    %s68 = sadd.s32 %s67, 1
    %p71 = scmp.eq.s32.totalorder %s12, 1
    %p72 = scmp.ne.s32.totalorder %s67, %s69
    %p73 = scmp.eq.s32.totalorder %s12, 0
    %p74 = por %p72, %p73
    %p75 = scmp.ne.s32.totalorder %s67, %s69
    %p76 = scmp.eq.s32.totalorder %s17, 1
    %p77 = por %p75, %p76
    %p78 = scmp.ne.s32.totalorder %s69, %s70
    %p79 = scmp.eq.s32.totalorder %s17, 0
    %p80 = por %p78, %p79
    %p81 = scmp.ne.s32.totalorder %s69, %s70
    %p82 = scmp.eq.s32.totalorder %s18, 1
    %p83 = por %p81, %p82
    %p85 = scmp.ne.s32.totalorder %s70, %s84
    %p86 = scmp.eq.s32.totalorder %s18, 0
    %p87 = por %p85, %p86
    %s89 = sadd.s32 %s88, 1
    %p92 = scmp.eq.s32.totalorder %s12, 1
    %p93 = scmp.ne.s32.totalorder %s88, %s90
    %p94 = scmp.eq.s32.totalorder %s12, 0
    %p95 = por %p93, %p94
    %p96 = scmp.ne.s32.totalorder %s88, %s90
    %p97 = scmp.eq.s32.totalorder %s17, 1
    %p98 = por %p96, %p97
    %p99 = scmp.ne.s32.totalorder %s90, %s91
    %p100 = scmp.eq.s32.totalorder %s17, 0
    %p101 = por %p99, %p100
    %p102 = scmp.ne.s32.totalorder %s90, %s91
    %p103 = scmp.eq.s32.totalorder %s18, 1
    %p104 = por %p102, %p103
    %p106 = scmp.ne.s32.totalorder %s91, %s105
    %p107 = scmp.eq.s32.totalorder %s18, 0
    %p108 = por %p106, %p107
    %s110 = sadd.s32 %s109, 1
    %p113 = scmp.eq.s32.totalorder %s12, 1
    %p114 = scmp.ne.s32.totalorder %s109, %s111
    %p115 = scmp.eq.s32.totalorder %s12, 0
    %p116 = por %p114, %p115
    %p117 = scmp.ne.s32.totalorder %s109, %s111
    %p118 = scmp.eq.s32.totalorder %s17, 1
    %p119 = por %p117, %p118
    %p120 = scmp.ne.s32.totalorder %s111, %s112
    %p121 = scmp.eq.s32.totalorder %s17, 0
    %p122 = por %p120, %p121
    %p123 = scmp.ne.s32.totalorder %s111, %s112
    %p124 = scmp.eq.s32.totalorder %s18, 1
    %p125 = por %p123, %p124
    %p127 = scmp.ne.s32.totalorder %s112, %s126
    %p128 = scmp.eq.s32.totalorder %s18, 0
    %p129 = por %p127, %p128
    %s131 = sadd.s32 %s130, 1
    %p134 = scmp.eq.s32.totalorder %s12, 1
    %p135 = scmp.ne.s32.totalorder %s130, %s132
    %p136 = scmp.eq.s32.totalorder %s12, 0
    %p137 = por %p135, %p136
    %p138 = scmp.ne.s32.totalorder %s130, %s132
    %p139 = scmp.eq.s32.totalorder %s17, 1
    %p140 = por %p138, %p139
    %p141 = scmp.ne.s32.totalorder %s132, %s133
    %p142 = scmp.eq.s32.totalorder %s17, 0
    %p143 = por %p141, %p142
    %p144 = scmp.ne.s32.totalorder %s132, %s133
    %p145 = scmp.eq.s32.totalorder %s18, 1
    %p146 = por %p144, %p145
    %p148 = scmp.ne.s32.totalorder %s133, %s147
    %p149 = scmp.eq.s32.totalorder %s18, 0
    %p150 = por %p148, %p149
    %s151 = ssub.s32 %s12, %s19
    %p152 = scmp.eq.s32.totalorder %s151, 0
    %s154 = sadd.s32 %s153, 1
    %s155 = scalar_select %p152, %s153, %s154
    %p158 = pneg %p152
    %p159 = scmp.eq.s32.totalorder %s12, 1
    %p160 = por %p158, %p159
    %p161 = scmp.ne.s32.totalorder %s153, %s156
    %p162 = scmp.eq.s32.totalorder %s12, 0
    %p163 = por %p161, %p162
    %p164 = scmp.ne.s32.totalorder %s153, %s156
    %p165 = scmp.eq.s32.totalorder %s17, 1
    %p166 = por %p164, %p165
    %p167 = scmp.ne.s32.totalorder %s156, %s157
    %p168 = scmp.eq.s32.totalorder %s17, 0
    %p169 = por %p167, %p168
    %p170 = scmp.ne.s32.totalorder %s156, %s157
    %p171 = scmp.eq.s32.totalorder %s18, 1
    %p172 = por %p170, %p171
    %p174 = scmp.ne.s32.totalorder %s157, %s173
    %p175 = scmp.eq.s32.totalorder %s18, 0
    %p176 = por %p174, %p175
    %p177 = scmp.le.s32.totalorder 1, %s12
    %p178 = scmp.lt.s32.totalorder %s12, 3
    %p179 = pnand %p177, %p178
    %p180 = pneg %p179
    // Predicated region
    $region9: #{sppf_pallas_nhwc.1} parent=5 // pred_check
      _
    $region10: #{sppf_pallas_nhwc.1} parent=5 // pred_check_branch
      %182 = sbr.rel (%p179) target = $region12
    $region11: #{sppf_pallas_nhwc.1} parent=5 // pred_region
      %s183 = ssub.s32 %s12, 1
      // Predicated region
      $region13: #{sppf_pallas_nhwc.1} parent=11 // pred_check
        %p184 = pneg %p59
      $region14: #{sppf_pallas_nhwc.1} parent=11 // pred_check_branch
        %186 = sbr.rel (%p184) target = $region16
      $region15: #{sppf_pallas_nhwc.1} parent=11 // pred_region
        _
      $region16: #{sppf_pallas_nhwc.1} parent=11 // pred_fallthru
        _
      // Predicated region
      $region17: #{sppf_pallas_nhwc.1} parent=11 // pred_check
        %p187 = pneg %p80
      $region18: #{sppf_pallas_nhwc.1} parent=11 // pred_check_branch
        %189 = sbr.rel (%p187) target = $region20
      $region19: #{sppf_pallas_nhwc.1} parent=11 // pred_region
        _
      $region20: #{sppf_pallas_nhwc.1} parent=11 // pred_fallthru
        _
      // Predicated region
      $region21: #{sppf_pallas_nhwc.1} parent=11 // pred_check
        %p190 = pneg %p101
      $region22: #{sppf_pallas_nhwc.1} parent=11 // pred_check_branch
        %192 = sbr.rel (%p190) target = $region24
      $region23: #{sppf_pallas_nhwc.1} parent=11 // pred_region
        _
      $region24: #{sppf_pallas_nhwc.1} parent=11 // pred_fallthru
        _
      // Predicated region
      $region25: #{sppf_pallas_nhwc.1} parent=11 // pred_check
        %p193 = pneg %p122
      $region26: #{sppf_pallas_nhwc.1} parent=11 // pred_check_branch
        %195 = sbr.rel (%p193) target = $region28
      $region27: #{sppf_pallas_nhwc.1} parent=11 // pred_region
        _
      $region28: #{sppf_pallas_nhwc.1} parent=11 // pred_fallthru
        _
      // Predicated region
      $region29: #{sppf_pallas_nhwc.1} parent=11 // pred_check
        %p196 = pneg %p143
      $region30: #{sppf_pallas_nhwc.1} parent=11 // pred_check_branch
        %198 = sbr.rel (%p196) target = $region32
      $region31: #{sppf_pallas_nhwc.1} parent=11 // pred_region
        _
      $region32: #{sppf_pallas_nhwc.1} parent=11 // pred_fallthru
        _
    $region12: #{sppf_pallas_nhwc.1} parent=5 // pred_fallthru
      _
    %p199 = scmp.lt.s32.totalorder %s12, 2
    // Predicated region
    $region33: #{sppf_pallas_nhwc.1} parent=5 // pred_check
      %p200 = pneg %p199
    $region34: #{sppf_pallas_nhwc.1} parent=5 // pred_check_branch
      %202 = sbr.rel (%p200) target = $region36
    $region35: #{sppf_pallas_nhwc.1} parent=5 // pred_region
      // Predicated region
      $region37: #{sppf_pallas_nhwc.1} parent=35 // pred_check
        %p203 = pneg %p32
      $region38: #{sppf_pallas_nhwc.1} parent=35 // pred_check_branch
        %205 = sbr.rel (%p203) target = $region40
      $region39: #{sppf_pallas_nhwc.1} parent=35 // pred_region
        %p206 = scmp.lt.s32.totalorder %s12, 1
        %s207 = scalar_select %p206, %s12, 1
        %s208 = smul.addr %s207, 32
        %s209 = smul.addr %s208, 8
        %s210 = scalar_lea.vmem %s0, %s209
      $region40: #{sppf_pallas_nhwc.1} parent=35 // pred_fallthru
        _
    $region36: #{sppf_pallas_nhwc.1} parent=5 // pred_fallthru
      _
    %p211 = scmp.le.s32.totalorder 1, %s12
    %p212 = scmp.lt.s32.totalorder %s12, 3
    %p213 = pnand %p211, %p212
    %p214 = pneg %p213
    // Predicated region
    $region41: #{sppf_pallas_nhwc.1} parent=5 // pred_check
      _
    $region42: #{sppf_pallas_nhwc.1} parent=5 // pred_check_branch
      %216 = sbr.rel (%p213) target = $region44
    $region43: #{sppf_pallas_nhwc.1} parent=5 // pred_region
      %s217 = ssub.s32 %s12, 1
      %p218 = scmp.lt.s32.totalorder %s17, 1
      %s219 = scalar_select %p218, %s17, 1
      %s220 = smul.addr %s219, 32
      %s221 = smul.addr %s220, 8
      %s222 = scalar_lea.vmem %s0, %s221
      %p223 = pneg %p38
      %p224 = pneg %p35
      %p225 = pneg %p59
      %p226 = pneg %p56
      %p227 = pneg %p80
      %p228 = pneg %p77
      %p229 = pneg %p101
      %p230 = pneg %p98
      %p231 = pneg %p122
      %p232 = pneg %p119
      %p233 = pneg %p143
      %p234 = pneg %p140
      %p235 = pneg %p169
      %p236 = pneg %p166
      %p237 = scmp.lt.s32.totalorder %s17, 1
      %s238 = scalar_select %p237, %s17, 1
      %s239 = smul.addr %s238, 32
      %s240 = smul.addr %s239, 8
      %s241 = scalar_lea.vmem %s6, %s240
      %p242 = scmp.lt.s32.totalorder %s17, 1
      %s243 = scalar_select %p242, %s17, 1
      %s244 = smul.addr %s243, 32
      %s245 = smul.addr %s244, 8
      %s246 = scalar_lea.vmem %s0, %s245
      %p247 = scmp.lt.s32.totalorder %s17, 1
      %s248 = scalar_select %p247, %s17, 1
      %s249 = smul.addr %s248, 32
      %s250 = smul.addr %s249, 8
      %s251 = scalar_lea.vmem %s6, %s250
      %v252 = vld [vmem:[%s246] sm:$0xff]
      %v253 = vld [vmem:[%s246 + $0x8] sm:$0xff]
      %v254 = vld [vmem:[%s246 + $0x10] sm:$0xff]
      %v255 = vld [vmem:[%s246 + $0x18] sm:$0xff]
      %v256 = vld [vmem:[%s246 + $0x20] sm:$0xff]
      %v257 = vld [vmem:[%s246 + $0x28] sm:$0xff]
      %v258 = vld [vmem:[%s246 + $0x30] sm:$0xff]
      %v259 = vld [vmem:[%s246 + $0x38] sm:$0xff]
      %v260 = vld [vmem:[%s246 + $0x40] sm:$0xff]
      %v261 = vld [vmem:[%s246 + $0x48] sm:$0xff]
      %v262 = vld [vmem:[%s246 + $0x50] sm:$0xff]
      %v263 = vld [vmem:[%s246 + $0x58] sm:$0xff]
      %v264 = vld [vmem:[%s246 + $0x60] sm:$0xff]
      %v265 = vld [vmem:[%s246 + $0x68] sm:$0xff]
      %v266 = vld [vmem:[%s246 + $0x70] sm:$0xff]
      %v267 = vld [vmem:[%s246 + $0x78] sm:$0xff]
      %v268 = vld [vmem:[%s246 + $0x80] sm:$0xff]
      %v269 = vld [vmem:[%s246 + $0x88] sm:$0xff]
      %v270 = vld [vmem:[%s246 + $0x90] sm:$0xff]
      %v271 = vld [vmem:[%s246 + $0x98] sm:$0xff]
      %v272 = vld [vmem:[%s246 + $0xa0] sm:$0xff]
      %v273 = vld [vmem:[%s246 + $0xa8] sm:$0xff]
      %v274 = vld [vmem:[%s246 + $0xb0] sm:$0xff]
      %v275 = vld [vmem:[%s246 + $0xb8] sm:$0xff]
      %v276 = vld [vmem:[%s246 + $0xc0] sm:$0xff]
      %v277 = vld [vmem:[%s246 + $0xc8] sm:$0xff]
      %v278 = vld [vmem:[%s246 + $0xd0] sm:$0xff]
      %v279 = vld [vmem:[%s246 + $0xd8] sm:$0xff]
      %v280 = vld [vmem:[%s246 + $0xe0] sm:$0xff]
      %v281 = vld [vmem:[%s246 + $0xe8] sm:$0xff]
      %v282 = vld [vmem:[%s246 + $0xf0] sm:$0xff]
      %v283 = vld [vmem:[%s246 + $0xf8] sm:$0xff]
      %v284 = vld [vmem:[%s1] sm:$0xff]
      %v285 = vld [vmem:[%s1 + $0x8] sm:$0xff]
      %v286 = vld [vmem:[%s1 + $0x10] sm:$0xff]
      %v287 = vld [vmem:[%s1 + $0x18] sm:$0xff]
      %v288 = vld [vmem:[%s1 + $0x20] sm:$0xff]
      %v289 = vld [vmem:[%s1 + $0x28] sm:$0xff]
      %v290 = vld [vmem:[%s1 + $0x30] sm:$0xff]
      %v291 = vld [vmem:[%s1 + $0x38] sm:$0xff]
      %v292 = vld [vmem:[%s1 + $0x40] sm:$0xff]
      %v293 = vld [vmem:[%s1 + $0x48] sm:$0xff]
      %v294 = vld [vmem:[%s1 + $0x50] sm:$0xff]
      %v295 = vld [vmem:[%s1 + $0x58] sm:$0xff]
      %v296 = vld [vmem:[%s1 + $0x60] sm:$0xff]
      %v297 = vld [vmem:[%s1 + $0x68] sm:$0xff]
      %v298 = vld [vmem:[%s1 + $0x70] sm:$0xff]
      %v299 = vld [vmem:[%s1 + $0x78] sm:$0xff]
      %v300 = vld [vmem:[%s2] sm:$0x1]
      %v302 = vlaneseq
      %v303 = vshrl.u32 %v302, 7
      %v304 = vsub.s32 0, %v303
      %v305 = vrot.slane %v300, %v304
      %307 = vmatprep.subr.mxu0 0.0
      %308 = vmatpush1.msra.mxu0 %v284
      %309 = vmatprep.subr.mxu0 0.0
      %310 = vmatpush1.msra.mxu0 %v285
      %311 = vmatprep.subr.mxu0 0.0
      %312 = vmatpush1.msra.mxu0 %v286
      %313 = vmatprep.subr.mxu0 0.0
      %314 = vmatpush1.msra.mxu0 %v287
      %315 = vmatprep.subr.mxu0 0.0
      %316 = vmatpush1.msra.mxu0 %v288
      %317 = vmatprep.subr.mxu0 0.0
      %318 = vmatpush1.msra.mxu0 %v289
      %319 = vmatprep.subr.mxu0 0.0
      %320 = vmatpush1.msra.mxu0 %v290
      %321 = vmatprep.subr.mxu0 0.0
      %322 = vmatpush1.msra.mxu0 %v291
      %323 = vmatprep.subr.mxu0 0.0
      %324 = vmatpush1.msra.mxu0 %v292
      %325 = vmatprep.subr.mxu0 0.0
      %326 = vmatpush1.msra.mxu0 %v293
      %327 = vmatprep.subr.mxu0 0.0
      %328 = vmatpush1.msra.mxu0 %v294
      %329 = vmatprep.subr.mxu0 0.0
      %330 = vmatpush1.msra.mxu0 %v295
      %331 = vmatprep.subr.mxu0 0.0
      %332 = vmatpush1.msra.mxu0 %v296
      %333 = vmatprep.subr.mxu0 0.0
      %334 = vmatpush1.msra.mxu0 %v297
      %335 = vmatprep.subr.mxu0 0.0
      %336 = vmatpush1.msra.mxu0 %v298
      %337 = vmatprep.subr.mxu0 0.0
      %338 = vmatpush1.msra.mxu0 %v299
      %339 = vmatprep.subr.mxu0 0.0
      %340 = vmatpush1.msra.mxu0 0.0
      %341 = vmatprep.subr.mxu0 0.0
      %342 = vmatpush1.msra.mxu0 0.0
      %343 = vmatprep.subr.mxu0 0.0
      %344 = vmatpush1.msra.mxu0 0.0
      %345 = vmatprep.subr.mxu0 0.0
      %346 = vmatpush1.msra.mxu0 0.0
      %347 = vmatprep.subr.mxu0 0.0
      %348 = vmatpush1.msra.mxu0 0.0
      %349 = vmatprep.subr.mxu0 0.0
      %350 = vmatpush1.msra.mxu0 0.0
      %351 = vmatprep.subr.mxu0 0.0
      %352 = vmatpush1.msra.mxu0 0.0
      %353 = vmatprep.subr.mxu0 0.0
      %354 = vmatpush1.msra.mxu0 0.0
      %355 = vmatprep.subr.mxu0 0.0
      %356 = vmatpush1.msra.mxu0 0.0
      %357 = vmatprep.subr.mxu0 0.0
      %358 = vmatpush1.msra.mxu0 0.0
      %359 = vmatprep.subr.mxu0 0.0
      %360 = vmatpush1.msra.mxu0 0.0
      %361 = vmatprep.subr.mxu0 0.0
      %362 = vmatpush1.msra.mxu0 0.0
      %363 = vmatprep.subr.mxu0 0.0
      %364 = vmatpush1.msra.mxu0 0.0
      %365 = vmatprep.subr.mxu0 0.0
      %366 = vmatpush1.msra.mxu0 0.0
      %367 = vmatprep.subr.mxu0 0.0
      %368 = vmatpush1.msra.mxu0 0.0
      %369 = vmatprep.subr.mxu0 0.0
      %370 = vmatpush1.msra.mxu0 0.0
      %371 = vmatprep.mubr.f32.mxu0 0.0
      %372 = vmatmul.mubr.f32.gmra.mrb[0].mxu0 %v252
      %v373 = vpop.f32.mrb[0].mxu0
      %v374 = vadd.f32 %v305, %v373
      %v375 = vpop.f32.mrb[0].mxu0
      %376 = vmatprep.mubr.f32.mxu0 0.0
      %377 = vmatmul.mubr.f32.gmra.mrb[0].mxu0 %v253
      %v378 = vpop.f32.mrb[0].mxu0
      %v379 = vadd.f32 %v305, %v378
      %v380 = vpop.f32.mrb[0].mxu0
      %381 = vmatprep.mubr.f32.mxu0 0.0
      %382 = vmatmul.mubr.f32.gmra.mrb[0].mxu0 %v254
      %v383 = vpop.f32.mrb[0].mxu0
      %v384 = vadd.f32 %v305, %v383
      %v385 = vpop.f32.mrb[0].mxu0
      %386 = vmatprep.mubr.f32.mxu0 0.0
      %387 = vmatmul.mubr.f32.gmra.mrb[0].mxu0 %v255
      %v388 = vpop.f32.mrb[0].mxu0
      %v389 = vadd.f32 %v305, %v388
      %v390 = vpop.f32.mrb[0].mxu0
      %391 = vmatprep.mubr.f32.mxu0 0.0
      %392 = vmatmul.mubr.f32.gmra.mrb[0].mxu0 %v256
      %v393 = vpop.f32.mrb[0].mxu0
      %v394 = vadd.f32 %v305, %v393
      %v395 = vpop.f32.mrb[0].mxu0
      %396 = vmatprep.mubr.f32.mxu0 0.0
      %397 = vmatmul.mubr.f32.gmra.mrb[0].mxu0 %v257
      %v398 = vpop.f32.mrb[0].mxu0
      %v399 = vadd.f32 %v305, %v398
      %v400 = vpop.f32.mrb[0].mxu0
      %401 = vmatprep.mubr.f32.mxu0 0.0
      %402 = vmatmul.mubr.f32.gmra.mrb[0].mxu0 %v258
      %v403 = vpop.f32.mrb[0].mxu0
      %v404 = vadd.f32 %v305, %v403
      %v405 = vpop.f32.mrb[0].mxu0
      %406 = vmatprep.mubr.f32.mxu0 0.0
      %407 = vmatmul.mubr.f32.gmra.mrb[0].mxu0 %v259
      %v408 = vpop.f32.mrb[0].mxu0
      %v409 = vadd.f32 %v305, %v408
      %v410 = vpop.f32.mrb[0].mxu0
      %411 = vmatprep.mubr.f32.mxu0 0.0
      %412 = vmatmul.mubr.f32.gmra.mrb[0].mxu0 %v260
      %v413 = vpop.f32.mrb[0].mxu0
      %v414 = vadd.f32 %v305, %v413
      %v415 = vpop.f32.mrb[0].mxu0
      %416 = vmatprep.mubr.f32.mxu0 0.0
      %417 = vmatmul.mubr.f32.gmra.mrb[0].mxu0 %v261
      %v418 = vpop.f32.mrb[0].mxu0
      %v419 = vadd.f32 %v305, %v418
      %v420 = vpop.f32.mrb[0].mxu0
      %421 = vmatprep.mubr.f32.mxu0 0.0
      %422 = vmatmul.mubr.f32.gmra.mrb[0].mxu0 %v262
      %v423 = vpop.f32.mrb[0].mxu0
      %v424 = vadd.f32 %v305, %v423
      %v425 = vpop.f32.mrb[0].mxu0
      %426 = vmatprep.mubr.f32.mxu0 0.0
      %427 = vmatmul.mubr.f32.gmra.mrb[0].mxu0 %v263
      %v428 = vpop.f32.mrb[0].mxu0
      %v429 = vadd.f32 %v305, %v428
      %v430 = vpop.f32.mrb[0].mxu0
      %431 = vmatprep.mubr.f32.mxu0 0.0
      %432 = vmatmul.mubr.f32.gmra.mrb[0].mxu0 %v264
      %v433 = vpop.f32.mrb[0].mxu0
      %v434 = vadd.f32 %v305, %v433
      %v435 = vpop.f32.mrb[0].mxu0
      %436 = vmatprep.mubr.f32.mxu0 0.0
      %437 = vmatmul.mubr.f32.gmra.mrb[0].mxu0 %v265
      %v438 = vpop.f32.mrb[0].mxu0
      %v439 = vadd.f32 %v305, %v438
      %v440 = vpop.f32.mrb[0].mxu0
      %441 = vmatprep.mubr.f32.mxu0 0.0
      %442 = vmatmul.mubr.f32.gmra.mrb[0].mxu0 %v266
      %v443 = vpop.f32.mrb[0].mxu0
      %v444 = vadd.f32 %v305, %v443
      %v445 = vpop.f32.mrb[0].mxu0
      %446 = vmatprep.mubr.f32.mxu0 0.0
      %447 = vmatmul.mubr.f32.gmra.mrb[0].mxu0 %v267
      %v448 = vpop.f32.mrb[0].mxu0
      %v449 = vadd.f32 %v305, %v448
      %v450 = vpop.f32.mrb[0].mxu0
      %451 = vmatprep.mubr.f32.mxu0 0.0
      %452 = vmatmul.mubr.f32.gmra.mrb[0].mxu0 %v268
      %v453 = vpop.f32.mrb[0].mxu0
      %v454 = vadd.f32 %v305, %v453
      %v455 = vpop.f32.mrb[0].mxu0
      %456 = vmatprep.mubr.f32.mxu0 0.0
      %457 = vmatmul.mubr.f32.gmra.mrb[0].mxu0 %v269
      %v458 = vpop.f32.mrb[0].mxu0
      %v459 = vadd.f32 %v305, %v458
      %v460 = vpop.f32.mrb[0].mxu0
      %461 = vmatprep.mubr.f32.mxu0 0.0
      %462 = vmatmul.mubr.f32.gmra.mrb[0].mxu0 %v270
      %v463 = vpop.f32.mrb[0].mxu0
      %v464 = vadd.f32 %v305, %v463
      %v465 = vpop.f32.mrb[0].mxu0
      %466 = vmatprep.mubr.f32.mxu0 0.0
      %467 = vmatmul.mubr.f32.gmra.mrb[0].mxu0 %v271
      %v468 = vpop.f32.mrb[0].mxu0
      %v469 = vadd.f32 %v305, %v468
      %v470 = vpop.f32.mrb[0].mxu0
      %471 = vmatprep.mubr.f32.mxu0 0.0
      %472 = vmatmul.mubr.f32.gmra.mrb[0].mxu0 %v272
      %v473 = vpop.f32.mrb[0].mxu0
      %v474 = vadd.f32 %v305, %v473
      %v475 = vpop.f32.mrb[0].mxu0
      %476 = vmatprep.mubr.f32.mxu0 0.0
      %477 = vmatmul.mubr.f32.gmra.mrb[0].mxu0 %v273
      %v478 = vpop.f32.mrb[0].mxu0
      %v479 = vadd.f32 %v305, %v478
      %v480 = vpop.f32.mrb[0].mxu0
      %481 = vmatprep.mubr.f32.mxu0 0.0
      %482 = vmatmul.mubr.f32.gmra.mrb[0].mxu0 %v274
      %v483 = vpop.f32.mrb[0].mxu0
      %v484 = vadd.f32 %v305, %v483
      %v485 = vpop.f32.mrb[0].mxu0
      %486 = vmatprep.mubr.f32.mxu0 0.0
      %487 = vmatmul.mubr.f32.gmra.mrb[0].mxu0 %v275
      %v488 = vpop.f32.mrb[0].mxu0
      %v489 = vadd.f32 %v305, %v488
      %v490 = vpop.f32.mrb[0].mxu0
      %491 = vmatprep.mubr.f32.mxu0 0.0
      %492 = vmatmul.mubr.f32.gmra.mrb[0].mxu0 %v276
      %v493 = vpop.f32.mrb[0].mxu0
      %v494 = vadd.f32 %v305, %v493
      %v495 = vpop.f32.mrb[0].mxu0
      %496 = vmatprep.mubr.f32.mxu0 0.0
      %497 = vmatmul.mubr.f32.gmra.mrb[0].mxu0 %v277
      %v498 = vpop.f32.mrb[0].mxu0
      %v499 = vadd.f32 %v305, %v498
      %v500 = vpop.f32.mrb[0].mxu0
      %501 = vmatprep.mubr.f32.mxu0 0.0
      %502 = vmatmul.mubr.f32.gmra.mrb[0].mxu0 %v278
      %v503 = vpop.f32.mrb[0].mxu0
      %v504 = vadd.f32 %v305, %v503
      %v505 = vpop.f32.mrb[0].mxu0
      %506 = vmatprep.mubr.f32.mxu0 0.0
      %507 = vmatmul.mubr.f32.gmra.mrb[0].mxu0 %v279
      %v508 = vpop.f32.mrb[0].mxu0
      %v509 = vadd.f32 %v305, %v508
      %v510 = vpop.f32.mrb[0].mxu0
      %511 = vmatprep.mubr.f32.mxu0 0.0
      %512 = vmatmul.mubr.f32.gmra.mrb[0].mxu0 %v280
      %v513 = vpop.f32.mrb[0].mxu0
      %v514 = vadd.f32 %v305, %v513
      %v515 = vpop.f32.mrb[0].mxu0
      %516 = vmatprep.mubr.f32.mxu0 0.0
      %517 = vmatmul.mubr.f32.gmra.mrb[0].mxu0 %v281
      %v518 = vpop.f32.mrb[0].mxu0
      %v519 = vadd.f32 %v305, %v518
      %v520 = vpop.f32.mrb[0].mxu0
      %521 = vmatprep.mubr.f32.mxu0 0.0
      %522 = vmatmul.mubr.f32.gmra.mrb[0].mxu0 %v282
      %v523 = vpop.f32.mrb[0].mxu0
      %v524 = vadd.f32 %v305, %v523
      %v525 = vpop.f32.mrb[0].mxu0
      %526 = vmatprep.mubr.f32.mxu0 0.0
      %527 = vmatmul.mubr.f32.gmra.mrb[0].mxu0 %v283
      %v528 = vpop.f32.mrb[0].mxu0
      %v529 = vadd.f32 %v305, %v528
      %v530 = vpop.f32.mrb[0].mxu0
      %531 = vdwg.mxu0
      %v532 = vmul.f32 %v374, 0.5
      %v533 = vmul.f32 %v379, 0.5
      %v534 = vmul.f32 %v384, 0.5
      %v535 = vmul.f32 %v389, 0.5
      %v536 = vmul.f32 %v394, 0.5
      %v537 = vmul.f32 %v399, 0.5
      %v538 = vmul.f32 %v404, 0.5
      %v539 = vmul.f32 %v409, 0.5
      %v540 = vmul.f32 %v414, 0.5
      %v541 = vmul.f32 %v419, 0.5
      %v542 = vmul.f32 %v424, 0.5
      %v543 = vmul.f32 %v429, 0.5
      %v544 = vmul.f32 %v434, 0.5
      %v545 = vmul.f32 %v439, 0.5
      %v546 = vmul.f32 %v444, 0.5
      %v547 = vmul.f32 %v449, 0.5
      %v548 = vmul.f32 %v454, 0.5
      %v549 = vmul.f32 %v459, 0.5
      %v550 = vmul.f32 %v464, 0.5
      %v551 = vmul.f32 %v469, 0.5
      %v552 = vmul.f32 %v474, 0.5
      %v553 = vmul.f32 %v479, 0.5
      %v554 = vmul.f32 %v484, 0.5
      %v555 = vmul.f32 %v489, 0.5
      %v556 = vmul.f32 %v494, 0.5
      %v557 = vmul.f32 %v499, 0.5
      %v558 = vmul.f32 %v504, 0.5
      %v559 = vmul.f32 %v509, 0.5
      %v560 = vmul.f32 %v514, 0.5
      %v561 = vmul.f32 %v519, 0.5
      %v562 = vmul.f32 %v524, 0.5
      %v563 = vmul.f32 %v529, 0.5
      %v564 = vtanh.pop %v532
      %v565 = vtanh.pop %v533
      %v566 = vtanh.pop %v534
      %v567 = vtanh.pop %v535
      %v568 = vtanh.pop %v536
      %v569 = vtanh.pop %v537
      %v570 = vtanh.pop %v538
      %v571 = vtanh.pop %v539
      %v572 = vtanh.pop %v540
      %v573 = vtanh.pop %v541
      %v574 = vtanh.pop %v542
      %v575 = vtanh.pop %v543
      %v576 = vtanh.pop %v544
      %v577 = vtanh.pop %v545
      %v578 = vtanh.pop %v546
      %v579 = vtanh.pop %v547
      %v580 = vtanh.pop %v548
      %v581 = vtanh.pop %v549
      %v582 = vtanh.pop %v550
      %v583 = vtanh.pop %v551
      %v584 = vtanh.pop %v552
      %v585 = vtanh.pop %v553
      %v586 = vtanh.pop %v554
      %v587 = vtanh.pop %v555
      %v588 = vtanh.pop %v556
      %v589 = vtanh.pop %v557
      %v590 = vtanh.pop %v558
      %v591 = vtanh.pop %v559
      %v592 = vtanh.pop %v560
      %v593 = vtanh.pop %v561
      %v594 = vtanh.pop %v562
      %v595 = vtanh.pop %v563
      %v596 = vmul.f32 %v564, 0.5
      %v597 = vmul.f32 %v565, 0.5
      %v598 = vmul.f32 %v566, 0.5
      %v599 = vmul.f32 %v567, 0.5
      %v600 = vmul.f32 %v568, 0.5
      %v601 = vmul.f32 %v569, 0.5
      %v602 = vmul.f32 %v570, 0.5
      %v603 = vmul.f32 %v571, 0.5
      %v604 = vmul.f32 %v572, 0.5
      %v605 = vmul.f32 %v573, 0.5
      %v606 = vmul.f32 %v574, 0.5
      %v607 = vmul.f32 %v575, 0.5
      %v608 = vmul.f32 %v576, 0.5
      %v609 = vmul.f32 %v577, 0.5
      %v610 = vmul.f32 %v578, 0.5
      %v611 = vmul.f32 %v579, 0.5
      %v612 = vmul.f32 %v580, 0.5
      %v613 = vmul.f32 %v581, 0.5
      %v614 = vmul.f32 %v582, 0.5
      %v615 = vmul.f32 %v583, 0.5
      %v616 = vmul.f32 %v584, 0.5
      %v617 = vmul.f32 %v585, 0.5
      %v618 = vmul.f32 %v586, 0.5
      %v619 = vmul.f32 %v587, 0.5
      %v620 = vmul.f32 %v588, 0.5
      %v621 = vmul.f32 %v589, 0.5
      %v622 = vmul.f32 %v590, 0.5
      %v623 = vmul.f32 %v591, 0.5
      %v624 = vmul.f32 %v592, 0.5
      %v625 = vmul.f32 %v593, 0.5
      %v626 = vmul.f32 %v594, 0.5
      %v627 = vmul.f32 %v595, 0.5
      %v628 = vadd.f32 %v596, 0.5
      %v629 = vadd.f32 %v597, 0.5
      %v630 = vadd.f32 %v598, 0.5
      %v631 = vadd.f32 %v599, 0.5
      %v632 = vadd.f32 %v600, 0.5
      %v633 = vadd.f32 %v601, 0.5
      %v634 = vadd.f32 %v602, 0.5
      %v635 = vadd.f32 %v603, 0.5
      %v636 = vadd.f32 %v604, 0.5
      %v637 = vadd.f32 %v605, 0.5
      %v638 = vadd.f32 %v606, 0.5
      %v639 = vadd.f32 %v607, 0.5
      %v640 = vadd.f32 %v608, 0.5
      %v641 = vadd.f32 %v609, 0.5
      %v642 = vadd.f32 %v610, 0.5
      %v643 = vadd.f32 %v611, 0.5
      %v644 = vadd.f32 %v612, 0.5
      %v645 = vadd.f32 %v613, 0.5
      %v646 = vadd.f32 %v614, 0.5
      %v647 = vadd.f32 %v615, 0.5
      %v648 = vadd.f32 %v616, 0.5
      %v649 = vadd.f32 %v617, 0.5
      %v650 = vadd.f32 %v618, 0.5
      %v651 = vadd.f32 %v619, 0.5
      %v652 = vadd.f32 %v620, 0.5
      %v653 = vadd.f32 %v621, 0.5
      %v654 = vadd.f32 %v622, 0.5
      %v655 = vadd.f32 %v623, 0.5
      %v656 = vadd.f32 %v624, 0.5
      %v657 = vadd.f32 %v625, 0.5
      %v658 = vadd.f32 %v626, 0.5
      %v659 = vadd.f32 %v627, 0.5
      %v660 = vmul.f32 %v374, %v628
      %v661 = vmul.f32 %v379, %v629
      %v662 = vmul.f32 %v384, %v630
      %v663 = vmul.f32 %v389, %v631
      %v664 = vmul.f32 %v394, %v632
      %v665 = vmul.f32 %v399, %v633
      %v666 = vmul.f32 %v404, %v634
      %v667 = vmul.f32 %v409, %v635
      %v668 = vmul.f32 %v414, %v636
      %v669 = vmul.f32 %v419, %v637
      %v670 = vmul.f32 %v424, %v638
      %v671 = vmul.f32 %v429, %v639
      %v672 = vmul.f32 %v434, %v640
      %v673 = vmul.f32 %v439, %v641
      %v674 = vmul.f32 %v444, %v642
      %v675 = vmul.f32 %v449, %v643
      %v676 = vmul.f32 %v454, %v644
      %v677 = vmul.f32 %v459, %v645
      %v678 = vmul.f32 %v464, %v646
      %v679 = vmul.f32 %v469, %v647
      %v680 = vmul.f32 %v474, %v648
      %v681 = vmul.f32 %v479, %v649
      %v682 = vmul.f32 %v484, %v650
      %v683 = vmul.f32 %v489, %v651
      %v684 = vmul.f32 %v494, %v652
      %v685 = vmul.f32 %v499, %v653
      %v686 = vmul.f32 %v504, %v654
      %v687 = vmul.f32 %v509, %v655
      %v688 = vmul.f32 %v514, %v656
      %v689 = vmul.f32 %v519, %v657
      %v690 = vmul.f32 %v524, %v658
      %v691 = vmul.f32 %v529, %v659
      %v692 = vld [vmem:[%s3] sm:$0xff]
      %v693 = vld [vmem:[%s3 + $0x8] sm:$0xff]
      %v694 = vld [vmem:[%s3 + $0x10] sm:$0xff]
      %v695 = vld [vmem:[%s3 + $0x18] sm:$0xff]
      %v696 = vld [vmem:[%s3 + $0x20] sm:$0xff]
      %v697 = vld [vmem:[%s3 + $0x28] sm:$0xff]
      %v698 = vld [vmem:[%s3 + $0x30] sm:$0xff]
      %v699 = vld [vmem:[%s3 + $0x38] sm:$0xff]
      %v700 = vld [vmem:[%s3 + $0x40] sm:$0xff]
      %v701 = vld [vmem:[%s3 + $0x48] sm:$0xff]
      %v702 = vld [vmem:[%s3 + $0x50] sm:$0xff]
      %v703 = vld [vmem:[%s3 + $0x58] sm:$0xff]
      %v704 = vld [vmem:[%s3 + $0x60] sm:$0xff]
      %v705 = vld [vmem:[%s3 + $0x68] sm:$0xff]
      %v706 = vld [vmem:[%s3 + $0x70] sm:$0xff]
      %v707 = vld [vmem:[%s3 + $0x78] sm:$0xff]
      %v708 = vld [vmem:[%s4] sm:$0x1]
      %v710 = vlaneseq
      %v711 = vshrl.u32 %v710, 7
      %v712 = vsub.s32 0, %v711
      %v713 = vrot.slane %v708, %v712
      %715 = vmatprep.subr.mxu0 0.0
      %716 = vmatpush1.msra.mxu0 %v692
      %717 = vmatprep.subr.mxu0 0.0
      %718 = vmatpush1.msra.mxu0 %v693
      %719 = vmatprep.subr.mxu0 0.0
      %720 = vmatpush1.msra.mxu0 %v694
      %721 = vmatprep.subr.mxu0 0.0
      %722 = vmatpush1.msra.mxu0 %v695
      %723 = vmatprep.subr.mxu0 0.0
      %724 = vmatpush1.msra.mxu0 %v696
      %725 = vmatprep.subr.mxu0 0.0
      %726 = vmatpush1.msra.mxu0 %v697
      %727 = vmatprep.subr.mxu0 0.0
      %728 = vmatpush1.msra.mxu0 %v698
      %729 = vmatprep.subr.mxu0 0.0
      %730 = vmatpush1.msra.mxu0 %v699
      %731 = vmatprep.subr.mxu0 0.0
      %732 = vmatpush1.msra.mxu0 %v700
      %733 = vmatprep.subr.mxu0 0.0
      %734 = vmatpush1.msra.mxu0 %v701
      %735 = vmatprep.subr.mxu0 0.0
      %736 = vmatpush1.msra.mxu0 %v702
      %737 = vmatprep.subr.mxu0 0.0
      %738 = vmatpush1.msra.mxu0 %v703
      %739 = vmatprep.subr.mxu0 0.0
      %740 = vmatpush1.msra.mxu0 %v704
      %741 = vmatprep.subr.mxu0 0.0
      %742 = vmatpush1.msra.mxu0 %v705
      %743 = vmatprep.subr.mxu0 0.0
      %744 = vmatpush1.msra.mxu0 %v706
      %745 = vmatprep.subr.mxu0 0.0
      %746 = vmatpush1.msra.mxu0 %v707
      %747 = vmatprep.subr.mxu0 0.0
      %748 = vmatpush1.msra.mxu0 0.0
      %749 = vmatprep.subr.mxu0 0.0
      %750 = vmatpush1.msra.mxu0 0.0
      %751 = vmatprep.subr.mxu0 0.0
      %752 = vmatpush1.msra.mxu0 0.0
      %753 = vmatprep.subr.mxu0 0.0
      %754 = vmatpush1.msra.mxu0 0.0
      %755 = vmatprep.subr.mxu0 0.0
      %756 = vmatpush1.msra.mxu0 0.0
      %757 = vmatprep.subr.mxu0 0.0
      %758 = vmatpush1.msra.mxu0 0.0
      %759 = vmatprep.subr.mxu0 0.0
      %760 = vmatpush1.msra.mxu0 0.0
      %761 = vmatprep.subr.mxu0 0.0
      %762 = vmatpush1.msra.mxu0 0.0
      %763 = vmatprep.subr.mxu0 0.0
      %764 = vmatpush1.msra.mxu0 0.0
      %765 = vmatprep.subr.mxu0 0.0
      %766 = vmatpush1.msra.mxu0 0.0
      %767 = vmatprep.subr.mxu0 0.0
      %768 = vmatpush1.msra.mxu0 0.0
      %769 = vmatprep.subr.mxu0 0.0
      %770 = vmatpush1.msra.mxu0 0.0
      %771 = vmatprep.subr.mxu0 0.0
      %772 = vmatpush1.msra.mxu0 0.0
      %773 = vmatprep.subr.mxu0 0.0
      %774 = vmatpush1.msra.mxu0 0.0
      %775 = vmatprep.subr.mxu0 0.0
      %776 = vmatpush1.msra.mxu0 0.0
      %777 = vmatprep.subr.mxu0 0.0
      %778 = vmatpush1.msra.mxu0 0.0
      %779 = vmatprep.mubr.f32.mxu0 0.0
      %780 = vmatmul.mubr.f32.gmra.mrb[0].mxu0 %v660
      %v781 = vpop.f32.mrb[0].mxu0
      %v782 = vadd.f32 %v713, %v781
      %v783 = vpop.f32.mrb[0].mxu0
      %784 = vmatprep.mubr.f32.mxu0 0.0
      %785 = vmatmul.mubr.f32.gmra.mrb[0].mxu0 %v661
      %v786 = vpop.f32.mrb[0].mxu0
      %v787 = vadd.f32 %v713, %v786
      %v788 = vpop.f32.mrb[0].mxu0
      %789 = vmatprep.mubr.f32.mxu0 0.0
      %790 = vmatmul.mubr.f32.gmra.mrb[0].mxu0 %v662
      %v791 = vpop.f32.mrb[0].mxu0
      %v792 = vadd.f32 %v713, %v791
      %v793 = vpop.f32.mrb[0].mxu0
      %794 = vmatprep.mubr.f32.mxu0 0.0
      %795 = vmatmul.mubr.f32.gmra.mrb[0].mxu0 %v663
      %v796 = vpop.f32.mrb[0].mxu0
      %v797 = vadd.f32 %v713, %v796
      %v798 = vpop.f32.mrb[0].mxu0
      %799 = vmatprep.mubr.f32.mxu0 0.0
      %800 = vmatmul.mubr.f32.gmra.mrb[0].mxu0 %v664
      %v801 = vpop.f32.mrb[0].mxu0
      %v802 = vadd.f32 %v713, %v801
      %v803 = vpop.f32.mrb[0].mxu0
      %804 = vmatprep.mubr.f32.mxu0 0.0
      %805 = vmatmul.mubr.f32.gmra.mrb[0].mxu0 %v665
      %v806 = vpop.f32.mrb[0].mxu0
      %v807 = vadd.f32 %v713, %v806
      %v808 = vpop.f32.mrb[0].mxu0
      %809 = vmatprep.mubr.f32.mxu0 0.0
      %810 = vmatmul.mubr.f32.gmra.mrb[0].mxu0 %v666
      %v811 = vpop.f32.mrb[0].mxu0
      %v812 = vadd.f32 %v713, %v811
      %v813 = vpop.f32.mrb[0].mxu0
      %814 = vmatprep.mubr.f32.mxu0 0.0
      %815 = vmatmul.mubr.f32.gmra.mrb[0].mxu0 %v667
      %v816 = vpop.f32.mrb[0].mxu0
      %v817 = vadd.f32 %v713, %v816
      %v818 = vpop.f32.mrb[0].mxu0
      %819 = vmatprep.mubr.f32.mxu0 0.0
      %820 = vmatmul.mubr.f32.gmra.mrb[0].mxu0 %v668
      %v821 = vpop.f32.mrb[0].mxu0
      %v822 = vadd.f32 %v713, %v821
      %v823 = vpop.f32.mrb[0].mxu0
      %824 = vmatprep.mubr.f32.mxu0 0.0
      %825 = vmatmul.mubr.f32.gmra.mrb[0].mxu0 %v669
      %v826 = vpop.f32.mrb[0].mxu0
      %v827 = vadd.f32 %v713, %v826
      %v828 = vpop.f32.mrb[0].mxu0
      %829 = vmatprep.mubr.f32.mxu0 0.0
      %830 = vmatmul.mubr.f32.gmra.mrb[0].mxu0 %v670
      %v831 = vpop.f32.mrb[0].mxu0
      %v832 = vadd.f32 %v713, %v831
      %v833 = vpop.f32.mrb[0].mxu0
      %834 = vmatprep.mubr.f32.mxu0 0.0
      %835 = vmatmul.mubr.f32.gmra.mrb[0].mxu0 %v671
      %v836 = vpop.f32.mrb[0].mxu0
      %v837 = vadd.f32 %v713, %v836
      %v838 = vpop.f32.mrb[0].mxu0
      %839 = vmatprep.mubr.f32.mxu0 0.0
      %840 = vmatmul.mubr.f32.gmra.mrb[0].mxu0 %v672
      %v841 = vpop.f32.mrb[0].mxu0
      %v842 = vadd.f32 %v713, %v841
      %v843 = vpop.f32.mrb[0].mxu0
      %844 = vmatprep.mubr.f32.mxu0 0.0
      %845 = vmatmul.mubr.f32.gmra.mrb[0].mxu0 %v673
      %v846 = vpop.f32.mrb[0].mxu0
      %v847 = vadd.f32 %v713, %v846
      %v848 = vpop.f32.mrb[0].mxu0
      %849 = vmatprep.mubr.f32.mxu0 0.0
      %850 = vmatmul.mubr.f32.gmra.mrb[0].mxu0 %v674
      %v851 = vpop.f32.mrb[0].mxu0
      %v852 = vadd.f32 %v713, %v851
      %v853 = vpop.f32.mrb[0].mxu0
      %854 = vmatprep.mubr.f32.mxu0 0.0
      %855 = vmatmul.mubr.f32.gmra.mrb[0].mxu0 %v675
      %v856 = vpop.f32.mrb[0].mxu0
      %v857 = vadd.f32 %v713, %v856
      %v858 = vpop.f32.mrb[0].mxu0
      %859 = vmatprep.mubr.f32.mxu0 0.0
      %860 = vmatmul.mubr.f32.gmra.mrb[0].mxu0 %v676
      %v861 = vpop.f32.mrb[0].mxu0
      %v862 = vadd.f32 %v713, %v861
      %v863 = vpop.f32.mrb[0].mxu0
      %864 = vmatprep.mubr.f32.mxu0 0.0
      %865 = vmatmul.mubr.f32.gmra.mrb[0].mxu0 %v677
      %v866 = vpop.f32.mrb[0].mxu0
      %v867 = vadd.f32 %v713, %v866
      %v868 = vpop.f32.mrb[0].mxu0
      %869 = vmatprep.mubr.f32.mxu0 0.0
      %870 = vmatmul.mubr.f32.gmra.mrb[0].mxu0 %v678
      %v871 = vpop.f32.mrb[0].mxu0
      %v872 = vadd.f32 %v713, %v871
      %v873 = vpop.f32.mrb[0].mxu0
      %874 = vmatprep.mubr.f32.mxu0 0.0
      %875 = vmatmul.mubr.f32.gmra.mrb[0].mxu0 %v679
      %v876 = vpop.f32.mrb[0].mxu0
      %v877 = vadd.f32 %v713, %v876
      %v878 = vpop.f32.mrb[0].mxu0
      %879 = vmatprep.mubr.f32.mxu0 0.0
      %880 = vmatmul.mubr.f32.gmra.mrb[0].mxu0 %v680
      %v881 = vpop.f32.mrb[0].mxu0
      %v882 = vadd.f32 %v713, %v881
      %v883 = vpop.f32.mrb[0].mxu0
      %884 = vmatprep.mubr.f32.mxu0 0.0
      %885 = vmatmul.mubr.f32.gmra.mrb[0].mxu0 %v681
      %v886 = vpop.f32.mrb[0].mxu0
      %v887 = vadd.f32 %v713, %v886
      %v888 = vpop.f32.mrb[0].mxu0
      %889 = vmatprep.mubr.f32.mxu0 0.0
      %890 = vmatmul.mubr.f32.gmra.mrb[0].mxu0 %v682
      %v891 = vpop.f32.mrb[0].mxu0
      %v892 = vadd.f32 %v713, %v891
      %v893 = vpop.f32.mrb[0].mxu0
      %894 = vmatprep.mubr.f32.mxu0 0.0
      %895 = vmatmul.mubr.f32.gmra.mrb[0].mxu0 %v683
      %v896 = vpop.f32.mrb[0].mxu0
      %v897 = vadd.f32 %v713, %v896
      %v898 = vpop.f32.mrb[0].mxu0
      %899 = vmatprep.mubr.f32.mxu0 0.0
      %900 = vmatmul.mubr.f32.gmra.mrb[0].mxu0 %v684
      %v901 = vpop.f32.mrb[0].mxu0
      %v902 = vadd.f32 %v713, %v901
      %v903 = vpop.f32.mrb[0].mxu0
      %904 = vmatprep.mubr.f32.mxu0 0.0
      %905 = vmatmul.mubr.f32.gmra.mrb[0].mxu0 %v685
      %v906 = vpop.f32.mrb[0].mxu0
      %v907 = vadd.f32 %v713, %v906
      %v908 = vpop.f32.mrb[0].mxu0
      %909 = vmatprep.mubr.f32.mxu0 0.0
      %910 = vmatmul.mubr.f32.gmra.mrb[0].mxu0 %v686
      %v911 = vpop.f32.mrb[0].mxu0
      %v912 = vadd.f32 %v713, %v911
      %v913 = vpop.f32.mrb[0].mxu0
      %914 = vmatprep.mubr.f32.mxu0 0.0
      %915 = vmatmul.mubr.f32.gmra.mrb[0].mxu0 %v687
      %v916 = vpop.f32.mrb[0].mxu0
      %v917 = vadd.f32 %v713, %v916
      %v918 = vpop.f32.mrb[0].mxu0
      %919 = vmatprep.mubr.f32.mxu0 0.0
      %920 = vmatmul.mubr.f32.gmra.mrb[0].mxu0 %v688
      %v921 = vpop.f32.mrb[0].mxu0
      %v922 = vadd.f32 %v713, %v921
      %v923 = vpop.f32.mrb[0].mxu0
      %924 = vmatprep.mubr.f32.mxu0 0.0
      %925 = vmatmul.mubr.f32.gmra.mrb[0].mxu0 %v689
      %v926 = vpop.f32.mrb[0].mxu0
      %v927 = vadd.f32 %v713, %v926
      %v928 = vpop.f32.mrb[0].mxu0
      %929 = vmatprep.mubr.f32.mxu0 0.0
      %930 = vmatmul.mubr.f32.gmra.mrb[0].mxu0 %v690
      %v931 = vpop.f32.mrb[0].mxu0
      %v932 = vadd.f32 %v713, %v931
      %v933 = vpop.f32.mrb[0].mxu0
      %934 = vmatprep.mubr.f32.mxu0 0.0
      %935 = vmatmul.mubr.f32.gmra.mrb[0].mxu0 %v691
      %v936 = vpop.f32.mrb[0].mxu0
      %v937 = vadd.f32 %v713, %v936
      %v938 = vpop.f32.mrb[0].mxu0
      %939 = vdwg.mxu0
      %940 = vst [vmem:[#allocation3] sm:$0xff] %v782
      %941 = vst [vmem:[#allocation3 + $0x8] sm:$0xff] %v787
      %942 = vst [vmem:[#allocation3 + $0x10] sm:$0xff] %v792
      %943 = vst [vmem:[#allocation3 + $0x18] sm:$0xff] %v797
      %944 = vst [vmem:[#allocation3 + $0x20] sm:$0xff] %v802
      %945 = vst [vmem:[#allocation3 + $0x28] sm:$0xff] %v807
      %946 = vst [vmem:[#allocation3 + $0x30] sm:$0xff] %v812
      %947 = vst [vmem:[#allocation3 + $0x38] sm:$0xff] %v817
      %948 = vst [vmem:[#allocation3 + $0x40] sm:$0xff] %v822
      %949 = vst [vmem:[#allocation3 + $0x48] sm:$0xff] %v827
      %950 = vst [vmem:[#allocation3 + $0x50] sm:$0xff] %v832
      %951 = vst [vmem:[#allocation3 + $0x58] sm:$0xff] %v837
      %952 = vst [vmem:[#allocation3 + $0x60] sm:$0xff] %v842
      %953 = vst [vmem:[#allocation3 + $0x68] sm:$0xff] %v847
      %954 = vst [vmem:[#allocation3 + $0x70] sm:$0xff] %v852
      %955 = vst [vmem:[#allocation3 + $0x78] sm:$0xff] %v857
      %956 = vst [vmem:[#allocation3 + $0x80] sm:$0xff] %v862
      %957 = vst [vmem:[#allocation3 + $0x88] sm:$0xff] %v867
      %958 = vst [vmem:[#allocation3 + $0x90] sm:$0xff] %v872
      %959 = vst [vmem:[#allocation3 + $0x98] sm:$0xff] %v877
      %960 = vst [vmem:[#allocation3 + $0xa0] sm:$0xff] %v882
      %961 = vst [vmem:[#allocation3 + $0xa8] sm:$0xff] %v887
      %962 = vst [vmem:[#allocation3 + $0xb0] sm:$0xff] %v892
      %963 = vst [vmem:[#allocation3 + $0xb8] sm:$0xff] %v897
      %964 = vst [vmem:[#allocation3 + $0xc0] sm:$0xff] %v902
      %965 = vst [vmem:[#allocation3 + $0xc8] sm:$0xff] %v907
      %966 = vst [vmem:[#allocation3 + $0xd0] sm:$0xff] %v912
      %967 = vst [vmem:[#allocation3 + $0xd8] sm:$0xff] %v917
      %968 = vst [vmem:[#allocation3 + $0xe0] sm:$0xff] %v922
      %969 = vst [vmem:[#allocation3 + $0xe8] sm:$0xff] %v927
      %970 = vst [vmem:[#allocation3 + $0xf0] sm:$0xff] %v932
      %971 = vst [vmem:[#allocation3 + $0xf8] sm:$0xff] %v937
      %972 = vst [vmem:[#allocation2] sm:$0xff] -inf
      %973 = vst [vmem:[#allocation2 + $0x8] sm:$0xff] -inf
      %974 = vst [vmem:[#allocation2 + $0x10] sm:$0xff] -inf
      %975 = vst [vmem:[#allocation2 + $0x18] sm:$0xff] -inf
      %s976 = scalar_lea.vmem [#allocation2], 288
      %977 = vst [vmem:[%s976] sm:$0xff] -inf
      %978 = vst [vmem:[%s976 + $0x8] sm:$0xff] -inf
      %979 = vst [vmem:[%s976 + $0x10] sm:$0xff] -inf
      %980 = vst [vmem:[%s976 + $0x18] sm:$0xff] -inf
      %s981 = scalar_lea.vmem [#allocation2], 32
      %982 = vst [vmem:[%s981] sm:$0xff] %v660
      %983 = vst [vmem:[%s981 + $0x8] sm:$0xff] %v661
      %984 = vst [vmem:[%s981 + $0x10] sm:$0xff] %v662
      %985 = vst [vmem:[%s981 + $0x18] sm:$0xff] %v663
      %986 = vst [vmem:[%s981 + $0x20] sm:$0xff] %v664
      %987 = vst [vmem:[%s981 + $0x28] sm:$0xff] %v665
      %988 = vst [vmem:[%s981 + $0x30] sm:$0xff] %v666
      %989 = vst [vmem:[%s981 + $0x38] sm:$0xff] %v667
      %990 = vst [vmem:[%s981 + $0x40] sm:$0xff] %v668
      %991 = vst [vmem:[%s981 + $0x48] sm:$0xff] %v669
      %992 = vst [vmem:[%s981 + $0x50] sm:$0xff] %v670
      %993 = vst [vmem:[%s981 + $0x58] sm:$0xff] %v671
      %994 = vst [vmem:[%s981 + $0x60] sm:$0xff] %v672
      %995 = vst [vmem:[%s981 + $0x68] sm:$0xff] %v673
      %996 = vst [vmem:[%s981 + $0x70] sm:$0xff] %v674
      %997 = vst [vmem:[%s981 + $0x78] sm:$0xff] %v675
      %998 = vst [vmem:[%s981 + $0x80] sm:$0xff] %v676
      %999 = vst [vmem:[%s981 + $0x88] sm:$0xff] %v677
      %1000 = vst [vmem:[%s981 + $0x90] sm:$0xff] %v678
      %1001 = vst [vmem:[%s981 + $0x98] sm:$0xff] %v679
      %1002 = vst [vmem:[%s981 + $0xa0] sm:$0xff] %v680
      %1003 = vst [vmem:[%s981 + $0xa8] sm:$0xff] %v681
      %1004 = vst [vmem:[%s981 + $0xb0] sm:$0xff] %v682
      %1005 = vst [vmem:[%s981 + $0xb8] sm:$0xff] %v683
      %1006 = vst [vmem:[%s981 + $0xc0] sm:$0xff] %v684
      %1007 = vst [vmem:[%s981 + $0xc8] sm:$0xff] %v685
      %1008 = vst [vmem:[%s981 + $0xd0] sm:$0xff] %v686
      %1009 = vst [vmem:[%s981 + $0xd8] sm:$0xff] %v687
      %1010 = vst [vmem:[%s981 + $0xe0] sm:$0xff] %v688
      %1011 = vst [vmem:[%s981 + $0xe8] sm:$0xff] %v689
      %1012 = vst [vmem:[%s981 + $0xf0] sm:$0xff] %v690
      %1013 = vst [vmem:[%s981 + $0xf8] sm:$0xff] %v691
      %v1014 = vld [vmem:[#allocation2] sm:$0xff]
      %v1015 = vld [vmem:[#allocation2 + $0x8] sm:$0xff]
      %v1016 = vld [vmem:[#allocation2 + $0x10] sm:$0xff]
      %v1017 = vld [vmem:[#allocation2 + $0x18] sm:$0xff]
      %v1018 = vld [vmem:[#allocation2 + $0x20] sm:$0xff]
      %v1019 = vld [vmem:[#allocation2 + $0x28] sm:$0xff]
      %v1020 = vld [vmem:[#allocation2 + $0x30] sm:$0xff]
      %v1021 = vld [vmem:[#allocation2 + $0x38] sm:$0xff]
      %v1022 = vld [vmem:[#allocation2 + $0x40] sm:$0xff]
      %v1023 = vld [vmem:[#allocation2 + $0x48] sm:$0xff]
      %v1024 = vld [vmem:[#allocation2 + $0x50] sm:$0xff]
      %v1025 = vld [vmem:[#allocation2 + $0x58] sm:$0xff]
      %v1026 = vld [vmem:[#allocation2 + $0x60] sm:$0xff]
      %v1027 = vld [vmem:[#allocation2 + $0x68] sm:$0xff]
      %v1028 = vld [vmem:[#allocation2 + $0x70] sm:$0xff]
      %v1029 = vld [vmem:[#allocation2 + $0x78] sm:$0xff]
      %v1030 = vld [vmem:[#allocation2 + $0x80] sm:$0xff]
      %v1031 = vld [vmem:[#allocation2 + $0x88] sm:$0xff]
      %v1032 = vld [vmem:[#allocation2 + $0x90] sm:$0xff]
      %v1033 = vld [vmem:[#allocation2 + $0x98] sm:$0xff]
      %v1034 = vld [vmem:[#allocation2 + $0xa0] sm:$0xff]
      %v1035 = vld [vmem:[#allocation2 + $0xa8] sm:$0xff]
      %v1036 = vld [vmem:[#allocation2 + $0xb0] sm:$0xff]
      %v1037 = vld [vmem:[#allocation2 + $0xb8] sm:$0xff]
      %v1038 = vld [vmem:[#allocation2 + $0xc0] sm:$0xff]
      %v1039 = vld [vmem:[#allocation2 + $0xc8] sm:$0xff]
      %v1040 = vld [vmem:[#allocation2 + $0xd0] sm:$0xff]
      %v1041 = vld [vmem:[#allocation2 + $0xd8] sm:$0xff]
      %v1042 = vld [vmem:[#allocation2 + $0xe0] sm:$0xff]
      %v1043 = vld [vmem:[#allocation2 + $0xe8] sm:$0xff]
      %v1044 = vld [vmem:[#allocation2 + $0xf0] sm:$0xff]
      %v1045 = vld [vmem:[#allocation2 + $0xf8] sm:$0xff]
      %s1046 = scalar_lea.vmem [#allocation2], 16
      %v1047 = vld [vmem:[%s1046] sm:$0xff]
      %v1048 = vld [vmem:[%s1046 + $0x8] sm:$0xff]
      %v1049 = vld [vmem:[%s1046 + $0x10] sm:$0xff]
      %v1050 = vld [vmem:[%s1046 + $0x18] sm:$0xff]
      %v1051 = vld [vmem:[%s1046 + $0x20] sm:$0xff]
      %v1052 = vld [vmem:[%s1046 + $0x28] sm:$0xff]
      %v1053 = vld [vmem:[%s1046 + $0x30] sm:$0xff]
      %v1054 = vld [vmem:[%s1046 + $0x38] sm:$0xff]
      %v1055 = vld [vmem:[%s1046 + $0x40] sm:$0xff]
      %v1056 = vld [vmem:[%s1046 + $0x48] sm:$0xff]
      %v1057 = vld [vmem:[%s1046 + $0x50] sm:$0xff]
      %v1058 = vld [vmem:[%s1046 + $0x58] sm:$0xff]
      %v1059 = vld [vmem:[%s1046 + $0x60] sm:$0xff]
      %v1060 = vld [vmem:[%s1046 + $0x68] sm:$0xff]
      %v1061 = vld [vmem:[%s1046 + $0x70] sm:$0xff]
      %v1062 = vld [vmem:[%s1046 + $0x78] sm:$0xff]
      %v1063 = vld [vmem:[%s1046 + $0x80] sm:$0xff]
      %v1064 = vld [vmem:[%s1046 + $0x88] sm:$0xff]
      %v1065 = vld [vmem:[%s1046 + $0x90] sm:$0xff]
      %v1066 = vld [vmem:[%s1046 + $0x98] sm:$0xff]
      %v1067 = vld [vmem:[%s1046 + $0xa0] sm:$0xff]
      %v1068 = vld [vmem:[%s1046 + $0xa8] sm:$0xff]
      %v1069 = vld [vmem:[%s1046 + $0xb0] sm:$0xff]
      %v1070 = vld [vmem:[%s1046 + $0xb8] sm:$0xff]
      %v1071 = vld [vmem:[%s1046 + $0xc0] sm:$0xff]
      %v1072 = vld [vmem:[%s1046 + $0xc8] sm:$0xff]
      %v1073 = vld [vmem:[%s1046 + $0xd0] sm:$0xff]
      %v1074 = vld [vmem:[%s1046 + $0xd8] sm:$0xff]
      %v1075 = vld [vmem:[%s1046 + $0xe0] sm:$0xff]
      %v1076 = vld [vmem:[%s1046 + $0xe8] sm:$0xff]
      %v1077 = vld [vmem:[%s1046 + $0xf0] sm:$0xff]
      %v1078 = vld [vmem:[%s1046 + $0xf8] sm:$0xff]
      %v1079 = vmax.f32 %v1014, %v1047
      %v1080 = vmax.f32 %v1015, %v1048
      %v1081 = vmax.f32 %v1016, %v1049
      %v1082 = vmax.f32 %v1017, %v1050
      %v1083 = vmax.f32 %v1018, %v1051
      %v1084 = vmax.f32 %v1019, %v1052
      %v1085 = vmax.f32 %v1020, %v1053
      %v1086 = vmax.f32 %v1021, %v1054
      %v1087 = vmax.f32 %v1022, %v1055
      %v1088 = vmax.f32 %v1023, %v1056
      %v1089 = vmax.f32 %v1024, %v1057
      %v1090 = vmax.f32 %v1025, %v1058
      %v1091 = vmax.f32 %v1026, %v1059
      %v1092 = vmax.f32 %v1027, %v1060
      %v1093 = vmax.f32 %v1028, %v1061
      %v1094 = vmax.f32 %v1029, %v1062
      %v1095 = vmax.f32 %v1030, %v1063
      %v1096 = vmax.f32 %v1031, %v1064
      %v1097 = vmax.f32 %v1032, %v1065
      %v1098 = vmax.f32 %v1033, %v1066
      %v1099 = vmax.f32 %v1034, %v1067
      %v1100 = vmax.f32 %v1035, %v1068
      %v1101 = vmax.f32 %v1036, %v1069
      %v1102 = vmax.f32 %v1037, %v1070
      %v1103 = vmax.f32 %v1038, %v1071
      %v1104 = vmax.f32 %v1039, %v1072
      %v1105 = vmax.f32 %v1040, %v1073
      %v1106 = vmax.f32 %v1041, %v1074
      %v1107 = vmax.f32 %v1042, %v1075
      %v1108 = vmax.f32 %v1043, %v1076
      %v1109 = vmax.f32 %v1044, %v1077
      %v1110 = vmax.f32 %v1045, %v1078
      %v1111 = vld [vmem:[%s981] sm:$0xff]
      %v1112 = vld [vmem:[%s981 + $0x8] sm:$0xff]
      %v1113 = vld [vmem:[%s981 + $0x10] sm:$0xff]
      %v1114 = vld [vmem:[%s981 + $0x18] sm:$0xff]
      %v1115 = vld [vmem:[%s981 + $0x20] sm:$0xff]
      %v1116 = vld [vmem:[%s981 + $0x28] sm:$0xff]
      %v1117 = vld [vmem:[%s981 + $0x30] sm:$0xff]
      %v1118 = vld [vmem:[%s981 + $0x38] sm:$0xff]
      %v1119 = vld [vmem:[%s981 + $0x40] sm:$0xff]
      %v1120 = vld [vmem:[%s981 + $0x48] sm:$0xff]
      %v1121 = vld [vmem:[%s981 + $0x50] sm:$0xff]
      %v1122 = vld [vmem:[%s981 + $0x58] sm:$0xff]
      %v1123 = vld [vmem:[%s981 + $0x60] sm:$0xff]
      %v1124 = vld [vmem:[%s981 + $0x68] sm:$0xff]
      %v1125 = vld [vmem:[%s981 + $0x70] sm:$0xff]
      %v1126 = vld [vmem:[%s981 + $0x78] sm:$0xff]
      %v1127 = vld [vmem:[%s981 + $0x80] sm:$0xff]
      %v1128 = vld [vmem:[%s981 + $0x88] sm:$0xff]
      %v1129 = vld [vmem:[%s981 + $0x90] sm:$0xff]
      %v1130 = vld [vmem:[%s981 + $0x98] sm:$0xff]
      %v1131 = vld [vmem:[%s981 + $0xa0] sm:$0xff]
      %v1132 = vld [vmem:[%s981 + $0xa8] sm:$0xff]
      %v1133 = vld [vmem:[%s981 + $0xb0] sm:$0xff]
      %v1134 = vld [vmem:[%s981 + $0xb8] sm:$0xff]
      %v1135 = vld [vmem:[%s981 + $0xc0] sm:$0xff]
      %v1136 = vld [vmem:[%s981 + $0xc8] sm:$0xff]
      %v1137 = vld [vmem:[%s981 + $0xd0] sm:$0xff]
      %v1138 = vld [vmem:[%s981 + $0xd8] sm:$0xff]
      %v1139 = vld [vmem:[%s981 + $0xe0] sm:$0xff]
      %v1140 = vld [vmem:[%s981 + $0xe8] sm:$0xff]
      %v1141 = vld [vmem:[%s981 + $0xf0] sm:$0xff]
      %v1142 = vld [vmem:[%s981 + $0xf8] sm:$0xff]
      %v1143 = vmax.f32 %v1079, %v1111
      %v1144 = vmax.f32 %v1080, %v1112
      %v1145 = vmax.f32 %v1081, %v1113
      %v1146 = vmax.f32 %v1082, %v1114
      %v1147 = vmax.f32 %v1083, %v1115
      %v1148 = vmax.f32 %v1084, %v1116
      %v1149 = vmax.f32 %v1085, %v1117
      %v1150 = vmax.f32 %v1086, %v1118
      %v1151 = vmax.f32 %v1087, %v1119
      %v1152 = vmax.f32 %v1088, %v1120
      %v1153 = vmax.f32 %v1089, %v1121
      %v1154 = vmax.f32 %v1090, %v1122
      %v1155 = vmax.f32 %v1091, %v1123
      %v1156 = vmax.f32 %v1092, %v1124
      %v1157 = vmax.f32 %v1093, %v1125
      %v1158 = vmax.f32 %v1094, %v1126
      %v1159 = vmax.f32 %v1095, %v1127
      %v1160 = vmax.f32 %v1096, %v1128
      %v1161 = vmax.f32 %v1097, %v1129
      %v1162 = vmax.f32 %v1098, %v1130
      %v1163 = vmax.f32 %v1099, %v1131
      %v1164 = vmax.f32 %v1100, %v1132
      %v1165 = vmax.f32 %v1101, %v1133
      %v1166 = vmax.f32 %v1102, %v1134
      %v1167 = vmax.f32 %v1103, %v1135
      %v1168 = vmax.f32 %v1104, %v1136
      %v1169 = vmax.f32 %v1105, %v1137
      %v1170 = vmax.f32 %v1106, %v1138
      %v1171 = vmax.f32 %v1107, %v1139
      %v1172 = vmax.f32 %v1108, %v1140
      %v1173 = vmax.f32 %v1109, %v1141
      %v1174 = vmax.f32 %v1110, %v1142
      %s1175 = scalar_lea.vmem [#allocation2], 48
      %v1176 = vld [vmem:[%s1175] sm:$0xff]
      %v1177 = vld [vmem:[%s1175 + $0x8] sm:$0xff]
      %v1178 = vld [vmem:[%s1175 + $0x10] sm:$0xff]
      %v1179 = vld [vmem:[%s1175 + $0x18] sm:$0xff]
      %v1180 = vld [vmem:[%s1175 + $0x20] sm:$0xff]
      %v1181 = vld [vmem:[%s1175 + $0x28] sm:$0xff]
      %v1182 = vld [vmem:[%s1175 + $0x30] sm:$0xff]
      %v1183 = vld [vmem:[%s1175 + $0x38] sm:$0xff]
      %v1184 = vld [vmem:[%s1175 + $0x40] sm:$0xff]
      %v1185 = vld [vmem:[%s1175 + $0x48] sm:$0xff]
      %v1186 = vld [vmem:[%s1175 + $0x50] sm:$0xff]
      %v1187 = vld [vmem:[%s1175 + $0x58] sm:$0xff]
      %v1188 = vld [vmem:[%s1175 + $0x60] sm:$0xff]
      %v1189 = vld [vmem:[%s1175 + $0x68] sm:$0xff]
      %v1190 = vld [vmem:[%s1175 + $0x70] sm:$0xff]
      %v1191 = vld [vmem:[%s1175 + $0x78] sm:$0xff]
      %v1192 = vld [vmem:[%s1175 + $0x80] sm:$0xff]
      %v1193 = vld [vmem:[%s1175 + $0x88] sm:$0xff]
      %v1194 = vld [vmem:[%s1175 + $0x90] sm:$0xff]
      %v1195 = vld [vmem:[%s1175 + $0x98] sm:$0xff]
      %v1196 = vld [vmem:[%s1175 + $0xa0] sm:$0xff]
      %v1197 = vld [vmem:[%s1175 + $0xa8] sm:$0xff]
      %v1198 = vld [vmem:[%s1175 + $0xb0] sm:$0xff]
      %v1199 = vld [vmem:[%s1175 + $0xb8] sm:$0xff]
      %v1200 = vld [vmem:[%s1175 + $0xc0] sm:$0xff]
      %v1201 = vld [vmem:[%s1175 + $0xc8] sm:$0xff]
      %v1202 = vld [vmem:[%s1175 + $0xd0] sm:$0xff]
      %v1203 = vld [vmem:[%s1175 + $0xd8] sm:$0xff]
      %v1204 = vld [vmem:[%s1175 + $0xe0] sm:$0xff]
      %v1205 = vld [vmem:[%s1175 + $0xe8] sm:$0xff]
      %v1206 = vld [vmem:[%s1175 + $0xf0] sm:$0xff]
      %v1207 = vld [vmem:[%s1175 + $0xf8] sm:$0xff]
      %v1208 = vmax.f32 %v1143, %v1176
      %v1209 = vmax.f32 %v1144, %v1177
      %v1210 = vmax.f32 %v1145, %v1178
      %v1211 = vmax.f32 %v1146, %v1179
      %v1212 = vmax.f32 %v1147, %v1180
      %v1213 = vmax.f32 %v1148, %v1181
      %v1214 = vmax.f32 %v1149, %v1182
      %v1215 = vmax.f32 %v1150, %v1183
      %v1216 = vmax.f32 %v1151, %v1184
      %v1217 = vmax.f32 %v1152, %v1185
      %v1218 = vmax.f32 %v1153, %v1186
      %v1219 = vmax.f32 %v1154, %v1187
      %v1220 = vmax.f32 %v1155, %v1188
      %v1221 = vmax.f32 %v1156, %v1189
      %v1222 = vmax.f32 %v1157, %v1190
      %v1223 = vmax.f32 %v1158, %v1191
      %v1224 = vmax.f32 %v1159, %v1192
      %v1225 = vmax.f32 %v1160, %v1193
      %v1226 = vmax.f32 %v1161, %v1194
      %v1227 = vmax.f32 %v1162, %v1195
      %v1228 = vmax.f32 %v1163, %v1196
      %v1229 = vmax.f32 %v1164, %v1197
      %v1230 = vmax.f32 %v1165, %v1198
      %v1231 = vmax.f32 %v1166, %v1199
      %v1232 = vmax.f32 %v1167, %v1200
      %v1233 = vmax.f32 %v1168, %v1201
      %v1234 = vmax.f32 %v1169, %v1202
      %v1235 = vmax.f32 %v1170, %v1203
      %v1236 = vmax.f32 %v1171, %v1204
      %v1237 = vmax.f32 %v1172, %v1205
      %v1238 = vmax.f32 %v1173, %v1206
      %v1239 = vmax.f32 %v1174, %v1207
      %s1240 = scalar_lea.vmem [#allocation2], 64
      %v1241 = vld [vmem:[%s1240] sm:$0xff]
      %v1242 = vld [vmem:[%s1240 + $0x8] sm:$0xff]
      %v1243 = vld [vmem:[%s1240 + $0x10] sm:$0xff]
      %v1244 = vld [vmem:[%s1240 + $0x18] sm:$0xff]
      %v1245 = vld [vmem:[%s1240 + $0x20] sm:$0xff]
      %v1246 = vld [vmem:[%s1240 + $0x28] sm:$0xff]
      %v1247 = vld [vmem:[%s1240 + $0x30] sm:$0xff]
      %v1248 = vld [vmem:[%s1240 + $0x38] sm:$0xff]
      %v1249 = vld [vmem:[%s1240 + $0x40] sm:$0xff]
      %v1250 = vld [vmem:[%s1240 + $0x48] sm:$0xff]
      %v1251 = vld [vmem:[%s1240 + $0x50] sm:$0xff]
      %v1252 = vld [vmem:[%s1240 + $0x58] sm:$0xff]
      %v1253 = vld [vmem:[%s1240 + $0x60] sm:$0xff]
      %v1254 = vld [vmem:[%s1240 + $0x68] sm:$0xff]
      %v1255 = vld [vmem:[%s1240 + $0x70] sm:$0xff]
      %v1256 = vld [vmem:[%s1240 + $0x78] sm:$0xff]
      %v1257 = vld [vmem:[%s1240 + $0x80] sm:$0xff]
      %v1258 = vld [vmem:[%s1240 + $0x88] sm:$0xff]
      %v1259 = vld [vmem:[%s1240 + $0x90] sm:$0xff]
      %v1260 = vld [vmem:[%s1240 + $0x98] sm:$0xff]
      %v1261 = vld [vmem:[%s1240 + $0xa0] sm:$0xff]
      %v1262 = vld [vmem:[%s1240 + $0xa8] sm:$0xff]
      %v1263 = vld [vmem:[%s1240 + $0xb0] sm:$0xff]
      %v1264 = vld [vmem:[%s1240 + $0xb8] sm:$0xff]
      %v1265 = vld [vmem:[%s1240 + $0xc0] sm:$0xff]
      %v1266 = vld [vmem:[%s1240 + $0xc8] sm:$0xff]
      %v1267 = vld [vmem:[%s1240 + $0xd0] sm:$0xff]
      %v1268 = vld [vmem:[%s1240 + $0xd8] sm:$0xff]
      %v1269 = vld [vmem:[%s1240 + $0xe0] sm:$0xff]
      %v1270 = vld [vmem:[%s1240 + $0xe8] sm:$0xff]
      %v1271 = vld [vmem:[%s1240 + $0xf0] sm:$0xff]
      %v1272 = vld [vmem:[%s1240 + $0xf8] sm:$0xff]
      %v1273 = vmax.f32 %v1208, %v1241
      %v1274 = vmax.f32 %v1209, %v1242
      %v1275 = vmax.f32 %v1210, %v1243
      %v1276 = vmax.f32 %v1211, %v1244
      %v1277 = vmax.f32 %v1212, %v1245
      %v1278 = vmax.f32 %v1213, %v1246
      %v1279 = vmax.f32 %v1214, %v1247
      %v1280 = vmax.f32 %v1215, %v1248
      %v1281 = vmax.f32 %v1216, %v1249
      %v1282 = vmax.f32 %v1217, %v1250
      %v1283 = vmax.f32 %v1218, %v1251
      %v1284 = vmax.f32 %v1219, %v1252
      %v1285 = vmax.f32 %v1220, %v1253
      %v1286 = vmax.f32 %v1221, %v1254
      %v1287 = vmax.f32 %v1222, %v1255
      %v1288 = vmax.f32 %v1223, %v1256
      %v1289 = vmax.f32 %v1224, %v1257
      %v1290 = vmax.f32 %v1225, %v1258
      %v1291 = vmax.f32 %v1226, %v1259
      %v1292 = vmax.f32 %v1227, %v1260
      %v1293 = vmax.f32 %v1228, %v1261
      %v1294 = vmax.f32 %v1229, %v1262
      %v1295 = vmax.f32 %v1230, %v1263
      %v1296 = vmax.f32 %v1231, %v1264
      %v1297 = vmax.f32 %v1232, %v1265
      %v1298 = vmax.f32 %v1233, %v1266
      %v1299 = vmax.f32 %v1234, %v1267
      %v1300 = vmax.f32 %v1235, %v1268
      %v1301 = vmax.f32 %v1236, %v1269
      %v1302 = vmax.f32 %v1237, %v1270
      %v1303 = vmax.f32 %v1238, %v1271
      %v1304 = vmax.f32 %v1239, %v1272
      %v1305 = vrot.slane %v1273, 1
      %v1306 = vrot.slane %v1275, 1
      %v1307 = vrot.slane %v1277, 1
      %v1308 = vrot.slane %v1279, 1
      %v1309 = vrot.slane %v1281, 1
      %v1310 = vrot.slane %v1283, 1
      %v1311 = vrot.slane %v1285, 1
      %v1312 = vrot.slane %v1287, 1
      %v1313 = vrot.slane %v1289, 1
      %v1314 = vrot.slane %v1291, 1
      %v1315 = vrot.slane %v1293, 1
      %v1316 = vrot.slane %v1295, 1
      %v1317 = vrot.slane %v1297, 1
      %v1318 = vrot.slane %v1299, 1
      %v1319 = vrot.slane %v1301, 1
      %v1320 = vrot.slane %v1303, 1
      %v1321 = vrot.slane %v1274, 1
      %v1322 = vrot.slane %v1276, 1
      %v1323 = vrot.slane %v1278, 1
      %v1324 = vrot.slane %v1280, 1
      %v1325 = vrot.slane %v1282, 1
      %v1326 = vrot.slane %v1284, 1
      %v1327 = vrot.slane %v1286, 1
      %v1328 = vrot.slane %v1288, 1
      %v1329 = vrot.slane %v1290, 1
      %v1330 = vrot.slane %v1292, 1
      %v1331 = vrot.slane %v1294, 1
      %v1332 = vrot.slane %v1296, 1
      %v1333 = vrot.slane %v1298, 1
      %v1334 = vrot.slane %v1300, 1
      %v1335 = vrot.slane %v1302, 1
      %v1336 = vrot.slane %v1304, 1
      %v1337 = vlaneseq
      %v1338 = vshrl.u32 %v1337, 7
      %vm1339 = vcmp.lt.s32.totalorder %v1338, 7
      %v1340 = vsel %vm1339, %v1305, %v1321
      %v1341 = vsel %vm1339, %v1306, %v1322
      %v1342 = vsel %vm1339, %v1307, %v1323
      %v1343 = vsel %vm1339, %v1308, %v1324
      %v1344 = vsel %vm1339, %v1309, %v1325
      %v1345 = vsel %vm1339, %v1310, %v1326
      %v1346 = vsel %vm1339, %v1311, %v1327
      %v1347 = vsel %vm1339, %v1312, %v1328
      %v1348 = vsel %vm1339, %v1313, %v1329
      %v1349 = vsel %vm1339, %v1314, %v1330
      %v1350 = vsel %vm1339, %v1315, %v1331
      %v1351 = vsel %vm1339, %v1316, %v1332
      %v1352 = vsel %vm1339, %v1317, %v1333
      %v1353 = vsel %vm1339, %v1318, %v1334
      %v1354 = vsel %vm1339, %v1319, %v1335
      %v1355 = vsel %vm1339, %v1320, %v1336
      %v1356 = vsel %vm1339, %v1321, %v1305
      %v1357 = vsel %vm1339, %v1322, %v1306
      %v1358 = vsel %vm1339, %v1323, %v1307
      %v1359 = vsel %vm1339, %v1324, %v1308
      %v1360 = vsel %vm1339, %v1325, %v1309
      %v1361 = vsel %vm1339, %v1326, %v1310
      %v1362 = vsel %vm1339, %v1327, %v1311
      %v1363 = vsel %vm1339, %v1328, %v1312
      %v1364 = vsel %vm1339, %v1329, %v1313
      %v1365 = vsel %vm1339, %v1330, %v1314
      %v1366 = vsel %vm1339, %v1331, %v1315
      %v1367 = vsel %vm1339, %v1332, %v1316
      %v1368 = vsel %vm1339, %v1333, %v1317
      %v1369 = vsel %vm1339, %v1334, %v1318
      %v1370 = vsel %vm1339, %v1335, %v1319
      %v1371 = vsel %vm1339, %v1336, %v1320
      %v1372 = vld [vmem:[%s5] sm:$0xff]
      %v1373 = vld [vmem:[%s5 + $0x8] sm:$0xff]
      %v1374 = vadd.f32 %v1340, %v1372
      %v1375 = vadd.f32 %v1356, %v1373
      %v1376 = vadd.f32 %v1341, %v1372
      %v1377 = vadd.f32 %v1357, %v1373
      %v1378 = vadd.f32 %v1342, %v1372
      %v1379 = vadd.f32 %v1358, %v1373
      %v1380 = vadd.f32 %v1343, %v1372
      %v1381 = vadd.f32 %v1359, %v1373
      %v1382 = vadd.f32 %v1344, %v1372
      %v1383 = vadd.f32 %v1360, %v1373
      %v1384 = vadd.f32 %v1345, %v1372
      %v1385 = vadd.f32 %v1361, %v1373
      %v1386 = vadd.f32 %v1346, %v1372
      %v1387 = vadd.f32 %v1362, %v1373
      %v1388 = vadd.f32 %v1347, %v1372
      %v1389 = vadd.f32 %v1363, %v1373
      %v1390 = vadd.f32 %v1348, %v1372
      %v1391 = vadd.f32 %v1364, %v1373
      %v1392 = vadd.f32 %v1349, %v1372
      %v1393 = vadd.f32 %v1365, %v1373
      %v1394 = vadd.f32 %v1350, %v1372
      %v1395 = vadd.f32 %v1366, %v1373
      %v1396 = vadd.f32 %v1351, %v1372
      %v1397 = vadd.f32 %v1367, %v1373
      %v1398 = vadd.f32 %v1352, %v1372
      %v1399 = vadd.f32 %v1368, %v1373
      %v1400 = vadd.f32 %v1353, %v1372
      %v1401 = vadd.f32 %v1369, %v1373
      %v1402 = vadd.f32 %v1354, %v1372
      %v1403 = vadd.f32 %v1370, %v1373
      %v1404 = vadd.f32 %v1355, %v1372
      %v1405 = vadd.f32 %v1371, %v1373
      %v1406 = vmax.f32 %v1273, %v1374
      %v1407 = vmax.f32 %v1274, %v1375
      %v1408 = vmax.f32 %v1275, %v1376
      %v1409 = vmax.f32 %v1276, %v1377
      %v1410 = vmax.f32 %v1277, %v1378
      %v1411 = vmax.f32 %v1278, %v1379
      %v1412 = vmax.f32 %v1279, %v1380
      %v1413 = vmax.f32 %v1280, %v1381
      %v1414 = vmax.f32 %v1281, %v1382
      %v1415 = vmax.f32 %v1282, %v1383
      %v1416 = vmax.f32 %v1283, %v1384
      %v1417 = vmax.f32 %v1284, %v1385
      %v1418 = vmax.f32 %v1285, %v1386
      %v1419 = vmax.f32 %v1286, %v1387
      %v1420 = vmax.f32 %v1287, %v1388
      %v1421 = vmax.f32 %v1288, %v1389
      %v1422 = vmax.f32 %v1289, %v1390
      %v1423 = vmax.f32 %v1290, %v1391
      %v1424 = vmax.f32 %v1291, %v1392
      %v1425 = vmax.f32 %v1292, %v1393
      %v1426 = vmax.f32 %v1293, %v1394
      %v1427 = vmax.f32 %v1294, %v1395
      %v1428 = vmax.f32 %v1295, %v1396
      %v1429 = vmax.f32 %v1296, %v1397
      %v1430 = vmax.f32 %v1297, %v1398
      %v1431 = vmax.f32 %v1298, %v1399
      %v1432 = vmax.f32 %v1299, %v1400
      %v1433 = vmax.f32 %v1300, %v1401
      %v1434 = vmax.f32 %v1301, %v1402
      %v1435 = vmax.f32 %v1302, %v1403
      %v1436 = vmax.f32 %v1303, %v1404
      %v1437 = vmax.f32 %v1304, %v1405
      %v1438 = vrot.slane %v1273, 2
      %v1439 = vrot.slane %v1275, 2
      %v1440 = vrot.slane %v1277, 2
      %v1441 = vrot.slane %v1279, 2
      %v1442 = vrot.slane %v1281, 2
      %v1443 = vrot.slane %v1283, 2
      %v1444 = vrot.slane %v1285, 2
      %v1445 = vrot.slane %v1287, 2
      %v1446 = vrot.slane %v1289, 2
      %v1447 = vrot.slane %v1291, 2
      %v1448 = vrot.slane %v1293, 2
      %v1449 = vrot.slane %v1295, 2
      %v1450 = vrot.slane %v1297, 2
      %v1451 = vrot.slane %v1299, 2
      %v1452 = vrot.slane %v1301, 2
      %v1453 = vrot.slane %v1303, 2
      %v1454 = vrot.slane %v1274, 2
      %v1455 = vrot.slane %v1276, 2
      %v1456 = vrot.slane %v1278, 2
      %v1457 = vrot.slane %v1280, 2
      %v1458 = vrot.slane %v1282, 2
      %v1459 = vrot.slane %v1284, 2
      %v1460 = vrot.slane %v1286, 2
      %v1461 = vrot.slane %v1288, 2
      %v1462 = vrot.slane %v1290, 2
      %v1463 = vrot.slane %v1292, 2
      %v1464 = vrot.slane %v1294, 2
      %v1465 = vrot.slane %v1296, 2
      %v1466 = vrot.slane %v1298, 2
      %v1467 = vrot.slane %v1300, 2
      %v1468 = vrot.slane %v1302, 2
      %v1469 = vrot.slane %v1304, 2
      %vm1470 = vcmp.lt.s32.totalorder %v1338, 6
      %v1471 = vsel %vm1470, %v1438, %v1454
      %v1472 = vsel %vm1470, %v1439, %v1455
      %v1473 = vsel %vm1470, %v1440, %v1456
      %v1474 = vsel %vm1470, %v1441, %v1457
      %v1475 = vsel %vm1470, %v1442, %v1458
      %v1476 = vsel %vm1470, %v1443, %v1459
      %v1477 = vsel %vm1470, %v1444, %v1460
      %v1478 = vsel %vm1470, %v1445, %v1461
      %v1479 = vsel %vm1470, %v1446, %v1462
      %v1480 = vsel %vm1470, %v1447, %v1463
      %v1481 = vsel %vm1470, %v1448, %v1464
      %v1482 = vsel %vm1470, %v1449, %v1465
      %v1483 = vsel %vm1470, %v1450, %v1466
      %v1484 = vsel %vm1470, %v1451, %v1467
      %v1485 = vsel %vm1470, %v1452, %v1468
      %v1486 = vsel %vm1470, %v1453, %v1469
      %v1487 = vsel %vm1470, %v1454, %v1438
      %v1488 = vsel %vm1470, %v1455, %v1439
      %v1489 = vsel %vm1470, %v1456, %v1440
      %v1490 = vsel %vm1470, %v1457, %v1441
      %v1491 = vsel %vm1470, %v1458, %v1442
      %v1492 = vsel %vm1470, %v1459, %v1443
      %v1493 = vsel %vm1470, %v1460, %v1444
      %v1494 = vsel %vm1470, %v1461, %v1445
      %v1495 = vsel %vm1470, %v1462, %v1446
      %v1496 = vsel %vm1470, %v1463, %v1447
      %v1497 = vsel %vm1470, %v1464, %v1448
      %v1498 = vsel %vm1470, %v1465, %v1449
      %v1499 = vsel %vm1470, %v1466, %v1450
      %v1500 = vsel %vm1470, %v1467, %v1451
      %v1501 = vsel %vm1470, %v1468, %v1452
      %v1502 = vsel %vm1470, %v1469, %v1453
      %s1503 = scalar_lea.vmem %s5, 16
      %v1504 = vld [vmem:[%s1503] sm:$0xff]
      %v1505 = vld [vmem:[%s1503 + $0x8] sm:$0xff]
      %v1506 = vadd.f32 %v1471, %v1504
      %v1507 = vadd.f32 %v1487, %v1505
      %v1508 = vadd.f32 %v1472, %v1504
      %v1509 = vadd.f32 %v1488, %v1505
      %v1510 = vadd.f32 %v1473, %v1504
      %v1511 = vadd.f32 %v1489, %v1505
      %v1512 = vadd.f32 %v1474, %v1504
      %v1513 = vadd.f32 %v1490, %v1505
      %v1514 = vadd.f32 %v1475, %v1504
      %v1515 = vadd.f32 %v1491, %v1505
      %v1516 = vadd.f32 %v1476, %v1504
      %v1517 = vadd.f32 %v1492, %v1505
      %v1518 = vadd.f32 %v1477, %v1504
      %v1519 = vadd.f32 %v1493, %v1505
      %v1520 = vadd.f32 %v1478, %v1504
      %v1521 = vadd.f32 %v1494, %v1505
      %v1522 = vadd.f32 %v1479, %v1504
      %v1523 = vadd.f32 %v1495, %v1505
      %v1524 = vadd.f32 %v1480, %v1504
      %v1525 = vadd.f32 %v1496, %v1505
      %v1526 = vadd.f32 %v1481, %v1504
      %v1527 = vadd.f32 %v1497, %v1505
      %v1528 = vadd.f32 %v1482, %v1504
      %v1529 = vadd.f32 %v1498, %v1505
      %v1530 = vadd.f32 %v1483, %v1504
      %v1531 = vadd.f32 %v1499, %v1505
      %v1532 = vadd.f32 %v1484, %v1504
      %v1533 = vadd.f32 %v1500, %v1505
      %v1534 = vadd.f32 %v1485, %v1504
      %v1535 = vadd.f32 %v1501, %v1505
      %v1536 = vadd.f32 %v1486, %v1504
      %v1537 = vadd.f32 %v1502, %v1505
      %v1538 = vmax.f32 %v1406, %v1506
      %v1539 = vmax.f32 %v1407, %v1507
      %v1540 = vmax.f32 %v1408, %v1508
      %v1541 = vmax.f32 %v1409, %v1509
      %v1542 = vmax.f32 %v1410, %v1510
      %v1543 = vmax.f32 %v1411, %v1511
      %v1544 = vmax.f32 %v1412, %v1512
      %v1545 = vmax.f32 %v1413, %v1513
      %v1546 = vmax.f32 %v1414, %v1514
      %v1547 = vmax.f32 %v1415, %v1515
      %v1548 = vmax.f32 %v1416, %v1516
      %v1549 = vmax.f32 %v1417, %v1517
      %v1550 = vmax.f32 %v1418, %v1518
      %v1551 = vmax.f32 %v1419, %v1519
      %v1552 = vmax.f32 %v1420, %v1520
      %v1553 = vmax.f32 %v1421, %v1521
      %v1554 = vmax.f32 %v1422, %v1522
      %v1555 = vmax.f32 %v1423, %v1523
      %v1556 = vmax.f32 %v1424, %v1524
      %v1557 = vmax.f32 %v1425, %v1525
      %v1558 = vmax.f32 %v1426, %v1526
      %v1559 = vmax.f32 %v1427, %v1527
      %v1560 = vmax.f32 %v1428, %v1528
      %v1561 = vmax.f32 %v1429, %v1529
      %v1562 = vmax.f32 %v1430, %v1530
      %v1563 = vmax.f32 %v1431, %v1531
      %v1564 = vmax.f32 %v1432, %v1532
      %v1565 = vmax.f32 %v1433, %v1533
      %v1566 = vmax.f32 %v1434, %v1534
      %v1567 = vmax.f32 %v1435, %v1535
      %v1568 = vmax.f32 %v1436, %v1536
      %v1569 = vmax.f32 %v1437, %v1537
      %v1570 = vrot.slane %v1273, 7
      %v1571 = vrot.slane %v1275, 7
      %v1572 = vrot.slane %v1277, 7
      %v1573 = vrot.slane %v1279, 7
      %v1574 = vrot.slane %v1281, 7
      %v1575 = vrot.slane %v1283, 7
      %v1576 = vrot.slane %v1285, 7
      %v1577 = vrot.slane %v1287, 7
      %v1578 = vrot.slane %v1289, 7
      %v1579 = vrot.slane %v1291, 7
      %v1580 = vrot.slane %v1293, 7
      %v1581 = vrot.slane %v1295, 7
      %v1582 = vrot.slane %v1297, 7
      %v1583 = vrot.slane %v1299, 7
      %v1584 = vrot.slane %v1301, 7
      %v1585 = vrot.slane %v1303, 7
      %v1586 = vrot.slane %v1274, 7
      %v1587 = vrot.slane %v1276, 7
      %v1588 = vrot.slane %v1278, 7
      %v1589 = vrot.slane %v1280, 7
      %v1590 = vrot.slane %v1282, 7
      %v1591 = vrot.slane %v1284, 7
      %v1592 = vrot.slane %v1286, 7
      %v1593 = vrot.slane %v1288, 7
      %v1594 = vrot.slane %v1290, 7
      %v1595 = vrot.slane %v1292, 7
      %v1596 = vrot.slane %v1294, 7
      %v1597 = vrot.slane %v1296, 7
      %v1598 = vrot.slane %v1298, 7
      %v1599 = vrot.slane %v1300, 7
      %v1600 = vrot.slane %v1302, 7
      %v1601 = vrot.slane %v1304, 7
      %vm1602 = vcmp.lt.s32.totalorder %v1338, 1
      %v1603 = vsel %vm1602, %v1570, %v1586
      %v1604 = vsel %vm1602, %v1571, %v1587
      %v1605 = vsel %vm1602, %v1572, %v1588
      %v1606 = vsel %vm1602, %v1573, %v1589
      %v1607 = vsel %vm1602, %v1574, %v1590
      %v1608 = vsel %vm1602, %v1575, %v1591
      %v1609 = vsel %vm1602, %v1576, %v1592
      %v1610 = vsel %vm1602, %v1577, %v1593
      %v1611 = vsel %vm1602, %v1578, %v1594
      %v1612 = vsel %vm1602, %v1579, %v1595
      %v1613 = vsel %vm1602, %v1580, %v1596
      %v1614 = vsel %vm1602, %v1581, %v1597
      %v1615 = vsel %vm1602, %v1582, %v1598
      %v1616 = vsel %vm1602, %v1583, %v1599
      %v1617 = vsel %vm1602, %v1584, %v1600
      %v1618 = vsel %vm1602, %v1585, %v1601
      %v1619 = vsel %vm1602, %v1586, %v1570
      %v1620 = vsel %vm1602, %v1587, %v1571
      %v1621 = vsel %vm1602, %v1588, %v1572
      %v1622 = vsel %vm1602, %v1589, %v1573
      %v1623 = vsel %vm1602, %v1590, %v1574
      %v1624 = vsel %vm1602, %v1591, %v1575
      %v1625 = vsel %vm1602, %v1592, %v1576
      %v1626 = vsel %vm1602, %v1593, %v1577
      %v1627 = vsel %vm1602, %v1594, %v1578
      %v1628 = vsel %vm1602, %v1595, %v1579
      %v1629 = vsel %vm1602, %v1596, %v1580
      %v1630 = vsel %vm1602, %v1597, %v1581
      %v1631 = vsel %vm1602, %v1598, %v1582
      %v1632 = vsel %vm1602, %v1599, %v1583
      %v1633 = vsel %vm1602, %v1600, %v1584
      %v1634 = vsel %vm1602, %v1601, %v1585
      %s1635 = scalar_lea.vmem %s5, 32
      %v1636 = vld [vmem:[%s1635] sm:$0xff]
      %v1637 = vld [vmem:[%s1635 + $0x8] sm:$0xff]
      %v1638 = vadd.f32 %v1619, %v1636
      %v1639 = vadd.f32 %v1603, %v1637
      %v1640 = vadd.f32 %v1620, %v1636
      %v1641 = vadd.f32 %v1604, %v1637
      %v1642 = vadd.f32 %v1621, %v1636
      %v1643 = vadd.f32 %v1605, %v1637
      %v1644 = vadd.f32 %v1622, %v1636
      %v1645 = vadd.f32 %v1606, %v1637
      %v1646 = vadd.f32 %v1623, %v1636
      %v1647 = vadd.f32 %v1607, %v1637
      %v1648 = vadd.f32 %v1624, %v1636
      %v1649 = vadd.f32 %v1608, %v1637
      %v1650 = vadd.f32 %v1625, %v1636
      %v1651 = vadd.f32 %v1609, %v1637
      %v1652 = vadd.f32 %v1626, %v1636
      %v1653 = vadd.f32 %v1610, %v1637
      %v1654 = vadd.f32 %v1627, %v1636
      %v1655 = vadd.f32 %v1611, %v1637
      %v1656 = vadd.f32 %v1628, %v1636
      %v1657 = vadd.f32 %v1612, %v1637
      %v1658 = vadd.f32 %v1629, %v1636
      %v1659 = vadd.f32 %v1613, %v1637
      %v1660 = vadd.f32 %v1630, %v1636
      %v1661 = vadd.f32 %v1614, %v1637
      %v1662 = vadd.f32 %v1631, %v1636
      %v1663 = vadd.f32 %v1615, %v1637
      %v1664 = vadd.f32 %v1632, %v1636
      %v1665 = vadd.f32 %v1616, %v1637
      %v1666 = vadd.f32 %v1633, %v1636
      %v1667 = vadd.f32 %v1617, %v1637
      %v1668 = vadd.f32 %v1634, %v1636
      %v1669 = vadd.f32 %v1618, %v1637
      %v1670 = vmax.f32 %v1538, %v1638
      %v1671 = vmax.f32 %v1539, %v1639
      %v1672 = vmax.f32 %v1540, %v1640
      %v1673 = vmax.f32 %v1541, %v1641
      %v1674 = vmax.f32 %v1542, %v1642
      %v1675 = vmax.f32 %v1543, %v1643
      %v1676 = vmax.f32 %v1544, %v1644
      %v1677 = vmax.f32 %v1545, %v1645
      %v1678 = vmax.f32 %v1546, %v1646
      %v1679 = vmax.f32 %v1547, %v1647
      %v1680 = vmax.f32 %v1548, %v1648
      %v1681 = vmax.f32 %v1549, %v1649
      %v1682 = vmax.f32 %v1550, %v1650
      %v1683 = vmax.f32 %v1551, %v1651
      %v1684 = vmax.f32 %v1552, %v1652
      %v1685 = vmax.f32 %v1553, %v1653
      %v1686 = vmax.f32 %v1554, %v1654
      %v1687 = vmax.f32 %v1555, %v1655
      %v1688 = vmax.f32 %v1556, %v1656
      %v1689 = vmax.f32 %v1557, %v1657
      %v1690 = vmax.f32 %v1558, %v1658
      %v1691 = vmax.f32 %v1559, %v1659
      %v1692 = vmax.f32 %v1560, %v1660
      %v1693 = vmax.f32 %v1561, %v1661
      %v1694 = vmax.f32 %v1562, %v1662
      %v1695 = vmax.f32 %v1563, %v1663
      %v1696 = vmax.f32 %v1564, %v1664
      %v1697 = vmax.f32 %v1565, %v1665
      %v1698 = vmax.f32 %v1566, %v1666
      %v1699 = vmax.f32 %v1567, %v1667
      %v1700 = vmax.f32 %v1568, %v1668
      %v1701 = vmax.f32 %v1569, %v1669
      %v1702 = vrot.slane %v1273, 6
      %v1703 = vrot.slane %v1275, 6
      %v1704 = vrot.slane %v1277, 6
      %v1705 = vrot.slane %v1279, 6
      %v1706 = vrot.slane %v1281, 6
      %v1707 = vrot.slane %v1283, 6
      %v1708 = vrot.slane %v1285, 6
      %v1709 = vrot.slane %v1287, 6
      %v1710 = vrot.slane %v1289, 6
      %v1711 = vrot.slane %v1291, 6
      %v1712 = vrot.slane %v1293, 6
      %v1713 = vrot.slane %v1295, 6
      %v1714 = vrot.slane %v1297, 6
      %v1715 = vrot.slane %v1299, 6
      %v1716 = vrot.slane %v1301, 6
      %v1717 = vrot.slane %v1303, 6
      %v1718 = vrot.slane %v1274, 6
      %v1719 = vrot.slane %v1276, 6
      %v1720 = vrot.slane %v1278, 6
      %v1721 = vrot.slane %v1280, 6
      %v1722 = vrot.slane %v1282, 6
      %v1723 = vrot.slane %v1284, 6
      %v1724 = vrot.slane %v1286, 6
      %v1725 = vrot.slane %v1288, 6
      %v1726 = vrot.slane %v1290, 6
      %v1727 = vrot.slane %v1292, 6
      %v1728 = vrot.slane %v1294, 6
      %v1729 = vrot.slane %v1296, 6
      %v1730 = vrot.slane %v1298, 6
      %v1731 = vrot.slane %v1300, 6
      %v1732 = vrot.slane %v1302, 6
      %v1733 = vrot.slane %v1304, 6
      %vm1734 = vcmp.lt.s32.totalorder %v1338, 2
      %v1735 = vsel %vm1734, %v1702, %v1718
      %v1736 = vsel %vm1734, %v1703, %v1719
      %v1737 = vsel %vm1734, %v1704, %v1720
      %v1738 = vsel %vm1734, %v1705, %v1721
      %v1739 = vsel %vm1734, %v1706, %v1722
      %v1740 = vsel %vm1734, %v1707, %v1723
      %v1741 = vsel %vm1734, %v1708, %v1724
      %v1742 = vsel %vm1734, %v1709, %v1725
      %v1743 = vsel %vm1734, %v1710, %v1726
      %v1744 = vsel %vm1734, %v1711, %v1727
      %v1745 = vsel %vm1734, %v1712, %v1728
      %v1746 = vsel %vm1734, %v1713, %v1729
      %v1747 = vsel %vm1734, %v1714, %v1730
      %v1748 = vsel %vm1734, %v1715, %v1731
      %v1749 = vsel %vm1734, %v1716, %v1732
      %v1750 = vsel %vm1734, %v1717, %v1733
      %v1751 = vsel %vm1734, %v1718, %v1702
      %v1752 = vsel %vm1734, %v1719, %v1703
      %v1753 = vsel %vm1734, %v1720, %v1704
      %v1754 = vsel %vm1734, %v1721, %v1705
      %v1755 = vsel %vm1734, %v1722, %v1706
      %v1756 = vsel %vm1734, %v1723, %v1707
      %v1757 = vsel %vm1734, %v1724, %v1708
      %v1758 = vsel %vm1734, %v1725, %v1709
      %v1759 = vsel %vm1734, %v1726, %v1710
      %v1760 = vsel %vm1734, %v1727, %v1711
      %v1761 = vsel %vm1734, %v1728, %v1712
      %v1762 = vsel %vm1734, %v1729, %v1713
      %v1763 = vsel %vm1734, %v1730, %v1714
      %v1764 = vsel %vm1734, %v1731, %v1715
      %v1765 = vsel %vm1734, %v1732, %v1716
      %v1766 = vsel %vm1734, %v1733, %v1717
      %s1767 = scalar_lea.vmem %s5, 48
      %v1768 = vld [vmem:[%s1767] sm:$0xff]
      %v1769 = vld [vmem:[%s1767 + $0x8] sm:$0xff]
      %v1770 = vadd.f32 %v1751, %v1768
      %v1771 = vadd.f32 %v1735, %v1769
      %v1772 = vadd.f32 %v1752, %v1768
      %v1773 = vadd.f32 %v1736, %v1769
      %v1774 = vadd.f32 %v1753, %v1768
      %v1775 = vadd.f32 %v1737, %v1769
      %v1776 = vadd.f32 %v1754, %v1768
      %v1777 = vadd.f32 %v1738, %v1769
      %v1778 = vadd.f32 %v1755, %v1768
      %v1779 = vadd.f32 %v1739, %v1769
      %v1780 = vadd.f32 %v1756, %v1768
      %v1781 = vadd.f32 %v1740, %v1769
      %v1782 = vadd.f32 %v1757, %v1768
      %v1783 = vadd.f32 %v1741, %v1769
      %v1784 = vadd.f32 %v1758, %v1768
      %v1785 = vadd.f32 %v1742, %v1769
      %v1786 = vadd.f32 %v1759, %v1768
      %v1787 = vadd.f32 %v1743, %v1769
      %v1788 = vadd.f32 %v1760, %v1768
      %v1789 = vadd.f32 %v1744, %v1769
      %v1790 = vadd.f32 %v1761, %v1768
      %v1791 = vadd.f32 %v1745, %v1769
      %v1792 = vadd.f32 %v1762, %v1768
      %v1793 = vadd.f32 %v1746, %v1769
      %v1794 = vadd.f32 %v1763, %v1768
      %v1795 = vadd.f32 %v1747, %v1769
      %v1796 = vadd.f32 %v1764, %v1768
      %v1797 = vadd.f32 %v1748, %v1769
      %v1798 = vadd.f32 %v1765, %v1768
      %v1799 = vadd.f32 %v1749, %v1769
      %v1800 = vadd.f32 %v1766, %v1768
      %v1801 = vadd.f32 %v1750, %v1769
      %v1802 = vmax.f32 %v1670, %v1770
      %v1803 = vmax.f32 %v1671, %v1771
      %v1804 = vmax.f32 %v1672, %v1772
      %v1805 = vmax.f32 %v1673, %v1773
      %v1806 = vmax.f32 %v1674, %v1774
      %v1807 = vmax.f32 %v1675, %v1775
      %v1808 = vmax.f32 %v1676, %v1776
      %v1809 = vmax.f32 %v1677, %v1777
      %v1810 = vmax.f32 %v1678, %v1778
      %v1811 = vmax.f32 %v1679, %v1779
      %v1812 = vmax.f32 %v1680, %v1780
      %v1813 = vmax.f32 %v1681, %v1781
      %v1814 = vmax.f32 %v1682, %v1782
      %v1815 = vmax.f32 %v1683, %v1783
      %v1816 = vmax.f32 %v1684, %v1784
      %v1817 = vmax.f32 %v1685, %v1785
      %v1818 = vmax.f32 %v1686, %v1786
      %v1819 = vmax.f32 %v1687, %v1787
      %v1820 = vmax.f32 %v1688, %v1788
      %v1821 = vmax.f32 %v1689, %v1789
      %v1822 = vmax.f32 %v1690, %v1790
      %v1823 = vmax.f32 %v1691, %v1791
      %v1824 = vmax.f32 %v1692, %v1792
      %v1825 = vmax.f32 %v1693, %v1793
      %v1826 = vmax.f32 %v1694, %v1794
      %v1827 = vmax.f32 %v1695, %v1795
      %v1828 = vmax.f32 %v1696, %v1796
      %v1829 = vmax.f32 %v1697, %v1797
      %v1830 = vmax.f32 %v1698, %v1798
      %v1831 = vmax.f32 %v1699, %v1799
      %v1832 = vmax.f32 %v1700, %v1800
      %v1833 = vmax.f32 %v1701, %v1801
      %v1834 = vld [vmem:[#allocation3] sm:$0xff]
      %v1835 = vld [vmem:[#allocation3 + $0x8] sm:$0xff]
      %v1836 = vld [vmem:[#allocation3 + $0x10] sm:$0xff]
      %v1837 = vld [vmem:[#allocation3 + $0x18] sm:$0xff]
      %v1838 = vld [vmem:[#allocation3 + $0x20] sm:$0xff]
      %v1839 = vld [vmem:[#allocation3 + $0x28] sm:$0xff]
      %v1840 = vld [vmem:[#allocation3 + $0x30] sm:$0xff]
      %v1841 = vld [vmem:[#allocation3 + $0x38] sm:$0xff]
      %v1842 = vld [vmem:[#allocation3 + $0x40] sm:$0xff]
      %v1843 = vld [vmem:[#allocation3 + $0x48] sm:$0xff]
      %v1844 = vld [vmem:[#allocation3 + $0x50] sm:$0xff]
      %v1845 = vld [vmem:[#allocation3 + $0x58] sm:$0xff]
      %v1846 = vld [vmem:[#allocation3 + $0x60] sm:$0xff]
      %v1847 = vld [vmem:[#allocation3 + $0x68] sm:$0xff]
      %v1848 = vld [vmem:[#allocation3 + $0x70] sm:$0xff]
      %v1849 = vld [vmem:[#allocation3 + $0x78] sm:$0xff]
      %v1850 = vld [vmem:[#allocation3 + $0x80] sm:$0xff]
      %v1851 = vld [vmem:[#allocation3 + $0x88] sm:$0xff]
      %v1852 = vld [vmem:[#allocation3 + $0x90] sm:$0xff]
      %v1853 = vld [vmem:[#allocation3 + $0x98] sm:$0xff]
      %v1854 = vld [vmem:[#allocation3 + $0xa0] sm:$0xff]
      %v1855 = vld [vmem:[#allocation3 + $0xa8] sm:$0xff]
      %v1856 = vld [vmem:[#allocation3 + $0xb0] sm:$0xff]
      %v1857 = vld [vmem:[#allocation3 + $0xb8] sm:$0xff]
      %v1858 = vld [vmem:[#allocation3 + $0xc0] sm:$0xff]
      %v1859 = vld [vmem:[#allocation3 + $0xc8] sm:$0xff]
      %v1860 = vld [vmem:[#allocation3 + $0xd0] sm:$0xff]
      %v1861 = vld [vmem:[#allocation3 + $0xd8] sm:$0xff]
      %v1862 = vld [vmem:[#allocation3 + $0xe0] sm:$0xff]
      %v1863 = vld [vmem:[#allocation3 + $0xe8] sm:$0xff]
      %v1864 = vld [vmem:[#allocation3 + $0xf0] sm:$0xff]
      %v1865 = vld [vmem:[#allocation3 + $0xf8] sm:$0xff]
      %v1866 = vld [vmem:[%s3 + $0x80] sm:$0xff]
      %v1867 = vld [vmem:[%s3 + $0x88] sm:$0xff]
      %v1868 = vld [vmem:[%s3 + $0x90] sm:$0xff]
      %v1869 = vld [vmem:[%s3 + $0x98] sm:$0xff]
      %v1870 = vld [vmem:[%s3 + $0xa0] sm:$0xff]
      %v1871 = vld [vmem:[%s3 + $0xa8] sm:$0xff]
      %v1872 = vld [vmem:[%s3 + $0xb0] sm:$0xff]
      %v1873 = vld [vmem:[%s3 + $0xb8] sm:$0xff]
      %v1874 = vld [vmem:[%s3 + $0xc0] sm:$0xff]
      %v1875 = vld [vmem:[%s3 + $0xc8] sm:$0xff]
      %v1876 = vld [vmem:[%s3 + $0xd0] sm:$0xff]
      %v1877 = vld [vmem:[%s3 + $0xd8] sm:$0xff]
      %v1878 = vld [vmem:[%s3 + $0xe0] sm:$0xff]
      %v1879 = vld [vmem:[%s3 + $0xe8] sm:$0xff]
      %v1880 = vld [vmem:[%s3 + $0xf0] sm:$0xff]
      %v1881 = vld [vmem:[%s3 + $0xf8] sm:$0xff]
      %1882 = vmatprep.subr.mxu0 0.0
      %1883 = vmatpush1.msra.mxu0 %v1866
      %1884 = vmatprep.subr.mxu0 0.0
      %1885 = vmatpush1.msra.mxu0 %v1867
      %1886 = vmatprep.subr.mxu0 0.0
      %1887 = vmatpush1.msra.mxu0 %v1868
      %1888 = vmatprep.subr.mxu0 0.0
      %1889 = vmatpush1.msra.mxu0 %v1869
      %1890 = vmatprep.subr.mxu0 0.0
      %1891 = vmatpush1.msra.mxu0 %v1870
      %1892 = vmatprep.subr.mxu0 0.0
      %1893 = vmatpush1.msra.mxu0 %v1871
      %1894 = vmatprep.subr.mxu0 0.0
      %1895 = vmatpush1.msra.mxu0 %v1872
      %1896 = vmatprep.subr.mxu0 0.0
      %1897 = vmatpush1.msra.mxu0 %v1873
      %1898 = vmatprep.subr.mxu0 0.0
      %1899 = vmatpush1.msra.mxu0 %v1874
      %1900 = vmatprep.subr.mxu0 0.0
      %1901 = vmatpush1.msra.mxu0 %v1875
      %1902 = vmatprep.subr.mxu0 0.0
      %1903 = vmatpush1.msra.mxu0 %v1876
      %1904 = vmatprep.subr.mxu0 0.0
      %1905 = vmatpush1.msra.mxu0 %v1877
      %1906 = vmatprep.subr.mxu0 0.0
      %1907 = vmatpush1.msra.mxu0 %v1878
      %1908 = vmatprep.subr.mxu0 0.0
      %1909 = vmatpush1.msra.mxu0 %v1879
      %1910 = vmatprep.subr.mxu0 0.0
      %1911 = vmatpush1.msra.mxu0 %v1880
      %1912 = vmatprep.subr.mxu0 0.0
      %1913 = vmatpush1.msra.mxu0 %v1881
      %1914 = vmatprep.subr.mxu0 0.0
      %1915 = vmatpush1.msra.mxu0 0.0
      %1916 = vmatprep.subr.mxu0 0.0
      %1917 = vmatpush1.msra.mxu0 0.0
      %1918 = vmatprep.subr.mxu0 0.0
      %1919 = vmatpush1.msra.mxu0 0.0
      %1920 = vmatprep.subr.mxu0 0.0
      %1921 = vmatpush1.msra.mxu0 0.0
      %1922 = vmatprep.subr.mxu0 0.0
      %1923 = vmatpush1.msra.mxu0 0.0
      %1924 = vmatprep.subr.mxu0 0.0
      %1925 = vmatpush1.msra.mxu0 0.0
      %1926 = vmatprep.subr.mxu0 0.0
      %1927 = vmatpush1.msra.mxu0 0.0
      %1928 = vmatprep.subr.mxu0 0.0
      %1929 = vmatpush1.msra.mxu0 0.0
      %1930 = vmatprep.subr.mxu0 0.0
      %1931 = vmatpush1.msra.mxu0 0.0
      %1932 = vmatprep.subr.mxu0 0.0
      %1933 = vmatpush1.msra.mxu0 0.0
      %1934 = vmatprep.subr.mxu0 0.0
      %1935 = vmatpush1.msra.mxu0 0.0
      %1936 = vmatprep.subr.mxu0 0.0
      %1937 = vmatpush1.msra.mxu0 0.0
      %1938 = vmatprep.subr.mxu0 0.0
      %1939 = vmatpush1.msra.mxu0 0.0
      %1940 = vmatprep.subr.mxu0 0.0
      %1941 = vmatpush1.msra.mxu0 0.0
      %1942 = vmatprep.subr.mxu0 0.0
      %1943 = vmatpush1.msra.mxu0 0.0
      %1944 = vmatprep.subr.mxu0 0.0
      %1945 = vmatpush1.msra.mxu0 0.0
      %1946 = vmatprep.mubr.f32.mxu0 0.0
      %1947 = vmatmul.mubr.f32.gmra.mrb[0].mxu0 %v1802
      %v1948 = vpop.f32.mrb[0].mxu0
      %v1949 = vadd.f32 0.0, %v1948
      %v1950 = vpop.f32.mrb[0].mxu0
      %1951 = vmatprep.mubr.f32.mxu0 0.0
      %1952 = vmatmul.mubr.f32.gmra.mrb[0].mxu0 %v1803
      %v1953 = vpop.f32.mrb[0].mxu0
      %v1954 = vadd.f32 0.0, %v1953
      %v1955 = vpop.f32.mrb[0].mxu0
      %1956 = vmatprep.mubr.f32.mxu0 0.0
      %1957 = vmatmul.mubr.f32.gmra.mrb[0].mxu0 %v1804
      %v1958 = vpop.f32.mrb[0].mxu0
      %v1959 = vadd.f32 0.0, %v1958
      %v1960 = vpop.f32.mrb[0].mxu0
      %1961 = vmatprep.mubr.f32.mxu0 0.0
      %1962 = vmatmul.mubr.f32.gmra.mrb[0].mxu0 %v1805
      %v1963 = vpop.f32.mrb[0].mxu0
      %v1964 = vadd.f32 0.0, %v1963
      %v1965 = vpop.f32.mrb[0].mxu0
      %1966 = vmatprep.mubr.f32.mxu0 0.0
      %1967 = vmatmul.mubr.f32.gmra.mrb[0].mxu0 %v1806
      %v1968 = vpop.f32.mrb[0].mxu0
      %v1969 = vadd.f32 0.0, %v1968
      %v1970 = vpop.f32.mrb[0].mxu0
      %1971 = vmatprep.mubr.f32.mxu0 0.0
      %1972 = vmatmul.mubr.f32.gmra.mrb[0].mxu0 %v1807
      %v1973 = vpop.f32.mrb[0].mxu0
      %v1974 = vadd.f32 0.0, %v1973
      %v1975 = vpop.f32.mrb[0].mxu0
      %1976 = vmatprep.mubr.f32.mxu0 0.0
      %1977 = vmatmul.mubr.f32.gmra.mrb[0].mxu0 %v1808
      %v1978 = vpop.f32.mrb[0].mxu0
      %v1979 = vadd.f32 0.0, %v1978
      %v1980 = vpop.f32.mrb[0].mxu0
      %1981 = vmatprep.mubr.f32.mxu0 0.0
      %1982 = vmatmul.mubr.f32.gmra.mrb[0].mxu0 %v1809
      %v1983 = vpop.f32.mrb[0].mxu0
      %v1984 = vadd.f32 0.0, %v1983
      %v1985 = vpop.f32.mrb[0].mxu0
      %1986 = vmatprep.mubr.f32.mxu0 0.0
      %1987 = vmatmul.mubr.f32.gmra.mrb[0].mxu0 %v1810
      %v1988 = vpop.f32.mrb[0].mxu0
      %v1989 = vadd.f32 0.0, %v1988
      %v1990 = vpop.f32.mrb[0].mxu0
      %1991 = vmatprep.mubr.f32.mxu0 0.0
      %1992 = vmatmul.mubr.f32.gmra.mrb[0].mxu0 %v1811
      %v1993 = vpop.f32.mrb[0].mxu0
      %v1994 = vadd.f32 0.0, %v1993
      %v1995 = vpop.f32.mrb[0].mxu0
      %1996 = vmatprep.mubr.f32.mxu0 0.0
      %1997 = vmatmul.mubr.f32.gmra.mrb[0].mxu0 %v1812
      %v1998 = vpop.f32.mrb[0].mxu0
      %v1999 = vadd.f32 0.0, %v1998
      %v2000 = vpop.f32.mrb[0].mxu0
      %2001 = vmatprep.mubr.f32.mxu0 0.0
      %2002 = vmatmul.mubr.f32.gmra.mrb[0].mxu0 %v1813
      %v2003 = vpop.f32.mrb[0].mxu0
      %v2004 = vadd.f32 0.0, %v2003
      %v2005 = vpop.f32.mrb[0].mxu0
      %2006 = vmatprep.mubr.f32.mxu0 0.0
      %2007 = vmatmul.mubr.f32.gmra.mrb[0].mxu0 %v1814
      %v2008 = vpop.f32.mrb[0].mxu0
      %v2009 = vadd.f32 0.0, %v2008
      %v2010 = vpop.f32.mrb[0].mxu0
      %2011 = vmatprep.mubr.f32.mxu0 0.0
      %2012 = vmatmul.mubr.f32.gmra.mrb[0].mxu0 %v1815
      %v2013 = vpop.f32.mrb[0].mxu0
      %v2014 = vadd.f32 0.0, %v2013
      %v2015 = vpop.f32.mrb[0].mxu0
      %2016 = vmatprep.mubr.f32.mxu0 0.0
      %2017 = vmatmul.mubr.f32.gmra.mrb[0].mxu0 %v1816
      %v2018 = vpop.f32.mrb[0].mxu0
      %v2019 = vadd.f32 0.0, %v2018
      %v2020 = vpop.f32.mrb[0].mxu0
      %2021 = vmatprep.mubr.f32.mxu0 0.0
      %2022 = vmatmul.mubr.f32.gmra.mrb[0].mxu0 %v1817
      %v2023 = vpop.f32.mrb[0].mxu0
      %v2024 = vadd.f32 0.0, %v2023
      %v2025 = vpop.f32.mrb[0].mxu0
      %2026 = vmatprep.mubr.f32.mxu0 0.0
      %2027 = vmatmul.mubr.f32.gmra.mrb[0].mxu0 %v1818
      %v2028 = vpop.f32.mrb[0].mxu0
      %v2029 = vadd.f32 0.0, %v2028
      %v2030 = vpop.f32.mrb[0].mxu0
      %2031 = vmatprep.mubr.f32.mxu0 0.0
      %2032 = vmatmul.mubr.f32.gmra.mrb[0].mxu0 %v1819
      %v2033 = vpop.f32.mrb[0].mxu0
      %v2034 = vadd.f32 0.0, %v2033
      %v2035 = vpop.f32.mrb[0].mxu0
      %2036 = vmatprep.mubr.f32.mxu0 0.0
      %2037 = vmatmul.mubr.f32.gmra.mrb[0].mxu0 %v1820
      %v2038 = vpop.f32.mrb[0].mxu0
      %v2039 = vadd.f32 0.0, %v2038
      %v2040 = vpop.f32.mrb[0].mxu0
      %2041 = vmatprep.mubr.f32.mxu0 0.0
      %2042 = vmatmul.mubr.f32.gmra.mrb[0].mxu0 %v1821
      %v2043 = vpop.f32.mrb[0].mxu0
      %v2044 = vadd.f32 0.0, %v2043
      %v2045 = vpop.f32.mrb[0].mxu0
      %2046 = vmatprep.mubr.f32.mxu0 0.0
      %2047 = vmatmul.mubr.f32.gmra.mrb[0].mxu0 %v1822
      %v2048 = vpop.f32.mrb[0].mxu0
      %v2049 = vadd.f32 0.0, %v2048
      %v2050 = vpop.f32.mrb[0].mxu0
      %2051 = vmatprep.mubr.f32.mxu0 0.0
      %2052 = vmatmul.mubr.f32.gmra.mrb[0].mxu0 %v1823
      %v2053 = vpop.f32.mrb[0].mxu0
      %v2054 = vadd.f32 0.0, %v2053
      %v2055 = vpop.f32.mrb[0].mxu0
      %2056 = vmatprep.mubr.f32.mxu0 0.0
      %2057 = vmatmul.mubr.f32.gmra.mrb[0].mxu0 %v1824
      %v2058 = vpop.f32.mrb[0].mxu0
      %v2059 = vadd.f32 0.0, %v2058
      %v2060 = vpop.f32.mrb[0].mxu0
      %2061 = vmatprep.mubr.f32.mxu0 0.0
      %2062 = vmatmul.mubr.f32.gmra.mrb[0].mxu0 %v1825
      %v2063 = vpop.f32.mrb[0].mxu0
      %v2064 = vadd.f32 0.0, %v2063
      %v2065 = vpop.f32.mrb[0].mxu0
      %2066 = vmatprep.mubr.f32.mxu0 0.0
      %2067 = vmatmul.mubr.f32.gmra.mrb[0].mxu0 %v1826
      %v2068 = vpop.f32.mrb[0].mxu0
      %v2069 = vadd.f32 0.0, %v2068
      %v2070 = vpop.f32.mrb[0].mxu0
      %2071 = vmatprep.mubr.f32.mxu0 0.0
      %2072 = vmatmul.mubr.f32.gmra.mrb[0].mxu0 %v1827
      %v2073 = vpop.f32.mrb[0].mxu0
      %v2074 = vadd.f32 0.0, %v2073
      %v2075 = vpop.f32.mrb[0].mxu0
      %2076 = vmatprep.mubr.f32.mxu0 0.0
      %2077 = vmatmul.mubr.f32.gmra.mrb[0].mxu0 %v1828
      %v2078 = vpop.f32.mrb[0].mxu0
      %v2079 = vadd.f32 0.0, %v2078
      %v2080 = vpop.f32.mrb[0].mxu0
      %2081 = vmatprep.mubr.f32.mxu0 0.0
      %2082 = vmatmul.mubr.f32.gmra.mrb[0].mxu0 %v1829
      %v2083 = vpop.f32.mrb[0].mxu0
      %v2084 = vadd.f32 0.0, %v2083
      %v2085 = vpop.f32.mrb[0].mxu0
      %2086 = vmatprep.mubr.f32.mxu0 0.0
      %2087 = vmatmul.mubr.f32.gmra.mrb[0].mxu0 %v1830
      %v2088 = vpop.f32.mrb[0].mxu0
      %v2089 = vadd.f32 0.0, %v2088
      %v2090 = vpop.f32.mrb[0].mxu0
      %2091 = vmatprep.mubr.f32.mxu0 0.0
      %2092 = vmatmul.mubr.f32.gmra.mrb[0].mxu0 %v1831
      %v2093 = vpop.f32.mrb[0].mxu0
      %v2094 = vadd.f32 0.0, %v2093
      %v2095 = vpop.f32.mrb[0].mxu0
      %2096 = vmatprep.mubr.f32.mxu0 0.0
      %2097 = vmatmul.mubr.f32.gmra.mrb[0].mxu0 %v1832
      %v2098 = vpop.f32.mrb[0].mxu0
      %v2099 = vadd.f32 0.0, %v2098
      %v2100 = vpop.f32.mrb[0].mxu0
      %2101 = vmatprep.mubr.f32.mxu0 0.0
      %2102 = vmatmul.mubr.f32.gmra.mrb[0].mxu0 %v1833
      %v2103 = vpop.f32.mrb[0].mxu0
      %v2104 = vadd.f32 0.0, %v2103
      %v2105 = vpop.f32.mrb[0].mxu0
      %2106 = vdwg.mxu0
      %v2107 = vadd.f32 %v1834, %v1949
      %v2108 = vadd.f32 %v1835, %v1954
      %v2109 = vadd.f32 %v1836, %v1959
      %v2110 = vadd.f32 %v1837, %v1964
      %v2111 = vadd.f32 %v1838, %v1969
      %v2112 = vadd.f32 %v1839, %v1974
      %v2113 = vadd.f32 %v1840, %v1979
      %v2114 = vadd.f32 %v1841, %v1984
      %v2115 = vadd.f32 %v1842, %v1989
      %v2116 = vadd.f32 %v1843, %v1994
      %v2117 = vadd.f32 %v1844, %v1999
      %v2118 = vadd.f32 %v1845, %v2004
      %v2119 = vadd.f32 %v1846, %v2009
      %v2120 = vadd.f32 %v1847, %v2014
      %v2121 = vadd.f32 %v1848, %v2019
      %v2122 = vadd.f32 %v1849, %v2024
      %v2123 = vadd.f32 %v1850, %v2029
      %v2124 = vadd.f32 %v1851, %v2034
      %v2125 = vadd.f32 %v1852, %v2039
      %v2126 = vadd.f32 %v1853, %v2044
      %v2127 = vadd.f32 %v1854, %v2049
      %v2128 = vadd.f32 %v1855, %v2054
      %v2129 = vadd.f32 %v1856, %v2059
      %v2130 = vadd.f32 %v1857, %v2064
      %v2131 = vadd.f32 %v1858, %v2069
      %v2132 = vadd.f32 %v1859, %v2074
      %v2133 = vadd.f32 %v1860, %v2079
      %v2134 = vadd.f32 %v1861, %v2084
      %v2135 = vadd.f32 %v1862, %v2089
      %v2136 = vadd.f32 %v1863, %v2094
      %v2137 = vadd.f32 %v1864, %v2099
      %v2138 = vadd.f32 %v1865, %v2104
      %2139 = vst [vmem:[#allocation3] sm:$0xff] %v2107
      %2140 = vst [vmem:[#allocation3 + $0x8] sm:$0xff] %v2108
      %2141 = vst [vmem:[#allocation3 + $0x10] sm:$0xff] %v2109
      %2142 = vst [vmem:[#allocation3 + $0x18] sm:$0xff] %v2110
      %2143 = vst [vmem:[#allocation3 + $0x20] sm:$0xff] %v2111
      %2144 = vst [vmem:[#allocation3 + $0x28] sm:$0xff] %v2112
      %2145 = vst [vmem:[#allocation3 + $0x30] sm:$0xff] %v2113
      %2146 = vst [vmem:[#allocation3 + $0x38] sm:$0xff] %v2114
      %2147 = vst [vmem:[#allocation3 + $0x40] sm:$0xff] %v2115
      %2148 = vst [vmem:[#allocation3 + $0x48] sm:$0xff] %v2116
      %2149 = vst [vmem:[#allocation3 + $0x50] sm:$0xff] %v2117
      %2150 = vst [vmem:[#allocation3 + $0x58] sm:$0xff] %v2118
      %2151 = vst [vmem:[#allocation3 + $0x60] sm:$0xff] %v2119
      %2152 = vst [vmem:[#allocation3 + $0x68] sm:$0xff] %v2120
      %2153 = vst [vmem:[#allocation3 + $0x70] sm:$0xff] %v2121
      %2154 = vst [vmem:[#allocation3 + $0x78] sm:$0xff] %v2122
      %2155 = vst [vmem:[#allocation3 + $0x80] sm:$0xff] %v2123
      %2156 = vst [vmem:[#allocation3 + $0x88] sm:$0xff] %v2124
      %2157 = vst [vmem:[#allocation3 + $0x90] sm:$0xff] %v2125
      %2158 = vst [vmem:[#allocation3 + $0x98] sm:$0xff] %v2126
      %2159 = vst [vmem:[#allocation3 + $0xa0] sm:$0xff] %v2127
      %2160 = vst [vmem:[#allocation3 + $0xa8] sm:$0xff] %v2128
      %2161 = vst [vmem:[#allocation3 + $0xb0] sm:$0xff] %v2129
      %2162 = vst [vmem:[#allocation3 + $0xb8] sm:$0xff] %v2130
      %2163 = vst [vmem:[#allocation3 + $0xc0] sm:$0xff] %v2131
      %2164 = vst [vmem:[#allocation3 + $0xc8] sm:$0xff] %v2132
      %2165 = vst [vmem:[#allocation3 + $0xd0] sm:$0xff] %v2133
      %2166 = vst [vmem:[#allocation3 + $0xd8] sm:$0xff] %v2134
      %2167 = vst [vmem:[#allocation3 + $0xe0] sm:$0xff] %v2135
      %2168 = vst [vmem:[#allocation3 + $0xe8] sm:$0xff] %v2136
      %2169 = vst [vmem:[#allocation3 + $0xf0] sm:$0xff] %v2137
      %2170 = vst [vmem:[#allocation3 + $0xf8] sm:$0xff] %v2138
      %2171 = vst [vmem:[%s981] sm:$0xff] %v1802
      %2172 = vst [vmem:[%s981 + $0x8] sm:$0xff] %v1803
      %2173 = vst [vmem:[%s981 + $0x10] sm:$0xff] %v1804
      %2174 = vst [vmem:[%s981 + $0x18] sm:$0xff] %v1805
      %2175 = vst [vmem:[%s981 + $0x20] sm:$0xff] %v1806
      %2176 = vst [vmem:[%s981 + $0x28] sm:$0xff] %v1807
      %2177 = vst [vmem:[%s981 + $0x30] sm:$0xff] %v1808
      %2178 = vst [vmem:[%s981 + $0x38] sm:$0xff] %v1809
      %2179 = vst [vmem:[%s981 + $0x40] sm:$0xff] %v1810
      %2180 = vst [vmem:[%s981 + $0x48] sm:$0xff] %v1811
      %2181 = vst [vmem:[%s981 + $0x50] sm:$0xff] %v1812
      %2182 = vst [vmem:[%s981 + $0x58] sm:$0xff] %v1813
      %2183 = vst [vmem:[%s981 + $0x60] sm:$0xff] %v1814
      %2184 = vst [vmem:[%s981 + $0x68] sm:$0xff] %v1815
      %2185 = vst [vmem:[%s981 + $0x70] sm:$0xff] %v1816
      %2186 = vst [vmem:[%s981 + $0x78] sm:$0xff] %v1817
      %2187 = vst [vmem:[%s981 + $0x80] sm:$0xff] %v1818
      %2188 = vst [vmem:[%s981 + $0x88] sm:$0xff] %v1819
      %2189 = vst [vmem:[%s981 + $0x90] sm:$0xff] %v1820
      %2190 = vst [vmem:[%s981 + $0x98] sm:$0xff] %v1821
      %2191 = vst [vmem:[%s981 + $0xa0] sm:$0xff] %v1822
      %2192 = vst [vmem:[%s981 + $0xa8] sm:$0xff] %v1823
      %2193 = vst [vmem:[%s981 + $0xb0] sm:$0xff] %v1824
      %2194 = vst [vmem:[%s981 + $0xb8] sm:$0xff] %v1825
      %2195 = vst [vmem:[%s981 + $0xc0] sm:$0xff] %v1826
      %2196 = vst [vmem:[%s981 + $0xc8] sm:$0xff] %v1827
      %2197 = vst [vmem:[%s981 + $0xd0] sm:$0xff] %v1828
      %2198 = vst [vmem:[%s981 + $0xd8] sm:$0xff] %v1829
      %2199 = vst [vmem:[%s981 + $0xe0] sm:$0xff] %v1830
      %2200 = vst [vmem:[%s981 + $0xe8] sm:$0xff] %v1831
      %2201 = vst [vmem:[%s981 + $0xf0] sm:$0xff] %v1832
      %2202 = vst [vmem:[%s981 + $0xf8] sm:$0xff] %v1833
      %v2203 = vld [vmem:[#allocation2] sm:$0xff]
      %v2204 = vld [vmem:[#allocation2 + $0x8] sm:$0xff]
      %v2205 = vld [vmem:[#allocation2 + $0x10] sm:$0xff]
      %v2206 = vld [vmem:[#allocation2 + $0x18] sm:$0xff]
      %v2207 = vld [vmem:[#allocation2 + $0x20] sm:$0xff]
      %v2208 = vld [vmem:[#allocation2 + $0x28] sm:$0xff]
      %v2209 = vld [vmem:[#allocation2 + $0x30] sm:$0xff]
      %v2210 = vld [vmem:[#allocation2 + $0x38] sm:$0xff]
      %v2211 = vld [vmem:[#allocation2 + $0x40] sm:$0xff]
      %v2212 = vld [vmem:[#allocation2 + $0x48] sm:$0xff]
      %v2213 = vld [vmem:[#allocation2 + $0x50] sm:$0xff]
      %v2214 = vld [vmem:[#allocation2 + $0x58] sm:$0xff]
      %v2215 = vld [vmem:[#allocation2 + $0x60] sm:$0xff]
      %v2216 = vld [vmem:[#allocation2 + $0x68] sm:$0xff]
      %v2217 = vld [vmem:[#allocation2 + $0x70] sm:$0xff]
      %v2218 = vld [vmem:[#allocation2 + $0x78] sm:$0xff]
      %v2219 = vld [vmem:[#allocation2 + $0x80] sm:$0xff]
      %v2220 = vld [vmem:[#allocation2 + $0x88] sm:$0xff]
      %v2221 = vld [vmem:[#allocation2 + $0x90] sm:$0xff]
      %v2222 = vld [vmem:[#allocation2 + $0x98] sm:$0xff]
      %v2223 = vld [vmem:[#allocation2 + $0xa0] sm:$0xff]
      %v2224 = vld [vmem:[#allocation2 + $0xa8] sm:$0xff]
      %v2225 = vld [vmem:[#allocation2 + $0xb0] sm:$0xff]
      %v2226 = vld [vmem:[#allocation2 + $0xb8] sm:$0xff]
      %v2227 = vld [vmem:[#allocation2 + $0xc0] sm:$0xff]
      %v2228 = vld [vmem:[#allocation2 + $0xc8] sm:$0xff]
      %v2229 = vld [vmem:[#allocation2 + $0xd0] sm:$0xff]
      %v2230 = vld [vmem:[#allocation2 + $0xd8] sm:$0xff]
      %v2231 = vld [vmem:[#allocation2 + $0xe0] sm:$0xff]
      %v2232 = vld [vmem:[#allocation2 + $0xe8] sm:$0xff]
      %v2233 = vld [vmem:[#allocation2 + $0xf0] sm:$0xff]
      %v2234 = vld [vmem:[#allocation2 + $0xf8] sm:$0xff]
      %v2235 = vld [vmem:[%s1046] sm:$0xff]
      %v2236 = vld [vmem:[%s1046 + $0x8] sm:$0xff]
      %v2237 = vld [vmem:[%s1046 + $0x10] sm:$0xff]
      %v2238 = vld [vmem:[%s1046 + $0x18] sm:$0xff]
      %v2239 = vld [vmem:[%s1046 + $0x20] sm:$0xff]
      %v2240 = vld [vmem:[%s1046 + $0x28] sm:$0xff]
      %v2241 = vld [vmem:[%s1046 + $0x30] sm:$0xff]
      %v2242 = vld [vmem:[%s1046 + $0x38] sm:$0xff]
      %v2243 = vld [vmem:[%s1046 + $0x40] sm:$0xff]
      %v2244 = vld [vmem:[%s1046 + $0x48] sm:$0xff]
      %v2245 = vld [vmem:[%s1046 + $0x50] sm:$0xff]
      %v2246 = vld [vmem:[%s1046 + $0x58] sm:$0xff]
      %v2247 = vld [vmem:[%s1046 + $0x60] sm:$0xff]
      %v2248 = vld [vmem:[%s1046 + $0x68] sm:$0xff]
      %v2249 = vld [vmem:[%s1046 + $0x70] sm:$0xff]
      %v2250 = vld [vmem:[%s1046 + $0x78] sm:$0xff]
      %v2251 = vld [vmem:[%s1046 + $0x80] sm:$0xff]
      %v2252 = vld [vmem:[%s1046 + $0x88] sm:$0xff]
      %v2253 = vld [vmem:[%s1046 + $0x90] sm:$0xff]
      %v2254 = vld [vmem:[%s1046 + $0x98] sm:$0xff]
      %v2255 = vld [vmem:[%s1046 + $0xa0] sm:$0xff]
      %v2256 = vld [vmem:[%s1046 + $0xa8] sm:$0xff]
      %v2257 = vld [vmem:[%s1046 + $0xb0] sm:$0xff]
      %v2258 = vld [vmem:[%s1046 + $0xb8] sm:$0xff]
      %v2259 = vld [vmem:[%s1046 + $0xc0] sm:$0xff]
      %v2260 = vld [vmem:[%s1046 + $0xc8] sm:$0xff]
      %v2261 = vld [vmem:[%s1046 + $0xd0] sm:$0xff]
      %v2262 = vld [vmem:[%s1046 + $0xd8] sm:$0xff]
      %v2263 = vld [vmem:[%s1046 + $0xe0] sm:$0xff]
      %v2264 = vld [vmem:[%s1046 + $0xe8] sm:$0xff]
      %v2265 = vld [vmem:[%s1046 + $0xf0] sm:$0xff]
      %v2266 = vld [vmem:[%s1046 + $0xf8] sm:$0xff]
      %v2267 = vmax.f32 %v2203, %v2235
      %v2268 = vmax.f32 %v2204, %v2236
      %v2269 = vmax.f32 %v2205, %v2237
      %v2270 = vmax.f32 %v2206, %v2238
      %v2271 = vmax.f32 %v2207, %v2239
      %v2272 = vmax.f32 %v2208, %v2240
      %v2273 = vmax.f32 %v2209, %v2241
      %v2274 = vmax.f32 %v2210, %v2242
      %v2275 = vmax.f32 %v2211, %v2243
      %v2276 = vmax.f32 %v2212, %v2244
      %v2277 = vmax.f32 %v2213, %v2245
      %v2278 = vmax.f32 %v2214, %v2246
      %v2279 = vmax.f32 %v2215, %v2247
      %v2280 = vmax.f32 %v2216, %v2248
      %v2281 = vmax.f32 %v2217, %v2249
      %v2282 = vmax.f32 %v2218, %v2250
      %v2283 = vmax.f32 %v2219, %v2251
      %v2284 = vmax.f32 %v2220, %v2252
      %v2285 = vmax.f32 %v2221, %v2253
      %v2286 = vmax.f32 %v2222, %v2254
      %v2287 = vmax.f32 %v2223, %v2255
      %v2288 = vmax.f32 %v2224, %v2256
      %v2289 = vmax.f32 %v2225, %v2257
      %v2290 = vmax.f32 %v2226, %v2258
      %v2291 = vmax.f32 %v2227, %v2259
      %v2292 = vmax.f32 %v2228, %v2260
      %v2293 = vmax.f32 %v2229, %v2261
      %v2294 = vmax.f32 %v2230, %v2262
      %v2295 = vmax.f32 %v2231, %v2263
      %v2296 = vmax.f32 %v2232, %v2264
      %v2297 = vmax.f32 %v2233, %v2265
      %v2298 = vmax.f32 %v2234, %v2266
      %v2299 = vld [vmem:[%s981] sm:$0xff]
      %v2300 = vld [vmem:[%s981 + $0x8] sm:$0xff]
      %v2301 = vld [vmem:[%s981 + $0x10] sm:$0xff]
      %v2302 = vld [vmem:[%s981 + $0x18] sm:$0xff]
      %v2303 = vld [vmem:[%s981 + $0x20] sm:$0xff]
      %v2304 = vld [vmem:[%s981 + $0x28] sm:$0xff]
      %v2305 = vld [vmem:[%s981 + $0x30] sm:$0xff]
      %v2306 = vld [vmem:[%s981 + $0x38] sm:$0xff]
      %v2307 = vld [vmem:[%s981 + $0x40] sm:$0xff]
      %v2308 = vld [vmem:[%s981 + $0x48] sm:$0xff]
      %v2309 = vld [vmem:[%s981 + $0x50] sm:$0xff]
      %v2310 = vld [vmem:[%s981 + $0x58] sm:$0xff]
      %v2311 = vld [vmem:[%s981 + $0x60] sm:$0xff]
      %v2312 = vld [vmem:[%s981 + $0x68] sm:$0xff]
      %v2313 = vld [vmem:[%s981 + $0x70] sm:$0xff]
      %v2314 = vld [vmem:[%s981 + $0x78] sm:$0xff]
      %v2315 = vld [vmem:[%s981 + $0x80] sm:$0xff]
      %v2316 = vld [vmem:[%s981 + $0x88] sm:$0xff]
      %v2317 = vld [vmem:[%s981 + $0x90] sm:$0xff]
      %v2318 = vld [vmem:[%s981 + $0x98] sm:$0xff]
      %v2319 = vld [vmem:[%s981 + $0xa0] sm:$0xff]
      %v2320 = vld [vmem:[%s981 + $0xa8] sm:$0xff]
      %v2321 = vld [vmem:[%s981 + $0xb0] sm:$0xff]
      %v2322 = vld [vmem:[%s981 + $0xb8] sm:$0xff]
      %v2323 = vld [vmem:[%s981 + $0xc0] sm:$0xff]
      %v2324 = vld [vmem:[%s981 + $0xc8] sm:$0xff]
      %v2325 = vld [vmem:[%s981 + $0xd0] sm:$0xff]
      %v2326 = vld [vmem:[%s981 + $0xd8] sm:$0xff]
      %v2327 = vld [vmem:[%s981 + $0xe0] sm:$0xff]
      %v2328 = vld [vmem:[%s981 + $0xe8] sm:$0xff]
      %v2329 = vld [vmem:[%s981 + $0xf0] sm:$0xff]
      %v2330 = vld [vmem:[%s981 + $0xf8] sm:$0xff]
      %v2331 = vmax.f32 %v2267, %v2299
      %v2332 = vmax.f32 %v2268, %v2300
      %v2333 = vmax.f32 %v2269, %v2301
      %v2334 = vmax.f32 %v2270, %v2302
      %v2335 = vmax.f32 %v2271, %v2303
      %v2336 = vmax.f32 %v2272, %v2304
      %v2337 = vmax.f32 %v2273, %v2305
      %v2338 = vmax.f32 %v2274, %v2306
      %v2339 = vmax.f32 %v2275, %v2307
      %v2340 = vmax.f32 %v2276, %v2308
      %v2341 = vmax.f32 %v2277, %v2309
      %v2342 = vmax.f32 %v2278, %v2310
      %v2343 = vmax.f32 %v2279, %v2311
      %v2344 = vmax.f32 %v2280, %v2312
      %v2345 = vmax.f32 %v2281, %v2313
      %v2346 = vmax.f32 %v2282, %v2314
      %v2347 = vmax.f32 %v2283, %v2315
      %v2348 = vmax.f32 %v2284, %v2316
      %v2349 = vmax.f32 %v2285, %v2317
      %v2350 = vmax.f32 %v2286, %v2318
      %v2351 = vmax.f32 %v2287, %v2319
      %v2352 = vmax.f32 %v2288, %v2320
      %v2353 = vmax.f32 %v2289, %v2321
      %v2354 = vmax.f32 %v2290, %v2322
      %v2355 = vmax.f32 %v2291, %v2323
      %v2356 = vmax.f32 %v2292, %v2324
      %v2357 = vmax.f32 %v2293, %v2325
      %v2358 = vmax.f32 %v2294, %v2326
      %v2359 = vmax.f32 %v2295, %v2327
      %v2360 = vmax.f32 %v2296, %v2328
      %v2361 = vmax.f32 %v2297, %v2329
      %v2362 = vmax.f32 %v2298, %v2330
      %v2363 = vld [vmem:[%s1175] sm:$0xff]
      %v2364 = vld [vmem:[%s1175 + $0x8] sm:$0xff]
      %v2365 = vld [vmem:[%s1175 + $0x10] sm:$0xff]
      %v2366 = vld [vmem:[%s1175 + $0x18] sm:$0xff]
      %v2367 = vld [vmem:[%s1175 + $0x20] sm:$0xff]
      %v2368 = vld [vmem:[%s1175 + $0x28] sm:$0xff]
      %v2369 = vld [vmem:[%s1175 + $0x30] sm:$0xff]
      %v2370 = vld [vmem:[%s1175 + $0x38] sm:$0xff]
      %v2371 = vld [vmem:[%s1175 + $0x40] sm:$0xff]
      %v2372 = vld [vmem:[%s1175 + $0x48] sm:$0xff]
      %v2373 = vld [vmem:[%s1175 + $0x50] sm:$0xff]
      %v2374 = vld [vmem:[%s1175 + $0x58] sm:$0xff]
      %v2375 = vld [vmem:[%s1175 + $0x60] sm:$0xff]
      %v2376 = vld [vmem:[%s1175 + $0x68] sm:$0xff]
      %v2377 = vld [vmem:[%s1175 + $0x70] sm:$0xff]
      %v2378 = vld [vmem:[%s1175 + $0x78] sm:$0xff]
      %v2379 = vld [vmem:[%s1175 + $0x80] sm:$0xff]
      %v2380 = vld [vmem:[%s1175 + $0x88] sm:$0xff]
      %v2381 = vld [vmem:[%s1175 + $0x90] sm:$0xff]
      %v2382 = vld [vmem:[%s1175 + $0x98] sm:$0xff]
      %v2383 = vld [vmem:[%s1175 + $0xa0] sm:$0xff]
      %v2384 = vld [vmem:[%s1175 + $0xa8] sm:$0xff]
      %v2385 = vld [vmem:[%s1175 + $0xb0] sm:$0xff]
      %v2386 = vld [vmem:[%s1175 + $0xb8] sm:$0xff]
      %v2387 = vld [vmem:[%s1175 + $0xc0] sm:$0xff]
      %v2388 = vld [vmem:[%s1175 + $0xc8] sm:$0xff]
      %v2389 = vld [vmem:[%s1175 + $0xd0] sm:$0xff]
      %v2390 = vld [vmem:[%s1175 + $0xd8] sm:$0xff]
      %v2391 = vld [vmem:[%s1175 + $0xe0] sm:$0xff]
      %v2392 = vld [vmem:[%s1175 + $0xe8] sm:$0xff]
      %v2393 = vld [vmem:[%s1175 + $0xf0] sm:$0xff]
      %v2394 = vld [vmem:[%s1175 + $0xf8] sm:$0xff]
      %v2395 = vmax.f32 %v2331, %v2363
      %v2396 = vmax.f32 %v2332, %v2364
      %v2397 = vmax.f32 %v2333, %v2365
      %v2398 = vmax.f32 %v2334, %v2366
      %v2399 = vmax.f32 %v2335, %v2367
      %v2400 = vmax.f32 %v2336, %v2368
      %v2401 = vmax.f32 %v2337, %v2369
      %v2402 = vmax.f32 %v2338, %v2370
      %v2403 = vmax.f32 %v2339, %v2371
      %v2404 = vmax.f32 %v2340, %v2372
      %v2405 = vmax.f32 %v2341, %v2373
      %v2406 = vmax.f32 %v2342, %v2374
      %v2407 = vmax.f32 %v2343, %v2375
      %v2408 = vmax.f32 %v2344, %v2376
      %v2409 = vmax.f32 %v2345, %v2377
      %v2410 = vmax.f32 %v2346, %v2378
      %v2411 = vmax.f32 %v2347, %v2379
      %v2412 = vmax.f32 %v2348, %v2380
      %v2413 = vmax.f32 %v2349, %v2381
      %v2414 = vmax.f32 %v2350, %v2382
      %v2415 = vmax.f32 %v2351, %v2383
      %v2416 = vmax.f32 %v2352, %v2384
      %v2417 = vmax.f32 %v2353, %v2385
      %v2418 = vmax.f32 %v2354, %v2386
      %v2419 = vmax.f32 %v2355, %v2387
      %v2420 = vmax.f32 %v2356, %v2388
      %v2421 = vmax.f32 %v2357, %v2389
      %v2422 = vmax.f32 %v2358, %v2390
      %v2423 = vmax.f32 %v2359, %v2391
      %v2424 = vmax.f32 %v2360, %v2392
      %v2425 = vmax.f32 %v2361, %v2393
      %v2426 = vmax.f32 %v2362, %v2394
      %v2427 = vld [vmem:[%s1240] sm:$0xff]
      %v2428 = vld [vmem:[%s1240 + $0x8] sm:$0xff]
      %v2429 = vld [vmem:[%s1240 + $0x10] sm:$0xff]
      %v2430 = vld [vmem:[%s1240 + $0x18] sm:$0xff]
      %v2431 = vld [vmem:[%s1240 + $0x20] sm:$0xff]
      %v2432 = vld [vmem:[%s1240 + $0x28] sm:$0xff]
      %v2433 = vld [vmem:[%s1240 + $0x30] sm:$0xff]
      %v2434 = vld [vmem:[%s1240 + $0x38] sm:$0xff]
      %v2435 = vld [vmem:[%s1240 + $0x40] sm:$0xff]
      %v2436 = vld [vmem:[%s1240 + $0x48] sm:$0xff]
      %v2437 = vld [vmem:[%s1240 + $0x50] sm:$0xff]
      %v2438 = vld [vmem:[%s1240 + $0x58] sm:$0xff]
      %v2439 = vld [vmem:[%s1240 + $0x60] sm:$0xff]
      %v2440 = vld [vmem:[%s1240 + $0x68] sm:$0xff]
      %v2441 = vld [vmem:[%s1240 + $0x70] sm:$0xff]
      %v2442 = vld [vmem:[%s1240 + $0x78] sm:$0xff]
      %v2443 = vld [vmem:[%s1240 + $0x80] sm:$0xff]
      %v2444 = vld [vmem:[%s1240 + $0x88] sm:$0xff]
      %v2445 = vld [vmem:[%s1240 + $0x90] sm:$0xff]
      %v2446 = vld [vmem:[%s1240 + $0x98] sm:$0xff]
      %v2447 = vld [vmem:[%s1240 + $0xa0] sm:$0xff]
      %v2448 = vld [vmem:[%s1240 + $0xa8] sm:$0xff]
      %v2449 = vld [vmem:[%s1240 + $0xb0] sm:$0xff]
      %v2450 = vld [vmem:[%s1240 + $0xb8] sm:$0xff]
      %v2451 = vld [vmem:[%s1240 + $0xc0] sm:$0xff]
      %v2452 = vld [vmem:[%s1240 + $0xc8] sm:$0xff]
      %v2453 = vld [vmem:[%s1240 + $0xd0] sm:$0xff]
      %v2454 = vld [vmem:[%s1240 + $0xd8] sm:$0xff]
      %v2455 = vld [vmem:[%s1240 + $0xe0] sm:$0xff]
      %v2456 = vld [vmem:[%s1240 + $0xe8] sm:$0xff]
      %v2457 = vld [vmem:[%s1240 + $0xf0] sm:$0xff]
      %v2458 = vld [vmem:[%s1240 + $0xf8] sm:$0xff]
      %v2459 = vmax.f32 %v2395, %v2427
      %v2460 = vmax.f32 %v2396, %v2428
      %v2461 = vmax.f32 %v2397, %v2429
      %v2462 = vmax.f32 %v2398, %v2430
      %v2463 = vmax.f32 %v2399, %v2431
      %v2464 = vmax.f32 %v2400, %v2432
      %v2465 = vmax.f32 %v2401, %v2433
      %v2466 = vmax.f32 %v2402, %v2434
      %v2467 = vmax.f32 %v2403, %v2435
      %v2468 = vmax.f32 %v2404, %v2436
      %v2469 = vmax.f32 %v2405, %v2437
      %v2470 = vmax.f32 %v2406, %v2438
      %v2471 = vmax.f32 %v2407, %v2439
      %v2472 = vmax.f32 %v2408, %v2440
      %v2473 = vmax.f32 %v2409, %v2441
      %v2474 = vmax.f32 %v2410, %v2442
      %v2475 = vmax.f32 %v2411, %v2443
      %v2476 = vmax.f32 %v2412, %v2444
      %v2477 = vmax.f32 %v2413, %v2445
      %v2478 = vmax.f32 %v2414, %v2446
      %v2479 = vmax.f32 %v2415, %v2447
      %v2480 = vmax.f32 %v2416, %v2448
      %v2481 = vmax.f32 %v2417, %v2449
      %v2482 = vmax.f32 %v2418, %v2450
      %v2483 = vmax.f32 %v2419, %v2451
      %v2484 = vmax.f32 %v2420, %v2452
      %v2485 = vmax.f32 %v2421, %v2453
      %v2486 = vmax.f32 %v2422, %v2454
      %v2487 = vmax.f32 %v2423, %v2455
      %v2488 = vmax.f32 %v2424, %v2456
      %v2489 = vmax.f32 %v2425, %v2457
      %v2490 = vmax.f32 %v2426, %v2458
      %v2491 = vrot.slane %v2459, 1
      %v2492 = vrot.slane %v2461, 1
      %v2493 = vrot.slane %v2463, 1
      %v2494 = vrot.slane %v2465, 1
      %v2495 = vrot.slane %v2467, 1
      %v2496 = vrot.slane %v2469, 1
      %v2497 = vrot.slane %v2471, 1
      %v2498 = vrot.slane %v2473, 1
      %v2499 = vrot.slane %v2475, 1
      %v2500 = vrot.slane %v2477, 1
      %v2501 = vrot.slane %v2479, 1
      %v2502 = vrot.slane %v2481, 1
      %v2503 = vrot.slane %v2483, 1
      %v2504 = vrot.slane %v2485, 1
      %v2505 = vrot.slane %v2487, 1
      %v2506 = vrot.slane %v2489, 1
      %v2507 = vrot.slane %v2460, 1
      %v2508 = vrot.slane %v2462, 1
      %v2509 = vrot.slane %v2464, 1
      %v2510 = vrot.slane %v2466, 1
      %v2511 = vrot.slane %v2468, 1
      %v2512 = vrot.slane %v2470, 1
      %v2513 = vrot.slane %v2472, 1
      %v2514 = vrot.slane %v2474, 1
      %v2515 = vrot.slane %v2476, 1
      %v2516 = vrot.slane %v2478, 1
      %v2517 = vrot.slane %v2480, 1
      %v2518 = vrot.slane %v2482, 1
      %v2519 = vrot.slane %v2484, 1
      %v2520 = vrot.slane %v2486, 1
      %v2521 = vrot.slane %v2488, 1
      %v2522 = vrot.slane %v2490, 1
      %v2523 = vsel %vm1339, %v2491, %v2507
      %v2524 = vsel %vm1339, %v2492, %v2508
      %v2525 = vsel %vm1339, %v2493, %v2509
      %v2526 = vsel %vm1339, %v2494, %v2510
      %v2527 = vsel %vm1339, %v2495, %v2511
      %v2528 = vsel %vm1339, %v2496, %v2512
      %v2529 = vsel %vm1339, %v2497, %v2513
      %v2530 = vsel %vm1339, %v2498, %v2514
      %v2531 = vsel %vm1339, %v2499, %v2515
      %v2532 = vsel %vm1339, %v2500, %v2516
      %v2533 = vsel %vm1339, %v2501, %v2517
      %v2534 = vsel %vm1339, %v2502, %v2518
      %v2535 = vsel %vm1339, %v2503, %v2519
      %v2536 = vsel %vm1339, %v2504, %v2520
      %v2537 = vsel %vm1339, %v2505, %v2521
      %v2538 = vsel %vm1339, %v2506, %v2522
      %v2539 = vsel %vm1339, %v2507, %v2491
      %v2540 = vsel %vm1339, %v2508, %v2492
      %v2541 = vsel %vm1339, %v2509, %v2493
      %v2542 = vsel %vm1339, %v2510, %v2494
      %v2543 = vsel %vm1339, %v2511, %v2495
      %v2544 = vsel %vm1339, %v2512, %v2496
      %v2545 = vsel %vm1339, %v2513, %v2497
      %v2546 = vsel %vm1339, %v2514, %v2498
      %v2547 = vsel %vm1339, %v2515, %v2499
      %v2548 = vsel %vm1339, %v2516, %v2500
      %v2549 = vsel %vm1339, %v2517, %v2501
      %v2550 = vsel %vm1339, %v2518, %v2502
      %v2551 = vsel %vm1339, %v2519, %v2503
      %v2552 = vsel %vm1339, %v2520, %v2504
      %v2553 = vsel %vm1339, %v2521, %v2505
      %v2554 = vsel %vm1339, %v2522, %v2506
      %v2555 = vld [vmem:[%s5] sm:$0xff]
      %v2556 = vld [vmem:[%s5 + $0x8] sm:$0xff]
      %v2557 = vadd.f32 %v2523, %v2555
      %v2558 = vadd.f32 %v2539, %v2556
      %v2559 = vadd.f32 %v2524, %v2555
      %v2560 = vadd.f32 %v2540, %v2556
      %v2561 = vadd.f32 %v2525, %v2555
      %v2562 = vadd.f32 %v2541, %v2556
      %v2563 = vadd.f32 %v2526, %v2555
      %v2564 = vadd.f32 %v2542, %v2556
      %v2565 = vadd.f32 %v2527, %v2555
      %v2566 = vadd.f32 %v2543, %v2556
      %v2567 = vadd.f32 %v2528, %v2555
      %v2568 = vadd.f32 %v2544, %v2556
      %v2569 = vadd.f32 %v2529, %v2555
      %v2570 = vadd.f32 %v2545, %v2556
      %v2571 = vadd.f32 %v2530, %v2555
      %v2572 = vadd.f32 %v2546, %v2556
      %v2573 = vadd.f32 %v2531, %v2555
      %v2574 = vadd.f32 %v2547, %v2556
      %v2575 = vadd.f32 %v2532, %v2555
      %v2576 = vadd.f32 %v2548, %v2556
      %v2577 = vadd.f32 %v2533, %v2555
      %v2578 = vadd.f32 %v2549, %v2556
      %v2579 = vadd.f32 %v2534, %v2555
      %v2580 = vadd.f32 %v2550, %v2556
      %v2581 = vadd.f32 %v2535, %v2555
      %v2582 = vadd.f32 %v2551, %v2556
      %v2583 = vadd.f32 %v2536, %v2555
      %v2584 = vadd.f32 %v2552, %v2556
      %v2585 = vadd.f32 %v2537, %v2555
      %v2586 = vadd.f32 %v2553, %v2556
      %v2587 = vadd.f32 %v2538, %v2555
      %v2588 = vadd.f32 %v2554, %v2556
      %v2589 = vmax.f32 %v2459, %v2557
      %v2590 = vmax.f32 %v2460, %v2558
      %v2591 = vmax.f32 %v2461, %v2559
      %v2592 = vmax.f32 %v2462, %v2560
      %v2593 = vmax.f32 %v2463, %v2561
      %v2594 = vmax.f32 %v2464, %v2562
      %v2595 = vmax.f32 %v2465, %v2563
      %v2596 = vmax.f32 %v2466, %v2564
      %v2597 = vmax.f32 %v2467, %v2565
      %v2598 = vmax.f32 %v2468, %v2566
      %v2599 = vmax.f32 %v2469, %v2567
      %v2600 = vmax.f32 %v2470, %v2568
      %v2601 = vmax.f32 %v2471, %v2569
      %v2602 = vmax.f32 %v2472, %v2570
      %v2603 = vmax.f32 %v2473, %v2571
      %v2604 = vmax.f32 %v2474, %v2572
      %v2605 = vmax.f32 %v2475, %v2573
      %v2606 = vmax.f32 %v2476, %v2574
      %v2607 = vmax.f32 %v2477, %v2575
      %v2608 = vmax.f32 %v2478, %v2576
      %v2609 = vmax.f32 %v2479, %v2577
      %v2610 = vmax.f32 %v2480, %v2578
      %v2611 = vmax.f32 %v2481, %v2579
      %v2612 = vmax.f32 %v2482, %v2580
      %v2613 = vmax.f32 %v2483, %v2581
      %v2614 = vmax.f32 %v2484, %v2582
      %v2615 = vmax.f32 %v2485, %v2583
      %v2616 = vmax.f32 %v2486, %v2584
      %v2617 = vmax.f32 %v2487, %v2585
      %v2618 = vmax.f32 %v2488, %v2586
      %v2619 = vmax.f32 %v2489, %v2587
      %v2620 = vmax.f32 %v2490, %v2588
      %v2621 = vrot.slane %v2459, 2
      %v2622 = vrot.slane %v2461, 2
      %v2623 = vrot.slane %v2463, 2
      %v2624 = vrot.slane %v2465, 2
      %v2625 = vrot.slane %v2467, 2
      %v2626 = vrot.slane %v2469, 2
      %v2627 = vrot.slane %v2471, 2
      %v2628 = vrot.slane %v2473, 2
      %v2629 = vrot.slane %v2475, 2
      %v2630 = vrot.slane %v2477, 2
      %v2631 = vrot.slane %v2479, 2
      %v2632 = vrot.slane %v2481, 2
      %v2633 = vrot.slane %v2483, 2
      %v2634 = vrot.slane %v2485, 2
      %v2635 = vrot.slane %v2487, 2
      %v2636 = vrot.slane %v2489, 2
      %v2637 = vrot.slane %v2460, 2
      %v2638 = vrot.slane %v2462, 2
      %v2639 = vrot.slane %v2464, 2
      %v2640 = vrot.slane %v2466, 2
      %v2641 = vrot.slane %v2468, 2
      %v2642 = vrot.slane %v2470, 2
      %v2643 = vrot.slane %v2472, 2
      %v2644 = vrot.slane %v2474, 2
      %v2645 = vrot.slane %v2476, 2
      %v2646 = vrot.slane %v2478, 2
      %v2647 = vrot.slane %v2480, 2
      %v2648 = vrot.slane %v2482, 2
      %v2649 = vrot.slane %v2484, 2
      %v2650 = vrot.slane %v2486, 2
      %v2651 = vrot.slane %v2488, 2
      %v2652 = vrot.slane %v2490, 2
      %v2653 = vsel %vm1470, %v2621, %v2637
      %v2654 = vsel %vm1470, %v2622, %v2638
      %v2655 = vsel %vm1470, %v2623, %v2639
      %v2656 = vsel %vm1470, %v2624, %v2640
      %v2657 = vsel %vm1470, %v2625, %v2641
      %v2658 = vsel %vm1470, %v2626, %v2642
      %v2659 = vsel %vm1470, %v2627, %v2643
      %v2660 = vsel %vm1470, %v2628, %v2644
      %v2661 = vsel %vm1470, %v2629, %v2645
      %v2662 = vsel %vm1470, %v2630, %v2646
      %v2663 = vsel %vm1470, %v2631, %v2647
      %v2664 = vsel %vm1470, %v2632, %v2648
      %v2665 = vsel %vm1470, %v2633, %v2649
      %v2666 = vsel %vm1470, %v2634, %v2650
      %v2667 = vsel %vm1470, %v2635, %v2651
      %v2668 = vsel %vm1470, %v2636, %v2652
      %v2669 = vsel %vm1470, %v2637, %v2621
      %v2670 = vsel %vm1470, %v2638, %v2622
      %v2671 = vsel %vm1470, %v2639, %v2623
      %v2672 = vsel %vm1470, %v2640, %v2624
      %v2673 = vsel %vm1470, %v2641, %v2625
      %v2674 = vsel %vm1470, %v2642, %v2626
      %v2675 = vsel %vm1470, %v2643, %v2627
      %v2676 = vsel %vm1470, %v2644, %v2628
      %v2677 = vsel %vm1470, %v2645, %v2629
      %v2678 = vsel %vm1470, %v2646, %v2630
      %v2679 = vsel %vm1470, %v2647, %v2631
      %v2680 = vsel %vm1470, %v2648, %v2632
      %v2681 = vsel %vm1470, %v2649, %v2633
      %v2682 = vsel %vm1470, %v2650, %v2634
      %v2683 = vsel %vm1470, %v2651, %v2635
      %v2684 = vsel %vm1470, %v2652, %v2636
      %v2685 = vld [vmem:[%s1503] sm:$0xff]
      %v2686 = vld [vmem:[%s1503 + $0x8] sm:$0xff]
      %v2687 = vadd.f32 %v2653, %v2685
      %v2688 = vadd.f32 %v2669, %v2686
      %v2689 = vadd.f32 %v2654, %v2685
      %v2690 = vadd.f32 %v2670, %v2686
      %v2691 = vadd.f32 %v2655, %v2685
      %v2692 = vadd.f32 %v2671, %v2686
      %v2693 = vadd.f32 %v2656, %v2685
      %v2694 = vadd.f32 %v2672, %v2686
      %v2695 = vadd.f32 %v2657, %v2685
      %v2696 = vadd.f32 %v2673, %v2686
      %v2697 = vadd.f32 %v2658, %v2685
      %v2698 = vadd.f32 %v2674, %v2686
      %v2699 = vadd.f32 %v2659, %v2685
      %v2700 = vadd.f32 %v2675, %v2686
      %v2701 = vadd.f32 %v2660, %v2685
      %v2702 = vadd.f32 %v2676, %v2686
      %v2703 = vadd.f32 %v2661, %v2685
      %v2704 = vadd.f32 %v2677, %v2686
      %v2705 = vadd.f32 %v2662, %v2685
      %v2706 = vadd.f32 %v2678, %v2686
      %v2707 = vadd.f32 %v2663, %v2685
      %v2708 = vadd.f32 %v2679, %v2686
      %v2709 = vadd.f32 %v2664, %v2685
      %v2710 = vadd.f32 %v2680, %v2686
      %v2711 = vadd.f32 %v2665, %v2685
      %v2712 = vadd.f32 %v2681, %v2686
      %v2713 = vadd.f32 %v2666, %v2685
      %v2714 = vadd.f32 %v2682, %v2686
      %v2715 = vadd.f32 %v2667, %v2685
      %v2716 = vadd.f32 %v2683, %v2686
      %v2717 = vadd.f32 %v2668, %v2685
      %v2718 = vadd.f32 %v2684, %v2686
      %v2719 = vmax.f32 %v2589, %v2687
      %v2720 = vmax.f32 %v2590, %v2688
      %v2721 = vmax.f32 %v2591, %v2689
      %v2722 = vmax.f32 %v2592, %v2690
      %v2723 = vmax.f32 %v2593, %v2691
      %v2724 = vmax.f32 %v2594, %v2692
      %v2725 = vmax.f32 %v2595, %v2693
      %v2726 = vmax.f32 %v2596, %v2694
      %v2727 = vmax.f32 %v2597, %v2695
      %v2728 = vmax.f32 %v2598, %v2696
      %v2729 = vmax.f32 %v2599, %v2697
      %v2730 = vmax.f32 %v2600, %v2698
      %v2731 = vmax.f32 %v2601, %v2699
      %v2732 = vmax.f32 %v2602, %v2700
      %v2733 = vmax.f32 %v2603, %v2701
      %v2734 = vmax.f32 %v2604, %v2702
      %v2735 = vmax.f32 %v2605, %v2703
      %v2736 = vmax.f32 %v2606, %v2704
      %v2737 = vmax.f32 %v2607, %v2705
      %v2738 = vmax.f32 %v2608, %v2706
      %v2739 = vmax.f32 %v2609, %v2707
      %v2740 = vmax.f32 %v2610, %v2708
      %v2741 = vmax.f32 %v2611, %v2709
      %v2742 = vmax.f32 %v2612, %v2710
      %v2743 = vmax.f32 %v2613, %v2711
      %v2744 = vmax.f32 %v2614, %v2712
      %v2745 = vmax.f32 %v2615, %v2713
      %v2746 = vmax.f32 %v2616, %v2714
      %v2747 = vmax.f32 %v2617, %v2715
      %v2748 = vmax.f32 %v2618, %v2716
      %v2749 = vmax.f32 %v2619, %v2717
      %v2750 = vmax.f32 %v2620, %v2718
      %v2751 = vrot.slane %v2459, 7
      %v2752 = vrot.slane %v2461, 7
      %v2753 = vrot.slane %v2463, 7
      %v2754 = vrot.slane %v2465, 7
      %v2755 = vrot.slane %v2467, 7
      %v2756 = vrot.slane %v2469, 7
      %v2757 = vrot.slane %v2471, 7
      %v2758 = vrot.slane %v2473, 7
      %v2759 = vrot.slane %v2475, 7
      %v2760 = vrot.slane %v2477, 7
      %v2761 = vrot.slane %v2479, 7
      %v2762 = vrot.slane %v2481, 7
      %v2763 = vrot.slane %v2483, 7
      %v2764 = vrot.slane %v2485, 7
      %v2765 = vrot.slane %v2487, 7
      %v2766 = vrot.slane %v2489, 7
      %v2767 = vrot.slane %v2460, 7
      %v2768 = vrot.slane %v2462, 7
      %v2769 = vrot.slane %v2464, 7
      %v2770 = vrot.slane %v2466, 7
      %v2771 = vrot.slane %v2468, 7
      %v2772 = vrot.slane %v2470, 7
      %v2773 = vrot.slane %v2472, 7
      %v2774 = vrot.slane %v2474, 7
      %v2775 = vrot.slane %v2476, 7
      %v2776 = vrot.slane %v2478, 7
      %v2777 = vrot.slane %v2480, 7
      %v2778 = vrot.slane %v2482, 7
      %v2779 = vrot.slane %v2484, 7
      %v2780 = vrot.slane %v2486, 7
      %v2781 = vrot.slane %v2488, 7
      %v2782 = vrot.slane %v2490, 7
      %v2783 = vsel %vm1602, %v2751, %v2767
      %v2784 = vsel %vm1602, %v2752, %v2768
      %v2785 = vsel %vm1602, %v2753, %v2769
      %v2786 = vsel %vm1602, %v2754, %v2770
      %v2787 = vsel %vm1602, %v2755, %v2771
      %v2788 = vsel %vm1602, %v2756, %v2772
      %v2789 = vsel %vm1602, %v2757, %v2773
      %v2790 = vsel %vm1602, %v2758, %v2774
      %v2791 = vsel %vm1602, %v2759, %v2775
      %v2792 = vsel %vm1602, %v2760, %v2776
      %v2793 = vsel %vm1602, %v2761, %v2777
      %v2794 = vsel %vm1602, %v2762, %v2778
      %v2795 = vsel %vm1602, %v2763, %v2779
      %v2796 = vsel %vm1602, %v2764, %v2780
      %v2797 = vsel %vm1602, %v2765, %v2781
      %v2798 = vsel %vm1602, %v2766, %v2782
      %v2799 = vsel %vm1602, %v2767, %v2751
      %v2800 = vsel %vm1602, %v2768, %v2752
      %v2801 = vsel %vm1602, %v2769, %v2753
      %v2802 = vsel %vm1602, %v2770, %v2754
      %v2803 = vsel %vm1602, %v2771, %v2755
      %v2804 = vsel %vm1602, %v2772, %v2756
      %v2805 = vsel %vm1602, %v2773, %v2757
      %v2806 = vsel %vm1602, %v2774, %v2758
      %v2807 = vsel %vm1602, %v2775, %v2759
      %v2808 = vsel %vm1602, %v2776, %v2760
      %v2809 = vsel %vm1602, %v2777, %v2761
      %v2810 = vsel %vm1602, %v2778, %v2762
      %v2811 = vsel %vm1602, %v2779, %v2763
      %v2812 = vsel %vm1602, %v2780, %v2764
      %v2813 = vsel %vm1602, %v2781, %v2765
      %v2814 = vsel %vm1602, %v2782, %v2766
      %v2815 = vld [vmem:[%s1635] sm:$0xff]
      %v2816 = vld [vmem:[%s1635 + $0x8] sm:$0xff]
      %v2817 = vadd.f32 %v2799, %v2815
      %v2818 = vadd.f32 %v2783, %v2816
      %v2819 = vadd.f32 %v2800, %v2815
      %v2820 = vadd.f32 %v2784, %v2816
      %v2821 = vadd.f32 %v2801, %v2815
      %v2822 = vadd.f32 %v2785, %v2816
      %v2823 = vadd.f32 %v2802, %v2815
      %v2824 = vadd.f32 %v2786, %v2816
      %v2825 = vadd.f32 %v2803, %v2815
      %v2826 = vadd.f32 %v2787, %v2816
      %v2827 = vadd.f32 %v2804, %v2815
      %v2828 = vadd.f32 %v2788, %v2816
      %v2829 = vadd.f32 %v2805, %v2815
      %v2830 = vadd.f32 %v2789, %v2816
      %v2831 = vadd.f32 %v2806, %v2815
      %v2832 = vadd.f32 %v2790, %v2816
      %v2833 = vadd.f32 %v2807, %v2815
      %v2834 = vadd.f32 %v2791, %v2816
      %v2835 = vadd.f32 %v2808, %v2815
      %v2836 = vadd.f32 %v2792, %v2816
      %v2837 = vadd.f32 %v2809, %v2815
      %v2838 = vadd.f32 %v2793, %v2816
      %v2839 = vadd.f32 %v2810, %v2815
      %v2840 = vadd.f32 %v2794, %v2816
      %v2841 = vadd.f32 %v2811, %v2815
      %v2842 = vadd.f32 %v2795, %v2816
      %v2843 = vadd.f32 %v2812, %v2815
      %v2844 = vadd.f32 %v2796, %v2816
      %v2845 = vadd.f32 %v2813, %v2815
      %v2846 = vadd.f32 %v2797, %v2816
      %v2847 = vadd.f32 %v2814, %v2815
      %v2848 = vadd.f32 %v2798, %v2816
      %v2849 = vmax.f32 %v2719, %v2817
      %v2850 = vmax.f32 %v2720, %v2818
      %v2851 = vmax.f32 %v2721, %v2819
      %v2852 = vmax.f32 %v2722, %v2820
      %v2853 = vmax.f32 %v2723, %v2821
      %v2854 = vmax.f32 %v2724, %v2822
      %v2855 = vmax.f32 %v2725, %v2823
      %v2856 = vmax.f32 %v2726, %v2824
      %v2857 = vmax.f32 %v2727, %v2825
      %v2858 = vmax.f32 %v2728, %v2826
      %v2859 = vmax.f32 %v2729, %v2827
      %v2860 = vmax.f32 %v2730, %v2828
      %v2861 = vmax.f32 %v2731, %v2829
      %v2862 = vmax.f32 %v2732, %v2830
      %v2863 = vmax.f32 %v2733, %v2831
      %v2864 = vmax.f32 %v2734, %v2832
      %v2865 = vmax.f32 %v2735, %v2833
      %v2866 = vmax.f32 %v2736, %v2834
      %v2867 = vmax.f32 %v2737, %v2835
      %v2868 = vmax.f32 %v2738, %v2836
      %v2869 = vmax.f32 %v2739, %v2837
      %v2870 = vmax.f32 %v2740, %v2838
      %v2871 = vmax.f32 %v2741, %v2839
      %v2872 = vmax.f32 %v2742, %v2840
      %v2873 = vmax.f32 %v2743, %v2841
      %v2874 = vmax.f32 %v2744, %v2842
      %v2875 = vmax.f32 %v2745, %v2843
      %v2876 = vmax.f32 %v2746, %v2844
      %v2877 = vmax.f32 %v2747, %v2845
      %v2878 = vmax.f32 %v2748, %v2846
      %v2879 = vmax.f32 %v2749, %v2847
      %v2880 = vmax.f32 %v2750, %v2848
      %v2881 = vrot.slane %v2459, 6
      %v2882 = vrot.slane %v2461, 6
      %v2883 = vrot.slane %v2463, 6
      %v2884 = vrot.slane %v2465, 6
      %v2885 = vrot.slane %v2467, 6
      %v2886 = vrot.slane %v2469, 6
      %v2887 = vrot.slane %v2471, 6
      %v2888 = vrot.slane %v2473, 6
      %v2889 = vrot.slane %v2475, 6
      %v2890 = vrot.slane %v2477, 6
      %v2891 = vrot.slane %v2479, 6
      %v2892 = vrot.slane %v2481, 6
      %v2893 = vrot.slane %v2483, 6
      %v2894 = vrot.slane %v2485, 6
      %v2895 = vrot.slane %v2487, 6
      %v2896 = vrot.slane %v2489, 6
      %v2897 = vrot.slane %v2460, 6
      %v2898 = vrot.slane %v2462, 6
      %v2899 = vrot.slane %v2464, 6
      %v2900 = vrot.slane %v2466, 6
      %v2901 = vrot.slane %v2468, 6
      %v2902 = vrot.slane %v2470, 6
      %v2903 = vrot.slane %v2472, 6
      %v2904 = vrot.slane %v2474, 6
      %v2905 = vrot.slane %v2476, 6
      %v2906 = vrot.slane %v2478, 6
      %v2907 = vrot.slane %v2480, 6
      %v2908 = vrot.slane %v2482, 6
      %v2909 = vrot.slane %v2484, 6
      %v2910 = vrot.slane %v2486, 6
      %v2911 = vrot.slane %v2488, 6
      %v2912 = vrot.slane %v2490, 6
      %v2913 = vsel %vm1734, %v2881, %v2897
      %v2914 = vsel %vm1734, %v2882, %v2898
      %v2915 = vsel %vm1734, %v2883, %v2899
      %v2916 = vsel %vm1734, %v2884, %v2900
      %v2917 = vsel %vm1734, %v2885, %v2901
      %v2918 = vsel %vm1734, %v2886, %v2902
      %v2919 = vsel %vm1734, %v2887, %v2903
      %v2920 = vsel %vm1734, %v2888, %v2904
      %v2921 = vsel %vm1734, %v2889, %v2905
      %v2922 = vsel %vm1734, %v2890, %v2906
      %v2923 = vsel %vm1734, %v2891, %v2907
      %v2924 = vsel %vm1734, %v2892, %v2908
      %v2925 = vsel %vm1734, %v2893, %v2909
      %v2926 = vsel %vm1734, %v2894, %v2910
      %v2927 = vsel %vm1734, %v2895, %v2911
      %v2928 = vsel %vm1734, %v2896, %v2912
      %v2929 = vsel %vm1734, %v2897, %v2881
      %v2930 = vsel %vm1734, %v2898, %v2882
      %v2931 = vsel %vm1734, %v2899, %v2883
      %v2932 = vsel %vm1734, %v2900, %v2884
      %v2933 = vsel %vm1734, %v2901, %v2885
      %v2934 = vsel %vm1734, %v2902, %v2886
      %v2935 = vsel %vm1734, %v2903, %v2887
      %v2936 = vsel %vm1734, %v2904, %v2888
      %v2937 = vsel %vm1734, %v2905, %v2889
      %v2938 = vsel %vm1734, %v2906, %v2890
      %v2939 = vsel %vm1734, %v2907, %v2891
      %v2940 = vsel %vm1734, %v2908, %v2892
      %v2941 = vsel %vm1734, %v2909, %v2893
      %v2942 = vsel %vm1734, %v2910, %v2894
      %v2943 = vsel %vm1734, %v2911, %v2895
      %v2944 = vsel %vm1734, %v2912, %v2896
      %v2945 = vld [vmem:[%s1767] sm:$0xff]
      %v2946 = vld [vmem:[%s1767 + $0x8] sm:$0xff]
      %v2947 = vadd.f32 %v2929, %v2945
      %v2948 = vadd.f32 %v2913, %v2946
      %v2949 = vadd.f32 %v2930, %v2945
      %v2950 = vadd.f32 %v2914, %v2946
      %v2951 = vadd.f32 %v2931, %v2945
      %v2952 = vadd.f32 %v2915, %v2946
      %v2953 = vadd.f32 %v2932, %v2945
      %v2954 = vadd.f32 %v2916, %v2946
      %v2955 = vadd.f32 %v2933, %v2945
      %v2956 = vadd.f32 %v2917, %v2946
      %v2957 = vadd.f32 %v2934, %v2945
      %v2958 = vadd.f32 %v2918, %v2946
      %v2959 = vadd.f32 %v2935, %v2945
      %v2960 = vadd.f32 %v2919, %v2946
      %v2961 = vadd.f32 %v2936, %v2945
      %v2962 = vadd.f32 %v2920, %v2946
      %v2963 = vadd.f32 %v2937, %v2945
      %v2964 = vadd.f32 %v2921, %v2946
      %v2965 = vadd.f32 %v2938, %v2945
      %v2966 = vadd.f32 %v2922, %v2946
      %v2967 = vadd.f32 %v2939, %v2945
      %v2968 = vadd.f32 %v2923, %v2946
      %v2969 = vadd.f32 %v2940, %v2945
      %v2970 = vadd.f32 %v2924, %v2946
      %v2971 = vadd.f32 %v2941, %v2945
      %v2972 = vadd.f32 %v2925, %v2946
      %v2973 = vadd.f32 %v2942, %v2945
      %v2974 = vadd.f32 %v2926, %v2946
      %v2975 = vadd.f32 %v2943, %v2945
      %v2976 = vadd.f32 %v2927, %v2946
      %v2977 = vadd.f32 %v2944, %v2945
      %v2978 = vadd.f32 %v2928, %v2946
      %v2979 = vmax.f32 %v2849, %v2947
      %v2980 = vmax.f32 %v2850, %v2948
      %v2981 = vmax.f32 %v2851, %v2949
      %v2982 = vmax.f32 %v2852, %v2950
      %v2983 = vmax.f32 %v2853, %v2951
      %v2984 = vmax.f32 %v2854, %v2952
      %v2985 = vmax.f32 %v2855, %v2953
      %v2986 = vmax.f32 %v2856, %v2954
      %v2987 = vmax.f32 %v2857, %v2955
      %v2988 = vmax.f32 %v2858, %v2956
      %v2989 = vmax.f32 %v2859, %v2957
      %v2990 = vmax.f32 %v2860, %v2958
      %v2991 = vmax.f32 %v2861, %v2959
      %v2992 = vmax.f32 %v2862, %v2960
      %v2993 = vmax.f32 %v2863, %v2961
      %v2994 = vmax.f32 %v2864, %v2962
      %v2995 = vmax.f32 %v2865, %v2963
      %v2996 = vmax.f32 %v2866, %v2964
      %v2997 = vmax.f32 %v2867, %v2965
      %v2998 = vmax.f32 %v2868, %v2966
      %v2999 = vmax.f32 %v2869, %v2967
      %v3000 = vmax.f32 %v2870, %v2968
      %v3001 = vmax.f32 %v2871, %v2969
      %v3002 = vmax.f32 %v2872, %v2970
      %v3003 = vmax.f32 %v2873, %v2971
      %v3004 = vmax.f32 %v2874, %v2972
      %v3005 = vmax.f32 %v2875, %v2973
      %v3006 = vmax.f32 %v2876, %v2974
      %v3007 = vmax.f32 %v2877, %v2975
      %v3008 = vmax.f32 %v2878, %v2976
      %v3009 = vmax.f32 %v2879, %v2977
      %v3010 = vmax.f32 %v2880, %v2978
      %v3011 = vld [vmem:[#allocation3] sm:$0xff]
      %v3012 = vld [vmem:[#allocation3 + $0x8] sm:$0xff]
      %v3013 = vld [vmem:[#allocation3 + $0x10] sm:$0xff]
      %v3014 = vld [vmem:[#allocation3 + $0x18] sm:$0xff]
      %v3015 = vld [vmem:[#allocation3 + $0x20] sm:$0xff]
      %v3016 = vld [vmem:[#allocation3 + $0x28] sm:$0xff]
      %v3017 = vld [vmem:[#allocation3 + $0x30] sm:$0xff]
      %v3018 = vld [vmem:[#allocation3 + $0x38] sm:$0xff]
      %v3019 = vld [vmem:[#allocation3 + $0x40] sm:$0xff]
      %v3020 = vld [vmem:[#allocation3 + $0x48] sm:$0xff]
      %v3021 = vld [vmem:[#allocation3 + $0x50] sm:$0xff]
      %v3022 = vld [vmem:[#allocation3 + $0x58] sm:$0xff]
      %v3023 = vld [vmem:[#allocation3 + $0x60] sm:$0xff]
      %v3024 = vld [vmem:[#allocation3 + $0x68] sm:$0xff]
      %v3025 = vld [vmem:[#allocation3 + $0x70] sm:$0xff]
      %v3026 = vld [vmem:[#allocation3 + $0x78] sm:$0xff]
      %v3027 = vld [vmem:[#allocation3 + $0x80] sm:$0xff]
      %v3028 = vld [vmem:[#allocation3 + $0x88] sm:$0xff]
      %v3029 = vld [vmem:[#allocation3 + $0x90] sm:$0xff]
      %v3030 = vld [vmem:[#allocation3 + $0x98] sm:$0xff]
      %v3031 = vld [vmem:[#allocation3 + $0xa0] sm:$0xff]
      %v3032 = vld [vmem:[#allocation3 + $0xa8] sm:$0xff]
      %v3033 = vld [vmem:[#allocation3 + $0xb0] sm:$0xff]
      %v3034 = vld [vmem:[#allocation3 + $0xb8] sm:$0xff]
      %v3035 = vld [vmem:[#allocation3 + $0xc0] sm:$0xff]
      %v3036 = vld [vmem:[#allocation3 + $0xc8] sm:$0xff]
      %v3037 = vld [vmem:[#allocation3 + $0xd0] sm:$0xff]
      %v3038 = vld [vmem:[#allocation3 + $0xd8] sm:$0xff]
      %v3039 = vld [vmem:[#allocation3 + $0xe0] sm:$0xff]
      %v3040 = vld [vmem:[#allocation3 + $0xe8] sm:$0xff]
      %v3041 = vld [vmem:[#allocation3 + $0xf0] sm:$0xff]
      %v3042 = vld [vmem:[#allocation3 + $0xf8] sm:$0xff]
      %v3043 = vld [vmem:[%s3 + $0x100] sm:$0xff]
      %v3044 = vld [vmem:[%s3 + $0x108] sm:$0xff]
      %v3045 = vld [vmem:[%s3 + $0x110] sm:$0xff]
      %v3046 = vld [vmem:[%s3 + $0x118] sm:$0xff]
      %v3047 = vld [vmem:[%s3 + $0x120] sm:$0xff]
      %v3048 = vld [vmem:[%s3 + $0x128] sm:$0xff]
      %v3049 = vld [vmem:[%s3 + $0x130] sm:$0xff]
      %v3050 = vld [vmem:[%s3 + $0x138] sm:$0xff]
      %v3051 = vld [vmem:[%s3 + $0x140] sm:$0xff]
      %v3052 = vld [vmem:[%s3 + $0x148] sm:$0xff]
      %v3053 = vld [vmem:[%s3 + $0x150] sm:$0xff]
      %v3054 = vld [vmem:[%s3 + $0x158] sm:$0xff]
      %v3055 = vld [vmem:[%s3 + $0x160] sm:$0xff]
      %v3056 = vld [vmem:[%s3 + $0x168] sm:$0xff]
      %v3057 = vld [vmem:[%s3 + $0x170] sm:$0xff]
      %v3058 = vld [vmem:[%s3 + $0x178] sm:$0xff]
      %3059 = vmatprep.subr.mxu0 0.0
      %3060 = vmatpush1.msra.mxu0 %v3043
      %3061 = vmatprep.subr.mxu0 0.0
      %3062 = vmatpush1.msra.mxu0 %v3044
      %3063 = vmatprep.subr.mxu0 0.0
      %3064 = vmatpush1.msra.mxu0 %v3045
      %3065 = vmatprep.subr.mxu0 0.0
      %3066 = vmatpush1.msra.mxu0 %v3046
      %3067 = vmatprep.subr.mxu0 0.0
      %3068 = vmatpush1.msra.mxu0 %v3047
      %3069 = vmatprep.subr.mxu0 0.0
      %3070 = vmatpush1.msra.mxu0 %v3048
      %3071 = vmatprep.subr.mxu0 0.0
      %3072 = vmatpush1.msra.mxu0 %v3049
      %3073 = vmatprep.subr.mxu0 0.0
      %3074 = vmatpush1.msra.mxu0 %v3050
      %3075 = vmatprep.subr.mxu0 0.0
      %3076 = vmatpush1.msra.mxu0 %v3051
      %3077 = vmatprep.subr.mxu0 0.0
      %3078 = vmatpush1.msra.mxu0 %v3052
      %3079 = vmatprep.subr.mxu0 0.0
      %3080 = vmatpush1.msra.mxu0 %v3053
      %3081 = vmatprep.subr.mxu0 0.0
      %3082 = vmatpush1.msra.mxu0 %v3054
      %3083 = vmatprep.subr.mxu0 0.0
      %3084 = vmatpush1.msra.mxu0 %v3055
      %3085 = vmatprep.subr.mxu0 0.0
      %3086 = vmatpush1.msra.mxu0 %v3056
      %3087 = vmatprep.subr.mxu0 0.0
      %3088 = vmatpush1.msra.mxu0 %v3057
      %3089 = vmatprep.subr.mxu0 0.0
      %3090 = vmatpush1.msra.mxu0 %v3058
      %3091 = vmatprep.subr.mxu0 0.0
      %3092 = vmatpush1.msra.mxu0 0.0
      %3093 = vmatprep.subr.mxu0 0.0
      %3094 = vmatpush1.msra.mxu0 0.0
      %3095 = vmatprep.subr.mxu0 0.0
      %3096 = vmatpush1.msra.mxu0 0.0
      %3097 = vmatprep.subr.mxu0 0.0
      %3098 = vmatpush1.msra.mxu0 0.0
      %3099 = vmatprep.subr.mxu0 0.0
      %3100 = vmatpush1.msra.mxu0 0.0
      %3101 = vmatprep.subr.mxu0 0.0
      %3102 = vmatpush1.msra.mxu0 0.0
      %3103 = vmatprep.subr.mxu0 0.0
      %3104 = vmatpush1.msra.mxu0 0.0
      %3105 = vmatprep.subr.mxu0 0.0
      %3106 = vmatpush1.msra.mxu0 0.0
      %3107 = vmatprep.subr.mxu0 0.0
      %3108 = vmatpush1.msra.mxu0 0.0
      %3109 = vmatprep.subr.mxu0 0.0
      %3110 = vmatpush1.msra.mxu0 0.0
      %3111 = vmatprep.subr.mxu0 0.0
      %3112 = vmatpush1.msra.mxu0 0.0
      %3113 = vmatprep.subr.mxu0 0.0
      %3114 = vmatpush1.msra.mxu0 0.0
      %3115 = vmatprep.subr.mxu0 0.0
      %3116 = vmatpush1.msra.mxu0 0.0
      %3117 = vmatprep.subr.mxu0 0.0
      %3118 = vmatpush1.msra.mxu0 0.0
      %3119 = vmatprep.subr.mxu0 0.0
      %3120 = vmatpush1.msra.mxu0 0.0
      %3121 = vmatprep.subr.mxu0 0.0
      %3122 = vmatpush1.msra.mxu0 0.0
      %3123 = vmatprep.mubr.f32.mxu0 0.0
      %3124 = vmatmul.mubr.f32.gmra.mrb[0].mxu0 %v2979
      %v3125 = vpop.f32.mrb[0].mxu0
      %v3126 = vadd.f32 0.0, %v3125
      %v3127 = vpop.f32.mrb[0].mxu0
      %3128 = vmatprep.mubr.f32.mxu0 0.0
      %3129 = vmatmul.mubr.f32.gmra.mrb[0].mxu0 %v2980
      %v3130 = vpop.f32.mrb[0].mxu0
      %v3131 = vadd.f32 0.0, %v3130
      %v3132 = vpop.f32.mrb[0].mxu0
      %3133 = vmatprep.mubr.f32.mxu0 0.0
      %3134 = vmatmul.mubr.f32.gmra.mrb[0].mxu0 %v2981
      %v3135 = vpop.f32.mrb[0].mxu0
      %v3136 = vadd.f32 0.0, %v3135
      %v3137 = vpop.f32.mrb[0].mxu0
      %3138 = vmatprep.mubr.f32.mxu0 0.0
      %3139 = vmatmul.mubr.f32.gmra.mrb[0].mxu0 %v2982
      %v3140 = vpop.f32.mrb[0].mxu0
      %v3141 = vadd.f32 0.0, %v3140
      %v3142 = vpop.f32.mrb[0].mxu0
      %3143 = vmatprep.mubr.f32.mxu0 0.0
      %3144 = vmatmul.mubr.f32.gmra.mrb[0].mxu0 %v2983
      %v3145 = vpop.f32.mrb[0].mxu0
      %v3146 = vadd.f32 0.0, %v3145
      %v3147 = vpop.f32.mrb[0].mxu0
      %3148 = vmatprep.mubr.f32.mxu0 0.0
      %3149 = vmatmul.mubr.f32.gmra.mrb[0].mxu0 %v2984
      %v3150 = vpop.f32.mrb[0].mxu0
      %v3151 = vadd.f32 0.0, %v3150
      %v3152 = vpop.f32.mrb[0].mxu0
      %3153 = vmatprep.mubr.f32.mxu0 0.0
      %3154 = vmatmul.mubr.f32.gmra.mrb[0].mxu0 %v2985
      %v3155 = vpop.f32.mrb[0].mxu0
      %v3156 = vadd.f32 0.0, %v3155
      %v3157 = vpop.f32.mrb[0].mxu0
      %3158 = vmatprep.mubr.f32.mxu0 0.0
      %3159 = vmatmul.mubr.f32.gmra.mrb[0].mxu0 %v2986
      %v3160 = vpop.f32.mrb[0].mxu0
      %v3161 = vadd.f32 0.0, %v3160
      %v3162 = vpop.f32.mrb[0].mxu0
      %3163 = vmatprep.mubr.f32.mxu0 0.0
      %3164 = vmatmul.mubr.f32.gmra.mrb[0].mxu0 %v2987
      %v3165 = vpop.f32.mrb[0].mxu0
      %v3166 = vadd.f32 0.0, %v3165
      %v3167 = vpop.f32.mrb[0].mxu0
      %3168 = vmatprep.mubr.f32.mxu0 0.0
      %3169 = vmatmul.mubr.f32.gmra.mrb[0].mxu0 %v2988
      %v3170 = vpop.f32.mrb[0].mxu0
      %v3171 = vadd.f32 0.0, %v3170
      %v3172 = vpop.f32.mrb[0].mxu0
      %3173 = vmatprep.mubr.f32.mxu0 0.0
      %3174 = vmatmul.mubr.f32.gmra.mrb[0].mxu0 %v2989
      %v3175 = vpop.f32.mrb[0].mxu0
      %v3176 = vadd.f32 0.0, %v3175
      %v3177 = vpop.f32.mrb[0].mxu0
      %3178 = vmatprep.mubr.f32.mxu0 0.0
      %3179 = vmatmul.mubr.f32.gmra.mrb[0].mxu0 %v2990
      %v3180 = vpop.f32.mrb[0].mxu0
      %v3181 = vadd.f32 0.0, %v3180
      %v3182 = vpop.f32.mrb[0].mxu0
      %3183 = vmatprep.mubr.f32.mxu0 0.0
      %3184 = vmatmul.mubr.f32.gmra.mrb[0].mxu0 %v2991
      %v3185 = vpop.f32.mrb[0].mxu0
      %v3186 = vadd.f32 0.0, %v3185
      %v3187 = vpop.f32.mrb[0].mxu0
      %3188 = vmatprep.mubr.f32.mxu0 0.0
      %3189 = vmatmul.mubr.f32.gmra.mrb[0].mxu0 %v2992
      %v3190 = vpop.f32.mrb[0].mxu0
      %v3191 = vadd.f32 0.0, %v3190
      %v3192 = vpop.f32.mrb[0].mxu0
      %3193 = vmatprep.mubr.f32.mxu0 0.0
      %3194 = vmatmul.mubr.f32.gmra.mrb[0].mxu0 %v2993
      %v3195 = vpop.f32.mrb[0].mxu0
      %v3196 = vadd.f32 0.0, %v3195
      %v3197 = vpop.f32.mrb[0].mxu0
      %3198 = vmatprep.mubr.f32.mxu0 0.0
      %3199 = vmatmul.mubr.f32.gmra.mrb[0].mxu0 %v2994
      %v3200 = vpop.f32.mrb[0].mxu0
      %v3201 = vadd.f32 0.0, %v3200
      %v3202 = vpop.f32.mrb[0].mxu0
      %3203 = vmatprep.mubr.f32.mxu0 0.0
      %3204 = vmatmul.mubr.f32.gmra.mrb[0].mxu0 %v2995
      %v3205 = vpop.f32.mrb[0].mxu0
      %v3206 = vadd.f32 0.0, %v3205
      %v3207 = vpop.f32.mrb[0].mxu0
      %3208 = vmatprep.mubr.f32.mxu0 0.0
      %3209 = vmatmul.mubr.f32.gmra.mrb[0].mxu0 %v2996
      %v3210 = vpop.f32.mrb[0].mxu0
      %v3211 = vadd.f32 0.0, %v3210
      %v3212 = vpop.f32.mrb[0].mxu0
      %3213 = vmatprep.mubr.f32.mxu0 0.0
      %3214 = vmatmul.mubr.f32.gmra.mrb[0].mxu0 %v2997
      %v3215 = vpop.f32.mrb[0].mxu0
      %v3216 = vadd.f32 0.0, %v3215
      %v3217 = vpop.f32.mrb[0].mxu0
      %3218 = vmatprep.mubr.f32.mxu0 0.0
      %3219 = vmatmul.mubr.f32.gmra.mrb[0].mxu0 %v2998
      %v3220 = vpop.f32.mrb[0].mxu0
      %v3221 = vadd.f32 0.0, %v3220
      %v3222 = vpop.f32.mrb[0].mxu0
      %3223 = vmatprep.mubr.f32.mxu0 0.0
      %3224 = vmatmul.mubr.f32.gmra.mrb[0].mxu0 %v2999
      %v3225 = vpop.f32.mrb[0].mxu0
      %v3226 = vadd.f32 0.0, %v3225
      %v3227 = vpop.f32.mrb[0].mxu0
      %3228 = vmatprep.mubr.f32.mxu0 0.0
      %3229 = vmatmul.mubr.f32.gmra.mrb[0].mxu0 %v3000
      %v3230 = vpop.f32.mrb[0].mxu0
      %v3231 = vadd.f32 0.0, %v3230
      %v3232 = vpop.f32.mrb[0].mxu0
      %3233 = vmatprep.mubr.f32.mxu0 0.0
      %3234 = vmatmul.mubr.f32.gmra.mrb[0].mxu0 %v3001
      %v3235 = vpop.f32.mrb[0].mxu0
      %v3236 = vadd.f32 0.0, %v3235
      %v3237 = vpop.f32.mrb[0].mxu0
      %3238 = vmatprep.mubr.f32.mxu0 0.0
      %3239 = vmatmul.mubr.f32.gmra.mrb[0].mxu0 %v3002
      %v3240 = vpop.f32.mrb[0].mxu0
      %v3241 = vadd.f32 0.0, %v3240
      %v3242 = vpop.f32.mrb[0].mxu0
      %3243 = vmatprep.mubr.f32.mxu0 0.0
      %3244 = vmatmul.mubr.f32.gmra.mrb[0].mxu0 %v3003
      %v3245 = vpop.f32.mrb[0].mxu0
      %v3246 = vadd.f32 0.0, %v3245
      %v3247 = vpop.f32.mrb[0].mxu0
      %3248 = vmatprep.mubr.f32.mxu0 0.0
      %3249 = vmatmul.mubr.f32.gmra.mrb[0].mxu0 %v3004
      %v3250 = vpop.f32.mrb[0].mxu0
      %v3251 = vadd.f32 0.0, %v3250
      %v3252 = vpop.f32.mrb[0].mxu0
      %3253 = vmatprep.mubr.f32.mxu0 0.0
      %3254 = vmatmul.mubr.f32.gmra.mrb[0].mxu0 %v3005
      %v3255 = vpop.f32.mrb[0].mxu0
      %v3256 = vadd.f32 0.0, %v3255
      %v3257 = vpop.f32.mrb[0].mxu0
      %3258 = vmatprep.mubr.f32.mxu0 0.0
      %3259 = vmatmul.mubr.f32.gmra.mrb[0].mxu0 %v3006
      %v3260 = vpop.f32.mrb[0].mxu0
      %v3261 = vadd.f32 0.0, %v3260
      %v3262 = vpop.f32.mrb[0].mxu0
      %3263 = vmatprep.mubr.f32.mxu0 0.0
      %3264 = vmatmul.mubr.f32.gmra.mrb[0].mxu0 %v3007
      %v3265 = vpop.f32.mrb[0].mxu0
      %v3266 = vadd.f32 0.0, %v3265
      %v3267 = vpop.f32.mrb[0].mxu0
      %3268 = vmatprep.mubr.f32.mxu0 0.0
      %3269 = vmatmul.mubr.f32.gmra.mrb[0].mxu0 %v3008
      %v3270 = vpop.f32.mrb[0].mxu0
      %v3271 = vadd.f32 0.0, %v3270
      %v3272 = vpop.f32.mrb[0].mxu0
      %3273 = vmatprep.mubr.f32.mxu0 0.0
      %3274 = vmatmul.mubr.f32.gmra.mrb[0].mxu0 %v3009
      %v3275 = vpop.f32.mrb[0].mxu0
      %v3276 = vadd.f32 0.0, %v3275
      %v3277 = vpop.f32.mrb[0].mxu0
      %3278 = vmatprep.mubr.f32.mxu0 0.0
      %3279 = vmatmul.mubr.f32.gmra.mrb[0].mxu0 %v3010
      %v3280 = vpop.f32.mrb[0].mxu0
      %v3281 = vadd.f32 0.0, %v3280
      %v3282 = vpop.f32.mrb[0].mxu0
      %3283 = vdwg.mxu0
      %v3284 = vadd.f32 %v3011, %v3126
      %v3285 = vadd.f32 %v3012, %v3131
      %v3286 = vadd.f32 %v3013, %v3136
      %v3287 = vadd.f32 %v3014, %v3141
      %v3288 = vadd.f32 %v3015, %v3146
      %v3289 = vadd.f32 %v3016, %v3151
      %v3290 = vadd.f32 %v3017, %v3156
      %v3291 = vadd.f32 %v3018, %v3161
      %v3292 = vadd.f32 %v3019, %v3166
      %v3293 = vadd.f32 %v3020, %v3171
      %v3294 = vadd.f32 %v3021, %v3176
      %v3295 = vadd.f32 %v3022, %v3181
      %v3296 = vadd.f32 %v3023, %v3186
      %v3297 = vadd.f32 %v3024, %v3191
      %v3298 = vadd.f32 %v3025, %v3196
      %v3299 = vadd.f32 %v3026, %v3201
      %v3300 = vadd.f32 %v3027, %v3206
      %v3301 = vadd.f32 %v3028, %v3211
      %v3302 = vadd.f32 %v3029, %v3216
      %v3303 = vadd.f32 %v3030, %v3221
      %v3304 = vadd.f32 %v3031, %v3226
      %v3305 = vadd.f32 %v3032, %v3231
      %v3306 = vadd.f32 %v3033, %v3236
      %v3307 = vadd.f32 %v3034, %v3241
      %v3308 = vadd.f32 %v3035, %v3246
      %v3309 = vadd.f32 %v3036, %v3251
      %v3310 = vadd.f32 %v3037, %v3256
      %v3311 = vadd.f32 %v3038, %v3261
      %v3312 = vadd.f32 %v3039, %v3266
      %v3313 = vadd.f32 %v3040, %v3271
      %v3314 = vadd.f32 %v3041, %v3276
      %v3315 = vadd.f32 %v3042, %v3281
      %3316 = vst [vmem:[#allocation3] sm:$0xff] %v3284
      %3317 = vst [vmem:[#allocation3 + $0x8] sm:$0xff] %v3285
      %3318 = vst [vmem:[#allocation3 + $0x10] sm:$0xff] %v3286
      %3319 = vst [vmem:[#allocation3 + $0x18] sm:$0xff] %v3287
      %3320 = vst [vmem:[#allocation3 + $0x20] sm:$0xff] %v3288
      %3321 = vst [vmem:[#allocation3 + $0x28] sm:$0xff] %v3289
      %3322 = vst [vmem:[#allocation3 + $0x30] sm:$0xff] %v3290
      %3323 = vst [vmem:[#allocation3 + $0x38] sm:$0xff] %v3291
      %3324 = vst [vmem:[#allocation3 + $0x40] sm:$0xff] %v3292
      %3325 = vst [vmem:[#allocation3 + $0x48] sm:$0xff] %v3293
      %3326 = vst [vmem:[#allocation3 + $0x50] sm:$0xff] %v3294
      %3327 = vst [vmem:[#allocation3 + $0x58] sm:$0xff] %v3295
      %3328 = vst [vmem:[#allocation3 + $0x60] sm:$0xff] %v3296
      %3329 = vst [vmem:[#allocation3 + $0x68] sm:$0xff] %v3297
      %3330 = vst [vmem:[#allocation3 + $0x70] sm:$0xff] %v3298
      %3331 = vst [vmem:[#allocation3 + $0x78] sm:$0xff] %v3299
      %3332 = vst [vmem:[#allocation3 + $0x80] sm:$0xff] %v3300
      %3333 = vst [vmem:[#allocation3 + $0x88] sm:$0xff] %v3301
      %3334 = vst [vmem:[#allocation3 + $0x90] sm:$0xff] %v3302
      %3335 = vst [vmem:[#allocation3 + $0x98] sm:$0xff] %v3303
      %3336 = vst [vmem:[#allocation3 + $0xa0] sm:$0xff] %v3304
      %3337 = vst [vmem:[#allocation3 + $0xa8] sm:$0xff] %v3305
      %3338 = vst [vmem:[#allocation3 + $0xb0] sm:$0xff] %v3306
      %3339 = vst [vmem:[#allocation3 + $0xb8] sm:$0xff] %v3307
      %3340 = vst [vmem:[#allocation3 + $0xc0] sm:$0xff] %v3308
      %3341 = vst [vmem:[#allocation3 + $0xc8] sm:$0xff] %v3309
      %3342 = vst [vmem:[#allocation3 + $0xd0] sm:$0xff] %v3310
      %3343 = vst [vmem:[#allocation3 + $0xd8] sm:$0xff] %v3311
      %3344 = vst [vmem:[#allocation3 + $0xe0] sm:$0xff] %v3312
      %3345 = vst [vmem:[#allocation3 + $0xe8] sm:$0xff] %v3313
      %3346 = vst [vmem:[#allocation3 + $0xf0] sm:$0xff] %v3314
      %3347 = vst [vmem:[#allocation3 + $0xf8] sm:$0xff] %v3315
      %3348 = vst [vmem:[%s981] sm:$0xff] %v2979
      %3349 = vst [vmem:[%s981 + $0x8] sm:$0xff] %v2980
      %3350 = vst [vmem:[%s981 + $0x10] sm:$0xff] %v2981
      %3351 = vst [vmem:[%s981 + $0x18] sm:$0xff] %v2982
      %3352 = vst [vmem:[%s981 + $0x20] sm:$0xff] %v2983
      %3353 = vst [vmem:[%s981 + $0x28] sm:$0xff] %v2984
      %3354 = vst [vmem:[%s981 + $0x30] sm:$0xff] %v2985
      %3355 = vst [vmem:[%s981 + $0x38] sm:$0xff] %v2986
      %3356 = vst [vmem:[%s981 + $0x40] sm:$0xff] %v2987
      %3357 = vst [vmem:[%s981 + $0x48] sm:$0xff] %v2988
      %3358 = vst [vmem:[%s981 + $0x50] sm:$0xff] %v2989
      %3359 = vst [vmem:[%s981 + $0x58] sm:$0xff] %v2990
      %3360 = vst [vmem:[%s981 + $0x60] sm:$0xff] %v2991
      %3361 = vst [vmem:[%s981 + $0x68] sm:$0xff] %v2992
      %3362 = vst [vmem:[%s981 + $0x70] sm:$0xff] %v2993
      %3363 = vst [vmem:[%s981 + $0x78] sm:$0xff] %v2994
      %3364 = vst [vmem:[%s981 + $0x80] sm:$0xff] %v2995
      %3365 = vst [vmem:[%s981 + $0x88] sm:$0xff] %v2996
      %3366 = vst [vmem:[%s981 + $0x90] sm:$0xff] %v2997
      %3367 = vst [vmem:[%s981 + $0x98] sm:$0xff] %v2998
      %3368 = vst [vmem:[%s981 + $0xa0] sm:$0xff] %v2999
      %3369 = vst [vmem:[%s981 + $0xa8] sm:$0xff] %v3000
      %3370 = vst [vmem:[%s981 + $0xb0] sm:$0xff] %v3001
      %3371 = vst [vmem:[%s981 + $0xb8] sm:$0xff] %v3002
      %3372 = vst [vmem:[%s981 + $0xc0] sm:$0xff] %v3003
      %3373 = vst [vmem:[%s981 + $0xc8] sm:$0xff] %v3004
      %3374 = vst [vmem:[%s981 + $0xd0] sm:$0xff] %v3005
      %3375 = vst [vmem:[%s981 + $0xd8] sm:$0xff] %v3006
      %3376 = vst [vmem:[%s981 + $0xe0] sm:$0xff] %v3007
      %3377 = vst [vmem:[%s981 + $0xe8] sm:$0xff] %v3008
      %3378 = vst [vmem:[%s981 + $0xf0] sm:$0xff] %v3009
      %3379 = vst [vmem:[%s981 + $0xf8] sm:$0xff] %v3010
      %v3380 = vld [vmem:[#allocation2] sm:$0xff]
      %v3381 = vld [vmem:[#allocation2 + $0x8] sm:$0xff]
      %v3382 = vld [vmem:[#allocation2 + $0x10] sm:$0xff]
      %v3383 = vld [vmem:[#allocation2 + $0x18] sm:$0xff]
      %v3384 = vld [vmem:[#allocation2 + $0x20] sm:$0xff]
      %v3385 = vld [vmem:[#allocation2 + $0x28] sm:$0xff]
      %v3386 = vld [vmem:[#allocation2 + $0x30] sm:$0xff]
      %v3387 = vld [vmem:[#allocation2 + $0x38] sm:$0xff]
      %v3388 = vld [vmem:[#allocation2 + $0x40] sm:$0xff]
      %v3389 = vld [vmem:[#allocation2 + $0x48] sm:$0xff]
      %v3390 = vld [vmem:[#allocation2 + $0x50] sm:$0xff]
      %v3391 = vld [vmem:[#allocation2 + $0x58] sm:$0xff]
      %v3392 = vld [vmem:[#allocation2 + $0x60] sm:$0xff]
      %v3393 = vld [vmem:[#allocation2 + $0x68] sm:$0xff]
      %v3394 = vld [vmem:[#allocation2 + $0x70] sm:$0xff]
      %v3395 = vld [vmem:[#allocation2 + $0x78] sm:$0xff]
      %v3396 = vld [vmem:[#allocation2 + $0x80] sm:$0xff]
      %v3397 = vld [vmem:[#allocation2 + $0x88] sm:$0xff]
      %v3398 = vld [vmem:[#allocation2 + $0x90] sm:$0xff]
      %v3399 = vld [vmem:[#allocation2 + $0x98] sm:$0xff]
      %v3400 = vld [vmem:[#allocation2 + $0xa0] sm:$0xff]
      %v3401 = vld [vmem:[#allocation2 + $0xa8] sm:$0xff]
      %v3402 = vld [vmem:[#allocation2 + $0xb0] sm:$0xff]
      %v3403 = vld [vmem:[#allocation2 + $0xb8] sm:$0xff]
      %v3404 = vld [vmem:[#allocation2 + $0xc0] sm:$0xff]
      %v3405 = vld [vmem:[#allocation2 + $0xc8] sm:$0xff]
      %v3406 = vld [vmem:[#allocation2 + $0xd0] sm:$0xff]
      %v3407 = vld [vmem:[#allocation2 + $0xd8] sm:$0xff]
      %v3408 = vld [vmem:[#allocation2 + $0xe0] sm:$0xff]
      %v3409 = vld [vmem:[#allocation2 + $0xe8] sm:$0xff]
      %v3410 = vld [vmem:[#allocation2 + $0xf0] sm:$0xff]
      %v3411 = vld [vmem:[#allocation2 + $0xf8] sm:$0xff]
      %v3412 = vld [vmem:[%s1046] sm:$0xff]
      %v3413 = vld [vmem:[%s1046 + $0x8] sm:$0xff]
      %v3414 = vld [vmem:[%s1046 + $0x10] sm:$0xff]
      %v3415 = vld [vmem:[%s1046 + $0x18] sm:$0xff]
      %v3416 = vld [vmem:[%s1046 + $0x20] sm:$0xff]
      %v3417 = vld [vmem:[%s1046 + $0x28] sm:$0xff]
      %v3418 = vld [vmem:[%s1046 + $0x30] sm:$0xff]
      %v3419 = vld [vmem:[%s1046 + $0x38] sm:$0xff]
      %v3420 = vld [vmem:[%s1046 + $0x40] sm:$0xff]
      %v3421 = vld [vmem:[%s1046 + $0x48] sm:$0xff]
      %v3422 = vld [vmem:[%s1046 + $0x50] sm:$0xff]
      %v3423 = vld [vmem:[%s1046 + $0x58] sm:$0xff]
      %v3424 = vld [vmem:[%s1046 + $0x60] sm:$0xff]
      %v3425 = vld [vmem:[%s1046 + $0x68] sm:$0xff]
      %v3426 = vld [vmem:[%s1046 + $0x70] sm:$0xff]
      %v3427 = vld [vmem:[%s1046 + $0x78] sm:$0xff]
      %v3428 = vld [vmem:[%s1046 + $0x80] sm:$0xff]
      %v3429 = vld [vmem:[%s1046 + $0x88] sm:$0xff]
      %v3430 = vld [vmem:[%s1046 + $0x90] sm:$0xff]
      %v3431 = vld [vmem:[%s1046 + $0x98] sm:$0xff]
      %v3432 = vld [vmem:[%s1046 + $0xa0] sm:$0xff]
      %v3433 = vld [vmem:[%s1046 + $0xa8] sm:$0xff]
      %v3434 = vld [vmem:[%s1046 + $0xb0] sm:$0xff]
      %v3435 = vld [vmem:[%s1046 + $0xb8] sm:$0xff]
      %v3436 = vld [vmem:[%s1046 + $0xc0] sm:$0xff]
      %v3437 = vld [vmem:[%s1046 + $0xc8] sm:$0xff]
      %v3438 = vld [vmem:[%s1046 + $0xd0] sm:$0xff]
      %v3439 = vld [vmem:[%s1046 + $0xd8] sm:$0xff]
      %v3440 = vld [vmem:[%s1046 + $0xe0] sm:$0xff]
      %v3441 = vld [vmem:[%s1046 + $0xe8] sm:$0xff]
      %v3442 = vld [vmem:[%s1046 + $0xf0] sm:$0xff]
      %v3443 = vld [vmem:[%s1046 + $0xf8] sm:$0xff]
      %v3444 = vmax.f32 %v3380, %v3412
      %v3445 = vmax.f32 %v3381, %v3413
      %v3446 = vmax.f32 %v3382, %v3414
      %v3447 = vmax.f32 %v3383, %v3415
      %v3448 = vmax.f32 %v3384, %v3416
      %v3449 = vmax.f32 %v3385, %v3417
      %v3450 = vmax.f32 %v3386, %v3418
      %v3451 = vmax.f32 %v3387, %v3419
      %v3452 = vmax.f32 %v3388, %v3420
      %v3453 = vmax.f32 %v3389, %v3421
      %v3454 = vmax.f32 %v3390, %v3422
      %v3455 = vmax.f32 %v3391, %v3423
      %v3456 = vmax.f32 %v3392, %v3424
      %v3457 = vmax.f32 %v3393, %v3425
      %v3458 = vmax.f32 %v3394, %v3426
      %v3459 = vmax.f32 %v3395, %v3427
      %v3460 = vmax.f32 %v3396, %v3428
      %v3461 = vmax.f32 %v3397, %v3429
      %v3462 = vmax.f32 %v3398, %v3430
      %v3463 = vmax.f32 %v3399, %v3431
      %v3464 = vmax.f32 %v3400, %v3432
      %v3465 = vmax.f32 %v3401, %v3433
      %v3466 = vmax.f32 %v3402, %v3434
      %v3467 = vmax.f32 %v3403, %v3435
      %v3468 = vmax.f32 %v3404, %v3436
      %v3469 = vmax.f32 %v3405, %v3437
      %v3470 = vmax.f32 %v3406, %v3438
      %v3471 = vmax.f32 %v3407, %v3439
      %v3472 = vmax.f32 %v3408, %v3440
      %v3473 = vmax.f32 %v3409, %v3441
      %v3474 = vmax.f32 %v3410, %v3442
      %v3475 = vmax.f32 %v3411, %v3443
      %v3476 = vld [vmem:[%s981] sm:$0xff]
      %v3477 = vld [vmem:[%s981 + $0x8] sm:$0xff]
      %v3478 = vld [vmem:[%s981 + $0x10] sm:$0xff]
      %v3479 = vld [vmem:[%s981 + $0x18] sm:$0xff]
      %v3480 = vld [vmem:[%s981 + $0x20] sm:$0xff]
      %v3481 = vld [vmem:[%s981 + $0x28] sm:$0xff]
      %v3482 = vld [vmem:[%s981 + $0x30] sm:$0xff]
      %v3483 = vld [vmem:[%s981 + $0x38] sm:$0xff]
      %v3484 = vld [vmem:[%s981 + $0x40] sm:$0xff]
      %v3485 = vld [vmem:[%s981 + $0x48] sm:$0xff]
      %v3486 = vld [vmem:[%s981 + $0x50] sm:$0xff]
      %v3487 = vld [vmem:[%s981 + $0x58] sm:$0xff]
      %v3488 = vld [vmem:[%s981 + $0x60] sm:$0xff]
      %v3489 = vld [vmem:[%s981 + $0x68] sm:$0xff]
      %v3490 = vld [vmem:[%s981 + $0x70] sm:$0xff]
      %v3491 = vld [vmem:[%s981 + $0x78] sm:$0xff]
      %v3492 = vld [vmem:[%s981 + $0x80] sm:$0xff]
      %v3493 = vld [vmem:[%s981 + $0x88] sm:$0xff]
      %v3494 = vld [vmem:[%s981 + $0x90] sm:$0xff]
      %v3495 = vld [vmem:[%s981 + $0x98] sm:$0xff]
      %v3496 = vld [vmem:[%s981 + $0xa0] sm:$0xff]
      %v3497 = vld [vmem:[%s981 + $0xa8] sm:$0xff]
      %v3498 = vld [vmem:[%s981 + $0xb0] sm:$0xff]
      %v3499 = vld [vmem:[%s981 + $0xb8] sm:$0xff]
      %v3500 = vld [vmem:[%s981 + $0xc0] sm:$0xff]
      %v3501 = vld [vmem:[%s981 + $0xc8] sm:$0xff]
      %v3502 = vld [vmem:[%s981 + $0xd0] sm:$0xff]
      %v3503 = vld [vmem:[%s981 + $0xd8] sm:$0xff]
      %v3504 = vld [vmem:[%s981 + $0xe0] sm:$0xff]
      %v3505 = vld [vmem:[%s981 + $0xe8] sm:$0xff]
      %v3506 = vld [vmem:[%s981 + $0xf0] sm:$0xff]
      %v3507 = vld [vmem:[%s981 + $0xf8] sm:$0xff]
      %v3508 = vmax.f32 %v3444, %v3476
      %v3509 = vmax.f32 %v3445, %v3477
      %v3510 = vmax.f32 %v3446, %v3478
      %v3511 = vmax.f32 %v3447, %v3479
      %v3512 = vmax.f32 %v3448, %v3480
      %v3513 = vmax.f32 %v3449, %v3481
      %v3514 = vmax.f32 %v3450, %v3482
      %v3515 = vmax.f32 %v3451, %v3483
      %v3516 = vmax.f32 %v3452, %v3484
      %v3517 = vmax.f32 %v3453, %v3485
      %v3518 = vmax.f32 %v3454, %v3486
      %v3519 = vmax.f32 %v3455, %v3487
      %v3520 = vmax.f32 %v3456, %v3488
      %v3521 = vmax.f32 %v3457, %v3489
      %v3522 = vmax.f32 %v3458, %v3490
      %v3523 = vmax.f32 %v3459, %v3491
      %v3524 = vmax.f32 %v3460, %v3492
      %v3525 = vmax.f32 %v3461, %v3493
      %v3526 = vmax.f32 %v3462, %v3494
      %v3527 = vmax.f32 %v3463, %v3495
      %v3528 = vmax.f32 %v3464, %v3496
      %v3529 = vmax.f32 %v3465, %v3497
      %v3530 = vmax.f32 %v3466, %v3498
      %v3531 = vmax.f32 %v3467, %v3499
      %v3532 = vmax.f32 %v3468, %v3500
      %v3533 = vmax.f32 %v3469, %v3501
      %v3534 = vmax.f32 %v3470, %v3502
      %v3535 = vmax.f32 %v3471, %v3503
      %v3536 = vmax.f32 %v3472, %v3504
      %v3537 = vmax.f32 %v3473, %v3505
      %v3538 = vmax.f32 %v3474, %v3506
      %v3539 = vmax.f32 %v3475, %v3507
      %v3540 = vld [vmem:[%s1175] sm:$0xff]
      %v3541 = vld [vmem:[%s1175 + $0x8] sm:$0xff]
      %v3542 = vld [vmem:[%s1175 + $0x10] sm:$0xff]
      %v3543 = vld [vmem:[%s1175 + $0x18] sm:$0xff]
      %v3544 = vld [vmem:[%s1175 + $0x20] sm:$0xff]
      %v3545 = vld [vmem:[%s1175 + $0x28] sm:$0xff]
      %v3546 = vld [vmem:[%s1175 + $0x30] sm:$0xff]
      %v3547 = vld [vmem:[%s1175 + $0x38] sm:$0xff]
      %v3548 = vld [vmem:[%s1175 + $0x40] sm:$0xff]
      %v3549 = vld [vmem:[%s1175 + $0x48] sm:$0xff]
      %v3550 = vld [vmem:[%s1175 + $0x50] sm:$0xff]
      %v3551 = vld [vmem:[%s1175 + $0x58] sm:$0xff]
      %v3552 = vld [vmem:[%s1175 + $0x60] sm:$0xff]
      %v3553 = vld [vmem:[%s1175 + $0x68] sm:$0xff]
      %v3554 = vld [vmem:[%s1175 + $0x70] sm:$0xff]
      %v3555 = vld [vmem:[%s1175 + $0x78] sm:$0xff]
      %v3556 = vld [vmem:[%s1175 + $0x80] sm:$0xff]
      %v3557 = vld [vmem:[%s1175 + $0x88] sm:$0xff]
      %v3558 = vld [vmem:[%s1175 + $0x90] sm:$0xff]
      %v3559 = vld [vmem:[%s1175 + $0x98] sm:$0xff]
      %v3560 = vld [vmem:[%s1175 + $0xa0] sm:$0xff]
      %v3561 = vld [vmem:[%s1175 + $0xa8] sm:$0xff]
      %v3562 = vld [vmem:[%s1175 + $0xb0] sm:$0xff]
      %v3563 = vld [vmem:[%s1175 + $0xb8] sm:$0xff]
      %v3564 = vld [vmem:[%s1175 + $0xc0] sm:$0xff]
      %v3565 = vld [vmem:[%s1175 + $0xc8] sm:$0xff]
      %v3566 = vld [vmem:[%s1175 + $0xd0] sm:$0xff]
      %v3567 = vld [vmem:[%s1175 + $0xd8] sm:$0xff]
      %v3568 = vld [vmem:[%s1175 + $0xe0] sm:$0xff]
      %v3569 = vld [vmem:[%s1175 + $0xe8] sm:$0xff]
      %v3570 = vld [vmem:[%s1175 + $0xf0] sm:$0xff]
      %v3571 = vld [vmem:[%s1175 + $0xf8] sm:$0xff]
      %v3572 = vmax.f32 %v3508, %v3540
      %v3573 = vmax.f32 %v3509, %v3541
      %v3574 = vmax.f32 %v3510, %v3542
      %v3575 = vmax.f32 %v3511, %v3543
      %v3576 = vmax.f32 %v3512, %v3544
      %v3577 = vmax.f32 %v3513, %v3545
      %v3578 = vmax.f32 %v3514, %v3546
      %v3579 = vmax.f32 %v3515, %v3547
      %v3580 = vmax.f32 %v3516, %v3548
      %v3581 = vmax.f32 %v3517, %v3549
      %v3582 = vmax.f32 %v3518, %v3550
      %v3583 = vmax.f32 %v3519, %v3551
      %v3584 = vmax.f32 %v3520, %v3552
      %v3585 = vmax.f32 %v3521, %v3553
      %v3586 = vmax.f32 %v3522, %v3554
      %v3587 = vmax.f32 %v3523, %v3555
      %v3588 = vmax.f32 %v3524, %v3556
      %v3589 = vmax.f32 %v3525, %v3557
      %v3590 = vmax.f32 %v3526, %v3558
      %v3591 = vmax.f32 %v3527, %v3559
      %v3592 = vmax.f32 %v3528, %v3560
      %v3593 = vmax.f32 %v3529, %v3561
      %v3594 = vmax.f32 %v3530, %v3562
      %v3595 = vmax.f32 %v3531, %v3563
      %v3596 = vmax.f32 %v3532, %v3564
      %v3597 = vmax.f32 %v3533, %v3565
      %v3598 = vmax.f32 %v3534, %v3566
      %v3599 = vmax.f32 %v3535, %v3567
      %v3600 = vmax.f32 %v3536, %v3568
      %v3601 = vmax.f32 %v3537, %v3569
      %v3602 = vmax.f32 %v3538, %v3570
      %v3603 = vmax.f32 %v3539, %v3571
      %v3604 = vld [vmem:[%s1240] sm:$0xff]
      %v3605 = vld [vmem:[%s1240 + $0x8] sm:$0xff]
      %v3606 = vld [vmem:[%s1240 + $0x10] sm:$0xff]
      %v3607 = vld [vmem:[%s1240 + $0x18] sm:$0xff]
      %v3608 = vld [vmem:[%s1240 + $0x20] sm:$0xff]
      %v3609 = vld [vmem:[%s1240 + $0x28] sm:$0xff]
      %v3610 = vld [vmem:[%s1240 + $0x30] sm:$0xff]
      %v3611 = vld [vmem:[%s1240 + $0x38] sm:$0xff]
      %v3612 = vld [vmem:[%s1240 + $0x40] sm:$0xff]
      %v3613 = vld [vmem:[%s1240 + $0x48] sm:$0xff]
      %v3614 = vld [vmem:[%s1240 + $0x50] sm:$0xff]
      %v3615 = vld [vmem:[%s1240 + $0x58] sm:$0xff]
      %v3616 = vld [vmem:[%s1240 + $0x60] sm:$0xff]
      %v3617 = vld [vmem:[%s1240 + $0x68] sm:$0xff]
      %v3618 = vld [vmem:[%s1240 + $0x70] sm:$0xff]
      %v3619 = vld [vmem:[%s1240 + $0x78] sm:$0xff]
      %v3620 = vld [vmem:[%s1240 + $0x80] sm:$0xff]
      %v3621 = vld [vmem:[%s1240 + $0x88] sm:$0xff]
      %v3622 = vld [vmem:[%s1240 + $0x90] sm:$0xff]
      %v3623 = vld [vmem:[%s1240 + $0x98] sm:$0xff]
      %v3624 = vld [vmem:[%s1240 + $0xa0] sm:$0xff]
      %v3625 = vld [vmem:[%s1240 + $0xa8] sm:$0xff]
      %v3626 = vld [vmem:[%s1240 + $0xb0] sm:$0xff]
      %v3627 = vld [vmem:[%s1240 + $0xb8] sm:$0xff]
      %v3628 = vld [vmem:[%s1240 + $0xc0] sm:$0xff]
      %v3629 = vld [vmem:[%s1240 + $0xc8] sm:$0xff]
      %v3630 = vld [vmem:[%s1240 + $0xd0] sm:$0xff]
      %v3631 = vld [vmem:[%s1240 + $0xd8] sm:$0xff]
      %v3632 = vld [vmem:[%s1240 + $0xe0] sm:$0xff]
      %v3633 = vld [vmem:[%s1240 + $0xe8] sm:$0xff]
      %v3634 = vld [vmem:[%s1240 + $0xf0] sm:$0xff]
      %v3635 = vld [vmem:[%s1240 + $0xf8] sm:$0xff]
      %v3636 = vmax.f32 %v3572, %v3604
      %v3637 = vmax.f32 %v3573, %v3605
      %v3638 = vmax.f32 %v3574, %v3606
      %v3639 = vmax.f32 %v3575, %v3607
      %v3640 = vmax.f32 %v3576, %v3608
      %v3641 = vmax.f32 %v3577, %v3609
      %v3642 = vmax.f32 %v3578, %v3610
      %v3643 = vmax.f32 %v3579, %v3611
      %v3644 = vmax.f32 %v3580, %v3612
      %v3645 = vmax.f32 %v3581, %v3613
      %v3646 = vmax.f32 %v3582, %v3614
      %v3647 = vmax.f32 %v3583, %v3615
      %v3648 = vmax.f32 %v3584, %v3616
      %v3649 = vmax.f32 %v3585, %v3617
      %v3650 = vmax.f32 %v3586, %v3618
      %v3651 = vmax.f32 %v3587, %v3619
      %v3652 = vmax.f32 %v3588, %v3620
      %v3653 = vmax.f32 %v3589, %v3621
      %v3654 = vmax.f32 %v3590, %v3622
      %v3655 = vmax.f32 %v3591, %v3623
      %v3656 = vmax.f32 %v3592, %v3624
      %v3657 = vmax.f32 %v3593, %v3625
      %v3658 = vmax.f32 %v3594, %v3626
      %v3659 = vmax.f32 %v3595, %v3627
      %v3660 = vmax.f32 %v3596, %v3628
      %v3661 = vmax.f32 %v3597, %v3629
      %v3662 = vmax.f32 %v3598, %v3630
      %v3663 = vmax.f32 %v3599, %v3631
      %v3664 = vmax.f32 %v3600, %v3632
      %v3665 = vmax.f32 %v3601, %v3633
      %v3666 = vmax.f32 %v3602, %v3634
      %v3667 = vmax.f32 %v3603, %v3635
      %v3668 = vrot.slane %v3636, 1
      %v3669 = vrot.slane %v3638, 1
      %v3670 = vrot.slane %v3640, 1
      %v3671 = vrot.slane %v3642, 1
      %v3672 = vrot.slane %v3644, 1
      %v3673 = vrot.slane %v3646, 1
      %v3674 = vrot.slane %v3648, 1
      %v3675 = vrot.slane %v3650, 1
      %v3676 = vrot.slane %v3652, 1
      %v3677 = vrot.slane %v3654, 1
      %v3678 = vrot.slane %v3656, 1
      %v3679 = vrot.slane %v3658, 1
      %v3680 = vrot.slane %v3660, 1
      %v3681 = vrot.slane %v3662, 1
      %v3682 = vrot.slane %v3664, 1
      %v3683 = vrot.slane %v3666, 1
      %v3684 = vrot.slane %v3637, 1
      %v3685 = vrot.slane %v3639, 1
      %v3686 = vrot.slane %v3641, 1
      %v3687 = vrot.slane %v3643, 1
      %v3688 = vrot.slane %v3645, 1
      %v3689 = vrot.slane %v3647, 1
      %v3690 = vrot.slane %v3649, 1
      %v3691 = vrot.slane %v3651, 1
      %v3692 = vrot.slane %v3653, 1
      %v3693 = vrot.slane %v3655, 1
      %v3694 = vrot.slane %v3657, 1
      %v3695 = vrot.slane %v3659, 1
      %v3696 = vrot.slane %v3661, 1
      %v3697 = vrot.slane %v3663, 1
      %v3698 = vrot.slane %v3665, 1
      %v3699 = vrot.slane %v3667, 1
      %v3700 = vsel %vm1339, %v3668, %v3684
      %v3701 = vsel %vm1339, %v3669, %v3685
      %v3702 = vsel %vm1339, %v3670, %v3686
      %v3703 = vsel %vm1339, %v3671, %v3687
      %v3704 = vsel %vm1339, %v3672, %v3688
      %v3705 = vsel %vm1339, %v3673, %v3689
      %v3706 = vsel %vm1339, %v3674, %v3690
      %v3707 = vsel %vm1339, %v3675, %v3691
      %v3708 = vsel %vm1339, %v3676, %v3692
      %v3709 = vsel %vm1339, %v3677, %v3693
      %v3710 = vsel %vm1339, %v3678, %v3694
      %v3711 = vsel %vm1339, %v3679, %v3695
      %v3712 = vsel %vm1339, %v3680, %v3696
      %v3713 = vsel %vm1339, %v3681, %v3697
      %v3714 = vsel %vm1339, %v3682, %v3698
      %v3715 = vsel %vm1339, %v3683, %v3699
      %v3716 = vsel %vm1339, %v3684, %v3668
      %v3717 = vsel %vm1339, %v3685, %v3669
      %v3718 = vsel %vm1339, %v3686, %v3670
      %v3719 = vsel %vm1339, %v3687, %v3671
      %v3720 = vsel %vm1339, %v3688, %v3672
      %v3721 = vsel %vm1339, %v3689, %v3673
      %v3722 = vsel %vm1339, %v3690, %v3674
      %v3723 = vsel %vm1339, %v3691, %v3675
      %v3724 = vsel %vm1339, %v3692, %v3676
      %v3725 = vsel %vm1339, %v3693, %v3677
      %v3726 = vsel %vm1339, %v3694, %v3678
      %v3727 = vsel %vm1339, %v3695, %v3679
      %v3728 = vsel %vm1339, %v3696, %v3680
      %v3729 = vsel %vm1339, %v3697, %v3681
      %v3730 = vsel %vm1339, %v3698, %v3682
      %v3731 = vsel %vm1339, %v3699, %v3683
      %v3732 = vld [vmem:[%s5] sm:$0xff]
      %v3733 = vld [vmem:[%s5 + $0x8] sm:$0xff]
      %v3734 = vadd.f32 %v3700, %v3732
      %v3735 = vadd.f32 %v3716, %v3733
      %v3736 = vadd.f32 %v3701, %v3732
      %v3737 = vadd.f32 %v3717, %v3733
      %v3738 = vadd.f32 %v3702, %v3732
      %v3739 = vadd.f32 %v3718, %v3733
      %v3740 = vadd.f32 %v3703, %v3732
      %v3741 = vadd.f32 %v3719, %v3733
      %v3742 = vadd.f32 %v3704, %v3732
      %v3743 = vadd.f32 %v3720, %v3733
      %v3744 = vadd.f32 %v3705, %v3732
      %v3745 = vadd.f32 %v3721, %v3733
      %v3746 = vadd.f32 %v3706, %v3732
      %v3747 = vadd.f32 %v3722, %v3733
      %v3748 = vadd.f32 %v3707, %v3732
      %v3749 = vadd.f32 %v3723, %v3733
      %v3750 = vadd.f32 %v3708, %v3732
      %v3751 = vadd.f32 %v3724, %v3733
      %v3752 = vadd.f32 %v3709, %v3732
      %v3753 = vadd.f32 %v3725, %v3733
      %v3754 = vadd.f32 %v3710, %v3732
      %v3755 = vadd.f32 %v3726, %v3733
      %v3756 = vadd.f32 %v3711, %v3732
      %v3757 = vadd.f32 %v3727, %v3733
      %v3758 = vadd.f32 %v3712, %v3732
      %v3759 = vadd.f32 %v3728, %v3733
      %v3760 = vadd.f32 %v3713, %v3732
      %v3761 = vadd.f32 %v3729, %v3733
      %v3762 = vadd.f32 %v3714, %v3732
      %v3763 = vadd.f32 %v3730, %v3733
      %v3764 = vadd.f32 %v3715, %v3732
      %v3765 = vadd.f32 %v3731, %v3733
      %v3766 = vmax.f32 %v3636, %v3734
      %v3767 = vmax.f32 %v3637, %v3735
      %v3768 = vmax.f32 %v3638, %v3736
      %v3769 = vmax.f32 %v3639, %v3737
      %v3770 = vmax.f32 %v3640, %v3738
      %v3771 = vmax.f32 %v3641, %v3739
      %v3772 = vmax.f32 %v3642, %v3740
      %v3773 = vmax.f32 %v3643, %v3741
      %v3774 = vmax.f32 %v3644, %v3742
      %v3775 = vmax.f32 %v3645, %v3743
      %v3776 = vmax.f32 %v3646, %v3744
      %v3777 = vmax.f32 %v3647, %v3745
      %v3778 = vmax.f32 %v3648, %v3746
      %v3779 = vmax.f32 %v3649, %v3747
      %v3780 = vmax.f32 %v3650, %v3748
      %v3781 = vmax.f32 %v3651, %v3749
      %v3782 = vmax.f32 %v3652, %v3750
      %v3783 = vmax.f32 %v3653, %v3751
      %v3784 = vmax.f32 %v3654, %v3752
      %v3785 = vmax.f32 %v3655, %v3753
      %v3786 = vmax.f32 %v3656, %v3754
      %v3787 = vmax.f32 %v3657, %v3755
      %v3788 = vmax.f32 %v3658, %v3756
      %v3789 = vmax.f32 %v3659, %v3757
      %v3790 = vmax.f32 %v3660, %v3758
      %v3791 = vmax.f32 %v3661, %v3759
      %v3792 = vmax.f32 %v3662, %v3760
      %v3793 = vmax.f32 %v3663, %v3761
      %v3794 = vmax.f32 %v3664, %v3762
      %v3795 = vmax.f32 %v3665, %v3763
      %v3796 = vmax.f32 %v3666, %v3764
      %v3797 = vmax.f32 %v3667, %v3765
      %v3798 = vrot.slane %v3636, 2
      %v3799 = vrot.slane %v3638, 2
      %v3800 = vrot.slane %v3640, 2
      %v3801 = vrot.slane %v3642, 2
      %v3802 = vrot.slane %v3644, 2
      %v3803 = vrot.slane %v3646, 2
      %v3804 = vrot.slane %v3648, 2
      %v3805 = vrot.slane %v3650, 2
      %v3806 = vrot.slane %v3652, 2
      %v3807 = vrot.slane %v3654, 2
      %v3808 = vrot.slane %v3656, 2
      %v3809 = vrot.slane %v3658, 2
      %v3810 = vrot.slane %v3660, 2
      %v3811 = vrot.slane %v3662, 2
      %v3812 = vrot.slane %v3664, 2
      %v3813 = vrot.slane %v3666, 2
      %v3814 = vrot.slane %v3637, 2
      %v3815 = vrot.slane %v3639, 2
      %v3816 = vrot.slane %v3641, 2
      %v3817 = vrot.slane %v3643, 2
      %v3818 = vrot.slane %v3645, 2
      %v3819 = vrot.slane %v3647, 2
      %v3820 = vrot.slane %v3649, 2
      %v3821 = vrot.slane %v3651, 2
      %v3822 = vrot.slane %v3653, 2
      %v3823 = vrot.slane %v3655, 2
      %v3824 = vrot.slane %v3657, 2
      %v3825 = vrot.slane %v3659, 2
      %v3826 = vrot.slane %v3661, 2
      %v3827 = vrot.slane %v3663, 2
      %v3828 = vrot.slane %v3665, 2
      %v3829 = vrot.slane %v3667, 2
      %v3830 = vsel %vm1470, %v3798, %v3814
      %v3831 = vsel %vm1470, %v3799, %v3815
      %v3832 = vsel %vm1470, %v3800, %v3816
      %v3833 = vsel %vm1470, %v3801, %v3817
      %v3834 = vsel %vm1470, %v3802, %v3818
      %v3835 = vsel %vm1470, %v3803, %v3819
      %v3836 = vsel %vm1470, %v3804, %v3820
      %v3837 = vsel %vm1470, %v3805, %v3821
      %v3838 = vsel %vm1470, %v3806, %v3822
      %v3839 = vsel %vm1470, %v3807, %v3823
      %v3840 = vsel %vm1470, %v3808, %v3824
      %v3841 = vsel %vm1470, %v3809, %v3825
      %v3842 = vsel %vm1470, %v3810, %v3826
      %v3843 = vsel %vm1470, %v3811, %v3827
      %v3844 = vsel %vm1470, %v3812, %v3828
      %v3845 = vsel %vm1470, %v3813, %v3829
      %v3846 = vsel %vm1470, %v3814, %v3798
      %v3847 = vsel %vm1470, %v3815, %v3799
      %v3848 = vsel %vm1470, %v3816, %v3800
      %v3849 = vsel %vm1470, %v3817, %v3801
      %v3850 = vsel %vm1470, %v3818, %v3802
      %v3851 = vsel %vm1470, %v3819, %v3803
      %v3852 = vsel %vm1470, %v3820, %v3804
      %v3853 = vsel %vm1470, %v3821, %v3805
      %v3854 = vsel %vm1470, %v3822, %v3806
      %v3855 = vsel %vm1470, %v3823, %v3807
      %v3856 = vsel %vm1470, %v3824, %v3808
      %v3857 = vsel %vm1470, %v3825, %v3809
      %v3858 = vsel %vm1470, %v3826, %v3810
      %v3859 = vsel %vm1470, %v3827, %v3811
      %v3860 = vsel %vm1470, %v3828, %v3812
      %v3861 = vsel %vm1470, %v3829, %v3813
      %v3862 = vld [vmem:[%s1503] sm:$0xff]
      %v3863 = vld [vmem:[%s1503 + $0x8] sm:$0xff]
      %v3864 = vadd.f32 %v3830, %v3862
      %v3865 = vadd.f32 %v3846, %v3863
      %v3866 = vadd.f32 %v3831, %v3862
      %v3867 = vadd.f32 %v3847, %v3863
      %v3868 = vadd.f32 %v3832, %v3862
      %v3869 = vadd.f32 %v3848, %v3863
      %v3870 = vadd.f32 %v3833, %v3862
      %v3871 = vadd.f32 %v3849, %v3863
      %v3872 = vadd.f32 %v3834, %v3862
      %v3873 = vadd.f32 %v3850, %v3863
      %v3874 = vadd.f32 %v3835, %v3862
      %v3875 = vadd.f32 %v3851, %v3863
      %v3876 = vadd.f32 %v3836, %v3862
      %v3877 = vadd.f32 %v3852, %v3863
      %v3878 = vadd.f32 %v3837, %v3862
      %v3879 = vadd.f32 %v3853, %v3863
      %v3880 = vadd.f32 %v3838, %v3862
      %v3881 = vadd.f32 %v3854, %v3863
      %v3882 = vadd.f32 %v3839, %v3862
      %v3883 = vadd.f32 %v3855, %v3863
      %v3884 = vadd.f32 %v3840, %v3862
      %v3885 = vadd.f32 %v3856, %v3863
      %v3886 = vadd.f32 %v3841, %v3862
      %v3887 = vadd.f32 %v3857, %v3863
      %v3888 = vadd.f32 %v3842, %v3862
      %v3889 = vadd.f32 %v3858, %v3863
      %v3890 = vadd.f32 %v3843, %v3862
      %v3891 = vadd.f32 %v3859, %v3863
      %v3892 = vadd.f32 %v3844, %v3862
      %v3893 = vadd.f32 %v3860, %v3863
      %v3894 = vadd.f32 %v3845, %v3862
      %v3895 = vadd.f32 %v3861, %v3863
      %v3896 = vmax.f32 %v3766, %v3864
      %v3897 = vmax.f32 %v3767, %v3865
      %v3898 = vmax.f32 %v3768, %v3866
      %v3899 = vmax.f32 %v3769, %v3867
      %v3900 = vmax.f32 %v3770, %v3868
      %v3901 = vmax.f32 %v3771, %v3869
      %v3902 = vmax.f32 %v3772, %v3870
      %v3903 = vmax.f32 %v3773, %v3871
      %v3904 = vmax.f32 %v3774, %v3872
      %v3905 = vmax.f32 %v3775, %v3873
      %v3906 = vmax.f32 %v3776, %v3874
      %v3907 = vmax.f32 %v3777, %v3875
      %v3908 = vmax.f32 %v3778, %v3876
      %v3909 = vmax.f32 %v3779, %v3877
      %v3910 = vmax.f32 %v3780, %v3878
      %v3911 = vmax.f32 %v3781, %v3879
      %v3912 = vmax.f32 %v3782, %v3880
      %v3913 = vmax.f32 %v3783, %v3881
      %v3914 = vmax.f32 %v3784, %v3882
      %v3915 = vmax.f32 %v3785, %v3883
      %v3916 = vmax.f32 %v3786, %v3884
      %v3917 = vmax.f32 %v3787, %v3885
      %v3918 = vmax.f32 %v3788, %v3886
      %v3919 = vmax.f32 %v3789, %v3887
      %v3920 = vmax.f32 %v3790, %v3888
      %v3921 = vmax.f32 %v3791, %v3889
      %v3922 = vmax.f32 %v3792, %v3890
      %v3923 = vmax.f32 %v3793, %v3891
      %v3924 = vmax.f32 %v3794, %v3892
      %v3925 = vmax.f32 %v3795, %v3893
      %v3926 = vmax.f32 %v3796, %v3894
      %v3927 = vmax.f32 %v3797, %v3895
      %v3928 = vrot.slane %v3636, 7
      %v3929 = vrot.slane %v3638, 7
      %v3930 = vrot.slane %v3640, 7
      %v3931 = vrot.slane %v3642, 7
      %v3932 = vrot.slane %v3644, 7
      %v3933 = vrot.slane %v3646, 7
      %v3934 = vrot.slane %v3648, 7
      %v3935 = vrot.slane %v3650, 7
      %v3936 = vrot.slane %v3652, 7
      %v3937 = vrot.slane %v3654, 7
      %v3938 = vrot.slane %v3656, 7
      %v3939 = vrot.slane %v3658, 7
      %v3940 = vrot.slane %v3660, 7
      %v3941 = vrot.slane %v3662, 7
      %v3942 = vrot.slane %v3664, 7
      %v3943 = vrot.slane %v3666, 7
      %v3944 = vrot.slane %v3637, 7
      %v3945 = vrot.slane %v3639, 7
      %v3946 = vrot.slane %v3641, 7
      %v3947 = vrot.slane %v3643, 7
      %v3948 = vrot.slane %v3645, 7
      %v3949 = vrot.slane %v3647, 7
      %v3950 = vrot.slane %v3649, 7
      %v3951 = vrot.slane %v3651, 7
      %v3952 = vrot.slane %v3653, 7
      %v3953 = vrot.slane %v3655, 7
      %v3954 = vrot.slane %v3657, 7
      %v3955 = vrot.slane %v3659, 7
      %v3956 = vrot.slane %v3661, 7
      %v3957 = vrot.slane %v3663, 7
      %v3958 = vrot.slane %v3665, 7
      %v3959 = vrot.slane %v3667, 7
      %v3960 = vsel %vm1602, %v3928, %v3944
      %v3961 = vsel %vm1602, %v3929, %v3945
      %v3962 = vsel %vm1602, %v3930, %v3946
      %v3963 = vsel %vm1602, %v3931, %v3947
      %v3964 = vsel %vm1602, %v3932, %v3948
      %v3965 = vsel %vm1602, %v3933, %v3949
      %v3966 = vsel %vm1602, %v3934, %v3950
      %v3967 = vsel %vm1602, %v3935, %v3951
      %v3968 = vsel %vm1602, %v3936, %v3952
      %v3969 = vsel %vm1602, %v3937, %v3953
      %v3970 = vsel %vm1602, %v3938, %v3954
      %v3971 = vsel %vm1602, %v3939, %v3955
      %v3972 = vsel %vm1602, %v3940, %v3956
      %v3973 = vsel %vm1602, %v3941, %v3957
      %v3974 = vsel %vm1602, %v3942, %v3958
      %v3975 = vsel %vm1602, %v3943, %v3959
      %v3976 = vsel %vm1602, %v3944, %v3928
      %v3977 = vsel %vm1602, %v3945, %v3929
      %v3978 = vsel %vm1602, %v3946, %v3930
      %v3979 = vsel %vm1602, %v3947, %v3931
      %v3980 = vsel %vm1602, %v3948, %v3932
      %v3981 = vsel %vm1602, %v3949, %v3933
      %v3982 = vsel %vm1602, %v3950, %v3934
      %v3983 = vsel %vm1602, %v3951, %v3935
      %v3984 = vsel %vm1602, %v3952, %v3936
      %v3985 = vsel %vm1602, %v3953, %v3937
      %v3986 = vsel %vm1602, %v3954, %v3938
      %v3987 = vsel %vm1602, %v3955, %v3939
      %v3988 = vsel %vm1602, %v3956, %v3940
      %v3989 = vsel %vm1602, %v3957, %v3941
      %v3990 = vsel %vm1602, %v3958, %v3942
      %v3991 = vsel %vm1602, %v3959, %v3943
      %v3992 = vld [vmem:[%s1635] sm:$0xff]
      %v3993 = vld [vmem:[%s1635 + $0x8] sm:$0xff]
      %v3994 = vadd.f32 %v3976, %v3992
      %v3995 = vadd.f32 %v3960, %v3993
      %v3996 = vadd.f32 %v3977, %v3992
      %v3997 = vadd.f32 %v3961, %v3993
      %v3998 = vadd.f32 %v3978, %v3992
      %v3999 = vadd.f32 %v3962, %v3993
      %v4000 = vadd.f32 %v3979, %v3992
      %v4001 = vadd.f32 %v3963, %v3993
      %v4002 = vadd.f32 %v3980, %v3992
      %v4003 = vadd.f32 %v3964, %v3993
      %v4004 = vadd.f32 %v3981, %v3992
      %v4005 = vadd.f32 %v3965, %v3993
      %v4006 = vadd.f32 %v3982, %v3992
      %v4007 = vadd.f32 %v3966, %v3993
      %v4008 = vadd.f32 %v3983, %v3992
      %v4009 = vadd.f32 %v3967, %v3993
      %v4010 = vadd.f32 %v3984, %v3992
      %v4011 = vadd.f32 %v3968, %v3993
      %v4012 = vadd.f32 %v3985, %v3992
      %v4013 = vadd.f32 %v3969, %v3993
      %v4014 = vadd.f32 %v3986, %v3992
      %v4015 = vadd.f32 %v3970, %v3993
      %v4016 = vadd.f32 %v3987, %v3992
      %v4017 = vadd.f32 %v3971, %v3993
      %v4018 = vadd.f32 %v3988, %v3992
      %v4019 = vadd.f32 %v3972, %v3993
      %v4020 = vadd.f32 %v3989, %v3992
      %v4021 = vadd.f32 %v3973, %v3993
      %v4022 = vadd.f32 %v3990, %v3992
      %v4023 = vadd.f32 %v3974, %v3993
      %v4024 = vadd.f32 %v3991, %v3992
      %v4025 = vadd.f32 %v3975, %v3993
      %v4026 = vmax.f32 %v3896, %v3994
      %v4027 = vmax.f32 %v3897, %v3995
      %v4028 = vmax.f32 %v3898, %v3996
      %v4029 = vmax.f32 %v3899, %v3997
      %v4030 = vmax.f32 %v3900, %v3998
      %v4031 = vmax.f32 %v3901, %v3999
      %v4032 = vmax.f32 %v3902, %v4000
      %v4033 = vmax.f32 %v3903, %v4001
      %v4034 = vmax.f32 %v3904, %v4002
      %v4035 = vmax.f32 %v3905, %v4003
      %v4036 = vmax.f32 %v3906, %v4004
      %v4037 = vmax.f32 %v3907, %v4005
      %v4038 = vmax.f32 %v3908, %v4006
      %v4039 = vmax.f32 %v3909, %v4007
      %v4040 = vmax.f32 %v3910, %v4008
      %v4041 = vmax.f32 %v3911, %v4009
      %v4042 = vmax.f32 %v3912, %v4010
      %v4043 = vmax.f32 %v3913, %v4011
      %v4044 = vmax.f32 %v3914, %v4012
      %v4045 = vmax.f32 %v3915, %v4013
      %v4046 = vmax.f32 %v3916, %v4014
      %v4047 = vmax.f32 %v3917, %v4015
      %v4048 = vmax.f32 %v3918, %v4016
      %v4049 = vmax.f32 %v3919, %v4017
      %v4050 = vmax.f32 %v3920, %v4018
      %v4051 = vmax.f32 %v3921, %v4019
      %v4052 = vmax.f32 %v3922, %v4020
      %v4053 = vmax.f32 %v3923, %v4021
      %v4054 = vmax.f32 %v3924, %v4022
      %v4055 = vmax.f32 %v3925, %v4023
      %v4056 = vmax.f32 %v3926, %v4024
      %v4057 = vmax.f32 %v3927, %v4025
      %v4058 = vrot.slane %v3636, 6
      %v4059 = vrot.slane %v3638, 6
      %v4060 = vrot.slane %v3640, 6
      %v4061 = vrot.slane %v3642, 6
      %v4062 = vrot.slane %v3644, 6
      %v4063 = vrot.slane %v3646, 6
      %v4064 = vrot.slane %v3648, 6
      %v4065 = vrot.slane %v3650, 6
      %v4066 = vrot.slane %v3652, 6
      %v4067 = vrot.slane %v3654, 6
      %v4068 = vrot.slane %v3656, 6
      %v4069 = vrot.slane %v3658, 6
      %v4070 = vrot.slane %v3660, 6
      %v4071 = vrot.slane %v3662, 6
      %v4072 = vrot.slane %v3664, 6
      %v4073 = vrot.slane %v3666, 6
      %v4074 = vrot.slane %v3637, 6
      %v4075 = vrot.slane %v3639, 6
      %v4076 = vrot.slane %v3641, 6
      %v4077 = vrot.slane %v3643, 6
      %v4078 = vrot.slane %v3645, 6
      %v4079 = vrot.slane %v3647, 6
      %v4080 = vrot.slane %v3649, 6
      %v4081 = vrot.slane %v3651, 6
      %v4082 = vrot.slane %v3653, 6
      %v4083 = vrot.slane %v3655, 6
      %v4084 = vrot.slane %v3657, 6
      %v4085 = vrot.slane %v3659, 6
      %v4086 = vrot.slane %v3661, 6
      %v4087 = vrot.slane %v3663, 6
      %v4088 = vrot.slane %v3665, 6
      %v4089 = vrot.slane %v3667, 6
      %v4090 = vsel %vm1734, %v4058, %v4074
      %v4091 = vsel %vm1734, %v4059, %v4075
      %v4092 = vsel %vm1734, %v4060, %v4076
      %v4093 = vsel %vm1734, %v4061, %v4077
      %v4094 = vsel %vm1734, %v4062, %v4078
      %v4095 = vsel %vm1734, %v4063, %v4079
      %v4096 = vsel %vm1734, %v4064, %v4080
      %v4097 = vsel %vm1734, %v4065, %v4081
      %v4098 = vsel %vm1734, %v4066, %v4082
      %v4099 = vsel %vm1734, %v4067, %v4083
      %v4100 = vsel %vm1734, %v4068, %v4084
      %v4101 = vsel %vm1734, %v4069, %v4085
      %v4102 = vsel %vm1734, %v4070, %v4086
      %v4103 = vsel %vm1734, %v4071, %v4087
      %v4104 = vsel %vm1734, %v4072, %v4088
      %v4105 = vsel %vm1734, %v4073, %v4089
      %v4106 = vsel %vm1734, %v4074, %v4058
      %v4107 = vsel %vm1734, %v4075, %v4059
      %v4108 = vsel %vm1734, %v4076, %v4060
      %v4109 = vsel %vm1734, %v4077, %v4061
      %v4110 = vsel %vm1734, %v4078, %v4062
      %v4111 = vsel %vm1734, %v4079, %v4063
      %v4112 = vsel %vm1734, %v4080, %v4064
      %v4113 = vsel %vm1734, %v4081, %v4065
      %v4114 = vsel %vm1734, %v4082, %v4066
      %v4115 = vsel %vm1734, %v4083, %v4067
      %v4116 = vsel %vm1734, %v4084, %v4068
      %v4117 = vsel %vm1734, %v4085, %v4069
      %v4118 = vsel %vm1734, %v4086, %v4070
      %v4119 = vsel %vm1734, %v4087, %v4071
      %v4120 = vsel %vm1734, %v4088, %v4072
      %v4121 = vsel %vm1734, %v4089, %v4073
      %v4122 = vld [vmem:[%s1767] sm:$0xff]
      %v4123 = vld [vmem:[%s1767 + $0x8] sm:$0xff]
      %v4124 = vadd.f32 %v4106, %v4122
      %v4125 = vadd.f32 %v4090, %v4123
      %v4126 = vadd.f32 %v4107, %v4122
      %v4127 = vadd.f32 %v4091, %v4123
      %v4128 = vadd.f32 %v4108, %v4122
      %v4129 = vadd.f32 %v4092, %v4123
      %v4130 = vadd.f32 %v4109, %v4122
      %v4131 = vadd.f32 %v4093, %v4123
      %v4132 = vadd.f32 %v4110, %v4122
      %v4133 = vadd.f32 %v4094, %v4123
      %v4134 = vadd.f32 %v4111, %v4122
      %v4135 = vadd.f32 %v4095, %v4123
      %v4136 = vadd.f32 %v4112, %v4122
      %v4137 = vadd.f32 %v4096, %v4123
      %v4138 = vadd.f32 %v4113, %v4122
      %v4139 = vadd.f32 %v4097, %v4123
      %v4140 = vadd.f32 %v4114, %v4122
      %v4141 = vadd.f32 %v4098, %v4123
      %v4142 = vadd.f32 %v4115, %v4122
      %v4143 = vadd.f32 %v4099, %v4123
      %v4144 = vadd.f32 %v4116, %v4122
      %v4145 = vadd.f32 %v4100, %v4123
      %v4146 = vadd.f32 %v4117, %v4122
      %v4147 = vadd.f32 %v4101, %v4123
      %v4148 = vadd.f32 %v4118, %v4122
      %v4149 = vadd.f32 %v4102, %v4123
      %v4150 = vadd.f32 %v4119, %v4122
      %v4151 = vadd.f32 %v4103, %v4123
      %v4152 = vadd.f32 %v4120, %v4122
      %v4153 = vadd.f32 %v4104, %v4123
      %v4154 = vadd.f32 %v4121, %v4122
      %v4155 = vadd.f32 %v4105, %v4123
      %v4156 = vmax.f32 %v4026, %v4124
      %v4157 = vmax.f32 %v4027, %v4125
      %v4158 = vmax.f32 %v4028, %v4126
      %v4159 = vmax.f32 %v4029, %v4127
      %v4160 = vmax.f32 %v4030, %v4128
      %v4161 = vmax.f32 %v4031, %v4129
      %v4162 = vmax.f32 %v4032, %v4130
      %v4163 = vmax.f32 %v4033, %v4131
      %v4164 = vmax.f32 %v4034, %v4132
      %v4165 = vmax.f32 %v4035, %v4133
      %v4166 = vmax.f32 %v4036, %v4134
      %v4167 = vmax.f32 %v4037, %v4135
      %v4168 = vmax.f32 %v4038, %v4136
      %v4169 = vmax.f32 %v4039, %v4137
      %v4170 = vmax.f32 %v4040, %v4138
      %v4171 = vmax.f32 %v4041, %v4139
      %v4172 = vmax.f32 %v4042, %v4140
      %v4173 = vmax.f32 %v4043, %v4141
      %v4174 = vmax.f32 %v4044, %v4142
      %v4175 = vmax.f32 %v4045, %v4143
      %v4176 = vmax.f32 %v4046, %v4144
      %v4177 = vmax.f32 %v4047, %v4145
      %v4178 = vmax.f32 %v4048, %v4146
      %v4179 = vmax.f32 %v4049, %v4147
      %v4180 = vmax.f32 %v4050, %v4148
      %v4181 = vmax.f32 %v4051, %v4149
      %v4182 = vmax.f32 %v4052, %v4150
      %v4183 = vmax.f32 %v4053, %v4151
      %v4184 = vmax.f32 %v4054, %v4152
      %v4185 = vmax.f32 %v4055, %v4153
      %v4186 = vmax.f32 %v4056, %v4154
      %v4187 = vmax.f32 %v4057, %v4155
      %v4188 = vld [vmem:[#allocation3] sm:$0xff]
      %v4189 = vld [vmem:[#allocation3 + $0x8] sm:$0xff]
      %v4190 = vld [vmem:[#allocation3 + $0x10] sm:$0xff]
      %v4191 = vld [vmem:[#allocation3 + $0x18] sm:$0xff]
      %v4192 = vld [vmem:[#allocation3 + $0x20] sm:$0xff]
      %v4193 = vld [vmem:[#allocation3 + $0x28] sm:$0xff]
      %v4194 = vld [vmem:[#allocation3 + $0x30] sm:$0xff]
      %v4195 = vld [vmem:[#allocation3 + $0x38] sm:$0xff]
      %v4196 = vld [vmem:[#allocation3 + $0x40] sm:$0xff]
      %v4197 = vld [vmem:[#allocation3 + $0x48] sm:$0xff]
      %v4198 = vld [vmem:[#allocation3 + $0x50] sm:$0xff]
      %v4199 = vld [vmem:[#allocation3 + $0x58] sm:$0xff]
      %v4200 = vld [vmem:[#allocation3 + $0x60] sm:$0xff]
      %v4201 = vld [vmem:[#allocation3 + $0x68] sm:$0xff]
      %v4202 = vld [vmem:[#allocation3 + $0x70] sm:$0xff]
      %v4203 = vld [vmem:[#allocation3 + $0x78] sm:$0xff]
      %v4204 = vld [vmem:[#allocation3 + $0x80] sm:$0xff]
      %v4205 = vld [vmem:[#allocation3 + $0x88] sm:$0xff]
      %v4206 = vld [vmem:[#allocation3 + $0x90] sm:$0xff]
      %v4207 = vld [vmem:[#allocation3 + $0x98] sm:$0xff]
      %v4208 = vld [vmem:[#allocation3 + $0xa0] sm:$0xff]
      %v4209 = vld [vmem:[#allocation3 + $0xa8] sm:$0xff]
      %v4210 = vld [vmem:[#allocation3 + $0xb0] sm:$0xff]
      %v4211 = vld [vmem:[#allocation3 + $0xb8] sm:$0xff]
      %v4212 = vld [vmem:[#allocation3 + $0xc0] sm:$0xff]
      %v4213 = vld [vmem:[#allocation3 + $0xc8] sm:$0xff]
      %v4214 = vld [vmem:[#allocation3 + $0xd0] sm:$0xff]
      %v4215 = vld [vmem:[#allocation3 + $0xd8] sm:$0xff]
      %v4216 = vld [vmem:[#allocation3 + $0xe0] sm:$0xff]
      %v4217 = vld [vmem:[#allocation3 + $0xe8] sm:$0xff]
      %v4218 = vld [vmem:[#allocation3 + $0xf0] sm:$0xff]
      %v4219 = vld [vmem:[#allocation3 + $0xf8] sm:$0xff]
      %v4220 = vld [vmem:[%s3 + $0x180] sm:$0xff]
      %v4221 = vld [vmem:[%s3 + $0x188] sm:$0xff]
      %v4222 = vld [vmem:[%s3 + $0x190] sm:$0xff]
      %v4223 = vld [vmem:[%s3 + $0x198] sm:$0xff]
      %v4224 = vld [vmem:[%s3 + $0x1a0] sm:$0xff]
      %v4225 = vld [vmem:[%s3 + $0x1a8] sm:$0xff]
      %v4226 = vld [vmem:[%s3 + $0x1b0] sm:$0xff]
      %v4227 = vld [vmem:[%s3 + $0x1b8] sm:$0xff]
      %v4228 = vld [vmem:[%s3 + $0x1c0] sm:$0xff]
      %v4229 = vld [vmem:[%s3 + $0x1c8] sm:$0xff]
      %v4230 = vld [vmem:[%s3 + $0x1d0] sm:$0xff]
      %v4231 = vld [vmem:[%s3 + $0x1d8] sm:$0xff]
      %v4232 = vld [vmem:[%s3 + $0x1e0] sm:$0xff]
      %v4233 = vld [vmem:[%s3 + $0x1e8] sm:$0xff]
      %v4234 = vld [vmem:[%s3 + $0x1f0] sm:$0xff]
      %v4235 = vld [vmem:[%s3 + $0x1f8] sm:$0xff]
      %4236 = vmatprep.subr.mxu0 0.0
      %4237 = vmatpush1.msra.mxu0 %v4220
      %4238 = vmatprep.subr.mxu0 0.0
      %4239 = vmatpush1.msra.mxu0 %v4221
      %4240 = vmatprep.subr.mxu0 0.0
      %4241 = vmatpush1.msra.mxu0 %v4222
      %4242 = vmatprep.subr.mxu0 0.0
      %4243 = vmatpush1.msra.mxu0 %v4223
      %4244 = vmatprep.subr.mxu0 0.0
      %4245 = vmatpush1.msra.mxu0 %v4224
      %4246 = vmatprep.subr.mxu0 0.0
      %4247 = vmatpush1.msra.mxu0 %v4225
      %4248 = vmatprep.subr.mxu0 0.0
      %4249 = vmatpush1.msra.mxu0 %v4226
      %4250 = vmatprep.subr.mxu0 0.0
      %4251 = vmatpush1.msra.mxu0 %v4227
      %4252 = vmatprep.subr.mxu0 0.0
      %4253 = vmatpush1.msra.mxu0 %v4228
      %4254 = vmatprep.subr.mxu0 0.0
      %4255 = vmatpush1.msra.mxu0 %v4229
      %4256 = vmatprep.subr.mxu0 0.0
      %4257 = vmatpush1.msra.mxu0 %v4230
      %4258 = vmatprep.subr.mxu0 0.0
      %4259 = vmatpush1.msra.mxu0 %v4231
      %4260 = vmatprep.subr.mxu0 0.0
      %4261 = vmatpush1.msra.mxu0 %v4232
      %4262 = vmatprep.subr.mxu0 0.0
      %4263 = vmatpush1.msra.mxu0 %v4233
      %4264 = vmatprep.subr.mxu0 0.0
      %4265 = vmatpush1.msra.mxu0 %v4234
      %4266 = vmatprep.subr.mxu0 0.0
      %4267 = vmatpush1.msra.mxu0 %v4235
      %4268 = vmatprep.subr.mxu0 0.0
      %4269 = vmatpush1.msra.mxu0 0.0
      %4270 = vmatprep.subr.mxu0 0.0
      %4271 = vmatpush1.msra.mxu0 0.0
      %4272 = vmatprep.subr.mxu0 0.0
      %4273 = vmatpush1.msra.mxu0 0.0
      %4274 = vmatprep.subr.mxu0 0.0
      %4275 = vmatpush1.msra.mxu0 0.0
      %4276 = vmatprep.subr.mxu0 0.0
      %4277 = vmatpush1.msra.mxu0 0.0
      %4278 = vmatprep.subr.mxu0 0.0
      %4279 = vmatpush1.msra.mxu0 0.0
      %4280 = vmatprep.subr.mxu0 0.0
      %4281 = vmatpush1.msra.mxu0 0.0
      %4282 = vmatprep.subr.mxu0 0.0
      %4283 = vmatpush1.msra.mxu0 0.0
      %4284 = vmatprep.subr.mxu0 0.0
      %4285 = vmatpush1.msra.mxu0 0.0
      %4286 = vmatprep.subr.mxu0 0.0
      %4287 = vmatpush1.msra.mxu0 0.0
      %4288 = vmatprep.subr.mxu0 0.0
      %4289 = vmatpush1.msra.mxu0 0.0
      %4290 = vmatprep.subr.mxu0 0.0
      %4291 = vmatpush1.msra.mxu0 0.0
      %4292 = vmatprep.subr.mxu0 0.0
      %4293 = vmatpush1.msra.mxu0 0.0
      %4294 = vmatprep.subr.mxu0 0.0
      %4295 = vmatpush1.msra.mxu0 0.0
      %4296 = vmatprep.subr.mxu0 0.0
      %4297 = vmatpush1.msra.mxu0 0.0
      %4298 = vmatprep.subr.mxu0 0.0
      %4299 = vmatpush1.msra.mxu0 0.0
      %4300 = vmatprep.mubr.f32.mxu0 0.0
      %4301 = vmatmul.mubr.f32.gmra.mrb[0].mxu0 %v4156
      %v4302 = vpop.f32.mrb[0].mxu0
      %v4303 = vadd.f32 0.0, %v4302
      %v4304 = vpop.f32.mrb[0].mxu0
      %4305 = vmatprep.mubr.f32.mxu0 0.0
      %4306 = vmatmul.mubr.f32.gmra.mrb[0].mxu0 %v4157
      %v4307 = vpop.f32.mrb[0].mxu0
      %v4308 = vadd.f32 0.0, %v4307
      %v4309 = vpop.f32.mrb[0].mxu0
      %4310 = vmatprep.mubr.f32.mxu0 0.0
      %4311 = vmatmul.mubr.f32.gmra.mrb[0].mxu0 %v4158
      %v4312 = vpop.f32.mrb[0].mxu0
      %v4313 = vadd.f32 0.0, %v4312
      %v4314 = vpop.f32.mrb[0].mxu0
      %4315 = vmatprep.mubr.f32.mxu0 0.0
      %4316 = vmatmul.mubr.f32.gmra.mrb[0].mxu0 %v4159
      %v4317 = vpop.f32.mrb[0].mxu0
      %v4318 = vadd.f32 0.0, %v4317
      %v4319 = vpop.f32.mrb[0].mxu0
      %4320 = vmatprep.mubr.f32.mxu0 0.0
      %4321 = vmatmul.mubr.f32.gmra.mrb[0].mxu0 %v4160
      %v4322 = vpop.f32.mrb[0].mxu0
      %v4323 = vadd.f32 0.0, %v4322
      %v4324 = vpop.f32.mrb[0].mxu0
      %4325 = vmatprep.mubr.f32.mxu0 0.0
      %4326 = vmatmul.mubr.f32.gmra.mrb[0].mxu0 %v4161
      %v4327 = vpop.f32.mrb[0].mxu0
      %v4328 = vadd.f32 0.0, %v4327
      %v4329 = vpop.f32.mrb[0].mxu0
      %4330 = vmatprep.mubr.f32.mxu0 0.0
      %4331 = vmatmul.mubr.f32.gmra.mrb[0].mxu0 %v4162
      %v4332 = vpop.f32.mrb[0].mxu0
      %v4333 = vadd.f32 0.0, %v4332
      %v4334 = vpop.f32.mrb[0].mxu0
      %4335 = vmatprep.mubr.f32.mxu0 0.0
      %4336 = vmatmul.mubr.f32.gmra.mrb[0].mxu0 %v4163
      %v4337 = vpop.f32.mrb[0].mxu0
      %v4338 = vadd.f32 0.0, %v4337
      %v4339 = vpop.f32.mrb[0].mxu0
      %4340 = vmatprep.mubr.f32.mxu0 0.0
      %4341 = vmatmul.mubr.f32.gmra.mrb[0].mxu0 %v4164
      %v4342 = vpop.f32.mrb[0].mxu0
      %v4343 = vadd.f32 0.0, %v4342
      %v4344 = vpop.f32.mrb[0].mxu0
      %4345 = vmatprep.mubr.f32.mxu0 0.0
      %4346 = vmatmul.mubr.f32.gmra.mrb[0].mxu0 %v4165
      %v4347 = vpop.f32.mrb[0].mxu0
      %v4348 = vadd.f32 0.0, %v4347
      %v4349 = vpop.f32.mrb[0].mxu0
      %4350 = vmatprep.mubr.f32.mxu0 0.0
      %4351 = vmatmul.mubr.f32.gmra.mrb[0].mxu0 %v4166
      %v4352 = vpop.f32.mrb[0].mxu0
      %v4353 = vadd.f32 0.0, %v4352
      %v4354 = vpop.f32.mrb[0].mxu0
      %4355 = vmatprep.mubr.f32.mxu0 0.0
      %4356 = vmatmul.mubr.f32.gmra.mrb[0].mxu0 %v4167
      %v4357 = vpop.f32.mrb[0].mxu0
      %v4358 = vadd.f32 0.0, %v4357
      %v4359 = vpop.f32.mrb[0].mxu0
      %4360 = vmatprep.mubr.f32.mxu0 0.0
      %4361 = vmatmul.mubr.f32.gmra.mrb[0].mxu0 %v4168
      %v4362 = vpop.f32.mrb[0].mxu0
      %v4363 = vadd.f32 0.0, %v4362
      %v4364 = vpop.f32.mrb[0].mxu0
      %4365 = vmatprep.mubr.f32.mxu0 0.0
      %4366 = vmatmul.mubr.f32.gmra.mrb[0].mxu0 %v4169
      %v4367 = vpop.f32.mrb[0].mxu0
      %v4368 = vadd.f32 0.0, %v4367
      %v4369 = vpop.f32.mrb[0].mxu0
      %4370 = vmatprep.mubr.f32.mxu0 0.0
      %4371 = vmatmul.mubr.f32.gmra.mrb[0].mxu0 %v4170
      %v4372 = vpop.f32.mrb[0].mxu0
      %v4373 = vadd.f32 0.0, %v4372
      %v4374 = vpop.f32.mrb[0].mxu0
      %4375 = vmatprep.mubr.f32.mxu0 0.0
      %4376 = vmatmul.mubr.f32.gmra.mrb[0].mxu0 %v4171
      %v4377 = vpop.f32.mrb[0].mxu0
      %v4378 = vadd.f32 0.0, %v4377
      %v4379 = vpop.f32.mrb[0].mxu0
      %4380 = vmatprep.mubr.f32.mxu0 0.0
      %4381 = vmatmul.mubr.f32.gmra.mrb[0].mxu0 %v4172
      %v4382 = vpop.f32.mrb[0].mxu0
      %v4383 = vadd.f32 0.0, %v4382
      %v4384 = vpop.f32.mrb[0].mxu0
      %4385 = vmatprep.mubr.f32.mxu0 0.0
      %4386 = vmatmul.mubr.f32.gmra.mrb[0].mxu0 %v4173
      %v4387 = vpop.f32.mrb[0].mxu0
      %v4388 = vadd.f32 0.0, %v4387
      %v4389 = vpop.f32.mrb[0].mxu0
      %4390 = vmatprep.mubr.f32.mxu0 0.0
      %4391 = vmatmul.mubr.f32.gmra.mrb[0].mxu0 %v4174
      %v4392 = vpop.f32.mrb[0].mxu0
      %v4393 = vadd.f32 0.0, %v4392
      %v4394 = vpop.f32.mrb[0].mxu0
      %4395 = vmatprep.mubr.f32.mxu0 0.0
      %4396 = vmatmul.mubr.f32.gmra.mrb[0].mxu0 %v4175
      %v4397 = vpop.f32.mrb[0].mxu0
      %v4398 = vadd.f32 0.0, %v4397
      %v4399 = vpop.f32.mrb[0].mxu0
      %4400 = vmatprep.mubr.f32.mxu0 0.0
      %4401 = vmatmul.mubr.f32.gmra.mrb[0].mxu0 %v4176
      %v4402 = vpop.f32.mrb[0].mxu0
      %v4403 = vadd.f32 0.0, %v4402
      %v4404 = vpop.f32.mrb[0].mxu0
      %4405 = vmatprep.mubr.f32.mxu0 0.0
      %4406 = vmatmul.mubr.f32.gmra.mrb[0].mxu0 %v4177
      %v4407 = vpop.f32.mrb[0].mxu0
      %v4408 = vadd.f32 0.0, %v4407
      %v4409 = vpop.f32.mrb[0].mxu0
      %4410 = vmatprep.mubr.f32.mxu0 0.0
      %4411 = vmatmul.mubr.f32.gmra.mrb[0].mxu0 %v4178
      %v4412 = vpop.f32.mrb[0].mxu0
      %v4413 = vadd.f32 0.0, %v4412
      %v4414 = vpop.f32.mrb[0].mxu0
      %4415 = vmatprep.mubr.f32.mxu0 0.0
      %4416 = vmatmul.mubr.f32.gmra.mrb[0].mxu0 %v4179
      %v4417 = vpop.f32.mrb[0].mxu0
      %v4418 = vadd.f32 0.0, %v4417
      %v4419 = vpop.f32.mrb[0].mxu0
      %4420 = vmatprep.mubr.f32.mxu0 0.0
      %4421 = vmatmul.mubr.f32.gmra.mrb[0].mxu0 %v4180
      %v4422 = vpop.f32.mrb[0].mxu0
      %v4423 = vadd.f32 0.0, %v4422
      %v4424 = vpop.f32.mrb[0].mxu0
      %4425 = vmatprep.mubr.f32.mxu0 0.0
      %4426 = vmatmul.mubr.f32.gmra.mrb[0].mxu0 %v4181
      %v4427 = vpop.f32.mrb[0].mxu0
      %v4428 = vadd.f32 0.0, %v4427
      %v4429 = vpop.f32.mrb[0].mxu0
      %4430 = vmatprep.mubr.f32.mxu0 0.0
      %4431 = vmatmul.mubr.f32.gmra.mrb[0].mxu0 %v4182
      %v4432 = vpop.f32.mrb[0].mxu0
      %v4433 = vadd.f32 0.0, %v4432
      %v4434 = vpop.f32.mrb[0].mxu0
      %4435 = vmatprep.mubr.f32.mxu0 0.0
      %4436 = vmatmul.mubr.f32.gmra.mrb[0].mxu0 %v4183
      %v4437 = vpop.f32.mrb[0].mxu0
      %v4438 = vadd.f32 0.0, %v4437
      %v4439 = vpop.f32.mrb[0].mxu0
      %4440 = vmatprep.mubr.f32.mxu0 0.0
      %4441 = vmatmul.mubr.f32.gmra.mrb[0].mxu0 %v4184
      %v4442 = vpop.f32.mrb[0].mxu0
      %v4443 = vadd.f32 0.0, %v4442
      %v4444 = vpop.f32.mrb[0].mxu0
      %4445 = vmatprep.mubr.f32.mxu0 0.0
      %4446 = vmatmul.mubr.f32.gmra.mrb[0].mxu0 %v4185
      %v4447 = vpop.f32.mrb[0].mxu0
      %v4448 = vadd.f32 0.0, %v4447
      %v4449 = vpop.f32.mrb[0].mxu0
      %4450 = vmatprep.mubr.f32.mxu0 0.0
      %4451 = vmatmul.mubr.f32.gmra.mrb[0].mxu0 %v4186
      %v4452 = vpop.f32.mrb[0].mxu0
      %v4453 = vadd.f32 0.0, %v4452
      %v4454 = vpop.f32.mrb[0].mxu0
      %4455 = vmatprep.mubr.f32.mxu0 0.0
      %4456 = vmatmul.mubr.f32.gmra.mrb[0].mxu0 %v4187
      %v4457 = vpop.f32.mrb[0].mxu0
      %v4458 = vadd.f32 0.0, %v4457
      %v4459 = vpop.f32.mrb[0].mxu0
      %4460 = vdwg.mxu0
      %v4461 = vadd.f32 %v4188, %v4303
      %v4462 = vadd.f32 %v4189, %v4308
      %v4463 = vadd.f32 %v4190, %v4313
      %v4464 = vadd.f32 %v4191, %v4318
      %v4465 = vadd.f32 %v4192, %v4323
      %v4466 = vadd.f32 %v4193, %v4328
      %v4467 = vadd.f32 %v4194, %v4333
      %v4468 = vadd.f32 %v4195, %v4338
      %v4469 = vadd.f32 %v4196, %v4343
      %v4470 = vadd.f32 %v4197, %v4348
      %v4471 = vadd.f32 %v4198, %v4353
      %v4472 = vadd.f32 %v4199, %v4358
      %v4473 = vadd.f32 %v4200, %v4363
      %v4474 = vadd.f32 %v4201, %v4368
      %v4475 = vadd.f32 %v4202, %v4373
      %v4476 = vadd.f32 %v4203, %v4378
      %v4477 = vadd.f32 %v4204, %v4383
      %v4478 = vadd.f32 %v4205, %v4388
      %v4479 = vadd.f32 %v4206, %v4393
      %v4480 = vadd.f32 %v4207, %v4398
      %v4481 = vadd.f32 %v4208, %v4403
      %v4482 = vadd.f32 %v4209, %v4408
      %v4483 = vadd.f32 %v4210, %v4413
      %v4484 = vadd.f32 %v4211, %v4418
      %v4485 = vadd.f32 %v4212, %v4423
      %v4486 = vadd.f32 %v4213, %v4428
      %v4487 = vadd.f32 %v4214, %v4433
      %v4488 = vadd.f32 %v4215, %v4438
      %v4489 = vadd.f32 %v4216, %v4443
      %v4490 = vadd.f32 %v4217, %v4448
      %v4491 = vadd.f32 %v4218, %v4453
      %v4492 = vadd.f32 %v4219, %v4458
      %4493 = vst [vmem:[#allocation3] sm:$0xff] %v4461
      %4494 = vst [vmem:[#allocation3 + $0x8] sm:$0xff] %v4462
      %4495 = vst [vmem:[#allocation3 + $0x10] sm:$0xff] %v4463
      %4496 = vst [vmem:[#allocation3 + $0x18] sm:$0xff] %v4464
      %4497 = vst [vmem:[#allocation3 + $0x20] sm:$0xff] %v4465
      %4498 = vst [vmem:[#allocation3 + $0x28] sm:$0xff] %v4466
      %4499 = vst [vmem:[#allocation3 + $0x30] sm:$0xff] %v4467
      %4500 = vst [vmem:[#allocation3 + $0x38] sm:$0xff] %v4468
      %4501 = vst [vmem:[#allocation3 + $0x40] sm:$0xff] %v4469
      %4502 = vst [vmem:[#allocation3 + $0x48] sm:$0xff] %v4470
      %4503 = vst [vmem:[#allocation3 + $0x50] sm:$0xff] %v4471
      %4504 = vst [vmem:[#allocation3 + $0x58] sm:$0xff] %v4472
      %4505 = vst [vmem:[#allocation3 + $0x60] sm:$0xff] %v4473
      %4506 = vst [vmem:[#allocation3 + $0x68] sm:$0xff] %v4474
      %4507 = vst [vmem:[#allocation3 + $0x70] sm:$0xff] %v4475
      %4508 = vst [vmem:[#allocation3 + $0x78] sm:$0xff] %v4476
      %4509 = vst [vmem:[#allocation3 + $0x80] sm:$0xff] %v4477
      %4510 = vst [vmem:[#allocation3 + $0x88] sm:$0xff] %v4478
      %4511 = vst [vmem:[#allocation3 + $0x90] sm:$0xff] %v4479
      %4512 = vst [vmem:[#allocation3 + $0x98] sm:$0xff] %v4480
      %4513 = vst [vmem:[#allocation3 + $0xa0] sm:$0xff] %v4481
      %4514 = vst [vmem:[#allocation3 + $0xa8] sm:$0xff] %v4482
      %4515 = vst [vmem:[#allocation3 + $0xb0] sm:$0xff] %v4483
      %4516 = vst [vmem:[#allocation3 + $0xb8] sm:$0xff] %v4484
      %4517 = vst [vmem:[#allocation3 + $0xc0] sm:$0xff] %v4485
      %4518 = vst [vmem:[#allocation3 + $0xc8] sm:$0xff] %v4486
      %4519 = vst [vmem:[#allocation3 + $0xd0] sm:$0xff] %v4487
      %4520 = vst [vmem:[#allocation3 + $0xd8] sm:$0xff] %v4488
      %4521 = vst [vmem:[#allocation3 + $0xe0] sm:$0xff] %v4489
      %4522 = vst [vmem:[#allocation3 + $0xe8] sm:$0xff] %v4490
      %4523 = vst [vmem:[#allocation3 + $0xf0] sm:$0xff] %v4491
      %4524 = vst [vmem:[#allocation3 + $0xf8] sm:$0xff] %v4492
      %v4525 = vld [vmem:[#allocation3] sm:$0xff]
      %v4526 = vld [vmem:[#allocation3 + $0x8] sm:$0xff]
      %v4527 = vld [vmem:[#allocation3 + $0x10] sm:$0xff]
      %v4528 = vld [vmem:[#allocation3 + $0x18] sm:$0xff]
      %v4529 = vld [vmem:[#allocation3 + $0x20] sm:$0xff]
      %v4530 = vld [vmem:[#allocation3 + $0x28] sm:$0xff]
      %v4531 = vld [vmem:[#allocation3 + $0x30] sm:$0xff]
      %v4532 = vld [vmem:[#allocation3 + $0x38] sm:$0xff]
      %v4533 = vld [vmem:[#allocation3 + $0x40] sm:$0xff]
      %v4534 = vld [vmem:[#allocation3 + $0x48] sm:$0xff]
      %v4535 = vld [vmem:[#allocation3 + $0x50] sm:$0xff]
      %v4536 = vld [vmem:[#allocation3 + $0x58] sm:$0xff]
      %v4537 = vld [vmem:[#allocation3 + $0x60] sm:$0xff]
      %v4538 = vld [vmem:[#allocation3 + $0x68] sm:$0xff]
      %v4539 = vld [vmem:[#allocation3 + $0x70] sm:$0xff]
      %v4540 = vld [vmem:[#allocation3 + $0x78] sm:$0xff]
      %v4541 = vld [vmem:[#allocation3 + $0x80] sm:$0xff]
      %v4542 = vld [vmem:[#allocation3 + $0x88] sm:$0xff]
      %v4543 = vld [vmem:[#allocation3 + $0x90] sm:$0xff]
      %v4544 = vld [vmem:[#allocation3 + $0x98] sm:$0xff]
      %v4545 = vld [vmem:[#allocation3 + $0xa0] sm:$0xff]
      %v4546 = vld [vmem:[#allocation3 + $0xa8] sm:$0xff]
      %v4547 = vld [vmem:[#allocation3 + $0xb0] sm:$0xff]
      %v4548 = vld [vmem:[#allocation3 + $0xb8] sm:$0xff]
      %v4549 = vld [vmem:[#allocation3 + $0xc0] sm:$0xff]
      %v4550 = vld [vmem:[#allocation3 + $0xc8] sm:$0xff]
      %v4551 = vld [vmem:[#allocation3 + $0xd0] sm:$0xff]
      %v4552 = vld [vmem:[#allocation3 + $0xd8] sm:$0xff]
      %v4553 = vld [vmem:[#allocation3 + $0xe0] sm:$0xff]
      %v4554 = vld [vmem:[#allocation3 + $0xe8] sm:$0xff]
      %v4555 = vld [vmem:[#allocation3 + $0xf0] sm:$0xff]
      %v4556 = vld [vmem:[#allocation3 + $0xf8] sm:$0xff]
      %v4557 = vmul.f32 %v4525, 0.5
      %v4558 = vmul.f32 %v4526, 0.5
      %v4559 = vmul.f32 %v4527, 0.5
      %v4560 = vmul.f32 %v4528, 0.5
      %v4561 = vmul.f32 %v4529, 0.5
      %v4562 = vmul.f32 %v4530, 0.5
      %v4563 = vmul.f32 %v4531, 0.5
      %v4564 = vmul.f32 %v4532, 0.5
      %v4565 = vmul.f32 %v4533, 0.5
      %v4566 = vmul.f32 %v4534, 0.5
      %v4567 = vmul.f32 %v4535, 0.5
      %v4568 = vmul.f32 %v4536, 0.5
      %v4569 = vmul.f32 %v4537, 0.5
      %v4570 = vmul.f32 %v4538, 0.5
      %v4571 = vmul.f32 %v4539, 0.5
      %v4572 = vmul.f32 %v4540, 0.5
      %v4573 = vmul.f32 %v4541, 0.5
      %v4574 = vmul.f32 %v4542, 0.5
      %v4575 = vmul.f32 %v4543, 0.5
      %v4576 = vmul.f32 %v4544, 0.5
      %v4577 = vmul.f32 %v4545, 0.5
      %v4578 = vmul.f32 %v4546, 0.5
      %v4579 = vmul.f32 %v4547, 0.5
      %v4580 = vmul.f32 %v4548, 0.5
      %v4581 = vmul.f32 %v4549, 0.5
      %v4582 = vmul.f32 %v4550, 0.5
      %v4583 = vmul.f32 %v4551, 0.5
      %v4584 = vmul.f32 %v4552, 0.5
      %v4585 = vmul.f32 %v4553, 0.5
      %v4586 = vmul.f32 %v4554, 0.5
      %v4587 = vmul.f32 %v4555, 0.5
      %v4588 = vmul.f32 %v4556, 0.5
      %v4589 = vtanh.pop %v4557
      %v4590 = vtanh.pop %v4558
      %v4591 = vtanh.pop %v4559
      %v4592 = vtanh.pop %v4560
      %v4593 = vtanh.pop %v4561
      %v4594 = vtanh.pop %v4562
      %v4595 = vtanh.pop %v4563
      %v4596 = vtanh.pop %v4564
      %v4597 = vtanh.pop %v4565
      %v4598 = vtanh.pop %v4566
      %v4599 = vtanh.pop %v4567
      %v4600 = vtanh.pop %v4568
      %v4601 = vtanh.pop %v4569
      %v4602 = vtanh.pop %v4570
      %v4603 = vtanh.pop %v4571
      %v4604 = vtanh.pop %v4572
      %v4605 = vtanh.pop %v4573
      %v4606 = vtanh.pop %v4574
      %v4607 = vtanh.pop %v4575
      %v4608 = vtanh.pop %v4576
      %v4609 = vtanh.pop %v4577
      %v4610 = vtanh.pop %v4578
      %v4611 = vtanh.pop %v4579
      %v4612 = vtanh.pop %v4580
      %v4613 = vtanh.pop %v4581
      %v4614 = vtanh.pop %v4582
      %v4615 = vtanh.pop %v4583
      %v4616 = vtanh.pop %v4584
      %v4617 = vtanh.pop %v4585
      %v4618 = vtanh.pop %v4586
      %v4619 = vtanh.pop %v4587
      %v4620 = vtanh.pop %v4588
      %v4621 = vmul.f32 %v4589, 0.5
      %v4622 = vmul.f32 %v4590, 0.5
      %v4623 = vmul.f32 %v4591, 0.5
      %v4624 = vmul.f32 %v4592, 0.5
      %v4625 = vmul.f32 %v4593, 0.5
      %v4626 = vmul.f32 %v4594, 0.5
      %v4627 = vmul.f32 %v4595, 0.5
      %v4628 = vmul.f32 %v4596, 0.5
      %v4629 = vmul.f32 %v4597, 0.5
      %v4630 = vmul.f32 %v4598, 0.5
      %v4631 = vmul.f32 %v4599, 0.5
      %v4632 = vmul.f32 %v4600, 0.5
      %v4633 = vmul.f32 %v4601, 0.5
      %v4634 = vmul.f32 %v4602, 0.5
      %v4635 = vmul.f32 %v4603, 0.5
      %v4636 = vmul.f32 %v4604, 0.5
      %v4637 = vmul.f32 %v4605, 0.5
      %v4638 = vmul.f32 %v4606, 0.5
      %v4639 = vmul.f32 %v4607, 0.5
      %v4640 = vmul.f32 %v4608, 0.5
      %v4641 = vmul.f32 %v4609, 0.5
      %v4642 = vmul.f32 %v4610, 0.5
      %v4643 = vmul.f32 %v4611, 0.5
      %v4644 = vmul.f32 %v4612, 0.5
      %v4645 = vmul.f32 %v4613, 0.5
      %v4646 = vmul.f32 %v4614, 0.5
      %v4647 = vmul.f32 %v4615, 0.5
      %v4648 = vmul.f32 %v4616, 0.5
      %v4649 = vmul.f32 %v4617, 0.5
      %v4650 = vmul.f32 %v4618, 0.5
      %v4651 = vmul.f32 %v4619, 0.5
      %v4652 = vmul.f32 %v4620, 0.5
      %v4653 = vadd.f32 %v4621, 0.5
      %v4654 = vadd.f32 %v4622, 0.5
      %v4655 = vadd.f32 %v4623, 0.5
      %v4656 = vadd.f32 %v4624, 0.5
      %v4657 = vadd.f32 %v4625, 0.5
      %v4658 = vadd.f32 %v4626, 0.5
      %v4659 = vadd.f32 %v4627, 0.5
      %v4660 = vadd.f32 %v4628, 0.5
      %v4661 = vadd.f32 %v4629, 0.5
      %v4662 = vadd.f32 %v4630, 0.5
      %v4663 = vadd.f32 %v4631, 0.5
      %v4664 = vadd.f32 %v4632, 0.5
      %v4665 = vadd.f32 %v4633, 0.5
      %v4666 = vadd.f32 %v4634, 0.5
      %v4667 = vadd.f32 %v4635, 0.5
      %v4668 = vadd.f32 %v4636, 0.5
      %v4669 = vadd.f32 %v4637, 0.5
      %v4670 = vadd.f32 %v4638, 0.5
      %v4671 = vadd.f32 %v4639, 0.5
      %v4672 = vadd.f32 %v4640, 0.5
      %v4673 = vadd.f32 %v4641, 0.5
      %v4674 = vadd.f32 %v4642, 0.5
      %v4675 = vadd.f32 %v4643, 0.5
      %v4676 = vadd.f32 %v4644, 0.5
      %v4677 = vadd.f32 %v4645, 0.5
      %v4678 = vadd.f32 %v4646, 0.5
      %v4679 = vadd.f32 %v4647, 0.5
      %v4680 = vadd.f32 %v4648, 0.5
      %v4681 = vadd.f32 %v4649, 0.5
      %v4682 = vadd.f32 %v4650, 0.5
      %v4683 = vadd.f32 %v4651, 0.5
      %v4684 = vadd.f32 %v4652, 0.5
      %v4685 = vmul.f32 %v4525, %v4653
      %v4686 = vmul.f32 %v4526, %v4654
      %v4687 = vmul.f32 %v4527, %v4655
      %v4688 = vmul.f32 %v4528, %v4656
      %v4689 = vmul.f32 %v4529, %v4657
      %v4690 = vmul.f32 %v4530, %v4658
      %v4691 = vmul.f32 %v4531, %v4659
      %v4692 = vmul.f32 %v4532, %v4660
      %v4693 = vmul.f32 %v4533, %v4661
      %v4694 = vmul.f32 %v4534, %v4662
      %v4695 = vmul.f32 %v4535, %v4663
      %v4696 = vmul.f32 %v4536, %v4664
      %v4697 = vmul.f32 %v4537, %v4665
      %v4698 = vmul.f32 %v4538, %v4666
      %v4699 = vmul.f32 %v4539, %v4667
      %v4700 = vmul.f32 %v4540, %v4668
      %v4701 = vmul.f32 %v4541, %v4669
      %v4702 = vmul.f32 %v4542, %v4670
      %v4703 = vmul.f32 %v4543, %v4671
      %v4704 = vmul.f32 %v4544, %v4672
      %v4705 = vmul.f32 %v4545, %v4673
      %v4706 = vmul.f32 %v4546, %v4674
      %v4707 = vmul.f32 %v4547, %v4675
      %v4708 = vmul.f32 %v4548, %v4676
      %v4709 = vmul.f32 %v4549, %v4677
      %v4710 = vmul.f32 %v4550, %v4678
      %v4711 = vmul.f32 %v4551, %v4679
      %v4712 = vmul.f32 %v4552, %v4680
      %v4713 = vmul.f32 %v4553, %v4681
      %v4714 = vmul.f32 %v4554, %v4682
      %v4715 = vmul.f32 %v4555, %v4683
      %v4716 = vmul.f32 %v4556, %v4684
      %4717 = vst [vmem:[%s251] sm:$0xff] %v4685
      %4718 = vst [vmem:[%s251 + $0x8] sm:$0xff] %v4686
      %4719 = vst [vmem:[%s251 + $0x10] sm:$0xff] %v4687
      %4720 = vst [vmem:[%s251 + $0x18] sm:$0xff] %v4688
      %4721 = vst [vmem:[%s251 + $0x20] sm:$0xff] %v4689
      %4722 = vst [vmem:[%s251 + $0x28] sm:$0xff] %v4690
      %4723 = vst [vmem:[%s251 + $0x30] sm:$0xff] %v4691
      %4724 = vst [vmem:[%s251 + $0x38] sm:$0xff] %v4692
      %4725 = vst [vmem:[%s251 + $0x40] sm:$0xff] %v4693
      %4726 = vst [vmem:[%s251 + $0x48] sm:$0xff] %v4694
      %4727 = vst [vmem:[%s251 + $0x50] sm:$0xff] %v4695
      %4728 = vst [vmem:[%s251 + $0x58] sm:$0xff] %v4696
      %4729 = vst [vmem:[%s251 + $0x60] sm:$0xff] %v4697
      %4730 = vst [vmem:[%s251 + $0x68] sm:$0xff] %v4698
      %4731 = vst [vmem:[%s251 + $0x70] sm:$0xff] %v4699
      %4732 = vst [vmem:[%s251 + $0x78] sm:$0xff] %v4700
      %4733 = vst [vmem:[%s251 + $0x80] sm:$0xff] %v4701
      %4734 = vst [vmem:[%s251 + $0x88] sm:$0xff] %v4702
      %4735 = vst [vmem:[%s251 + $0x90] sm:$0xff] %v4703
      %4736 = vst [vmem:[%s251 + $0x98] sm:$0xff] %v4704
      %4737 = vst [vmem:[%s251 + $0xa0] sm:$0xff] %v4705
      %4738 = vst [vmem:[%s251 + $0xa8] sm:$0xff] %v4706
      %4739 = vst [vmem:[%s251 + $0xb0] sm:$0xff] %v4707
      %4740 = vst [vmem:[%s251 + $0xb8] sm:$0xff] %v4708
      %4741 = vst [vmem:[%s251 + $0xc0] sm:$0xff] %v4709
      %4742 = vst [vmem:[%s251 + $0xc8] sm:$0xff] %v4710
      %4743 = vst [vmem:[%s251 + $0xd0] sm:$0xff] %v4711
      %4744 = vst [vmem:[%s251 + $0xd8] sm:$0xff] %v4712
      %4745 = vst [vmem:[%s251 + $0xe0] sm:$0xff] %v4713
      %4746 = vst [vmem:[%s251 + $0xe8] sm:$0xff] %v4714
      %4747 = vst [vmem:[%s251 + $0xf0] sm:$0xff] %v4715
      %4748 = vst [vmem:[%s251 + $0xf8] sm:$0xff] %v4716
      %p4749 = scmp.lt.s32.totalorder %s17, 1
      %s4750 = scalar_select %p4749, %s17, 1
      %s4751 = smul.addr %s4750, 32
      %s4752 = smul.addr %s4751, 8
      %s4753 = scalar_lea.vmem %s6, %s4752
      // Predicated region
      $region45: #{sppf_pallas_nhwc.1} parent=43 // pred_check
        %p4754 = pneg %p166
      $region46: #{sppf_pallas_nhwc.1} parent=43 // pred_check_branch
        %4756 = sbr.rel (%p4754) target = $region48
      $region47: #{sppf_pallas_nhwc.1} parent=43 // pred_region
        _
      $region48: #{sppf_pallas_nhwc.1} parent=43 // pred_fallthru
        _
    $region44: #{sppf_pallas_nhwc.1} parent=5 // pred_fallthru
      _
    %p4757 = scmp.le.s32.totalorder 2, %s12
    // Predicated region
    $region49: #{sppf_pallas_nhwc.1} parent=5 // pred_check
      %p4758 = pneg %p4757
    $region50: #{sppf_pallas_nhwc.1} parent=5 // pred_check_branch
      %4760 = sbr.rel (%p4758) target = $region52
    $region51: #{sppf_pallas_nhwc.1} parent=5 // pred_region
      %s4761 = ssub.s32 %s12, 2
      // Predicated region
      $region53: #{sppf_pallas_nhwc.1} parent=51 // pred_check
        %p4762 = pneg %p172
      $region54: #{sppf_pallas_nhwc.1} parent=51 // pred_check_branch
        %4764 = sbr.rel (%p4762) target = $region56
      $region55: #{sppf_pallas_nhwc.1} parent=51 // pred_region
        %p4765 = scmp.lt.s32.totalorder %s18, 1
        %s4766 = scalar_select %p4765, %s18, 1
        %s4767 = smul.addr %s4766, 32
        %s4768 = smul.addr %s4767, 8
        %s4769 = scalar_lea.vmem %s6, %s4768
      $region56: #{sppf_pallas_nhwc.1} parent=51 // pred_fallthru
        _
    $region52: #{sppf_pallas_nhwc.1} parent=5 // pred_fallthru
      _
  $region6: #{sppf_pallas_nhwc.1} parent=0 // loop_footer
    %s16 = sadd.s32 1, %s12
  $region7: #{sppf_pallas_nhwc.1} parent=0 // loop_footer_branch
    %11 = sbr.rel target = $region3
  $region8: #{sppf_pallas_nhwc.1} parent=0 // loop_exit
    _

</llo_original>
